<compile_context>
chip_gen: v6e
topology: v6e:2x2x1
jax: 0.10.0
libtpu: 0.0.40
codegen_flags: <defaults>
</compile_context>

<pallas_src>
import jax
import jax.numpy as jnp
import numpy as np
from jax.experimental import pallas as pl
from jax.experimental.pallas import tpu as pltpu


# ----------------------------- kernel -------------------------------------- #

def _nll_kernel(p_i_ref, p_k_ref, e_k_ref, out_i_ref, lab_i_ref,
                c_ref, p_col_ref, numer_ref, denom_ref):
    """Per (row-block i, risk-set block k) step of the Cox partial likelihood.

    p_i_ref   : (1, TM)  periods of the row block
    p_k_ref   : (1, TK)  periods of the risk-set block
    e_k_ref   : (1, TK)  exp(output - max) of the risk-set block
    out_i_ref : (1, TM)  shifted output (output - max) of the row block
    lab_i_ref : (1, TM)  labels of the row block
    c_ref     : (1, TM)  output: (output - log_risk) * label  (written at k==last)
    p_col_ref : (TM, 1)  scratch: cached column view of the row-block periods
    numer_ref : (TM, 1)  scratch: running sum of exp over the risk set
    denom_ref : (TM, 1)  scratch: running size of the risk set
    """
    k = pl.program_id(1)

    @pl.when(k == 0)
    def _init():
        # Small XLU transpose, done once per row block and cached across k.
        p_col_ref[...] = jnp.transpose(p_i_ref[...])
        numer_ref[...] = jnp.zeros_like(numer_ref)
        denom_ref[...] = jnp.zeros_like(denom_ref)

    # excluded[i, j] == True  <=>  periods[j] < periods[i]  (j is NOT in i's risk set),
    # i.e. reference mask[j, i] == 0  <=>  periods[i] - periods[j] > 0.
    excluded = (p_col_ref[...] - p_k_ref[...]) > 0.0            # (TM, TK)

    e_row = e_k_ref[...]                                         # (1, TK)
    numer_ref[...] += jnp.sum(jnp.where(excluded, 0.0, e_row),
                              axis=1, keepdims=True)             # (TM, 1)
    denom_ref[...] += jnp.sum(jnp.where(excluded, 0.0, 1.0),
                              axis=1, keepdims=True)             # (TM, 1)

    @pl.when(k == pl.num_programs(1) - 1)
    def _finalize():
        numer_row = jnp.transpose(numer_ref[...])                # (1, TM)
        denom_row = jnp.transpose(denom_ref[...])                # (1, TM)
        # log_risk (shifted by -max(output), matching out_i which is also shifted).
        log_risk = jnp.log(numer_row) - jnp.log(denom_row)
        c_ref[...] = (out_i_ref[...] - log_risk) * lab_i_ref[...]


# ----------------------------- wrapper -------------------------------------- #

def _pad_row(v, pad, value):
    if pad:
        v = jnp.pad(v, (0, pad), constant_values=value)
    return v.reshape(1, -1)


def negative_log_likelihood(output, label, periods, weights, l2_reg=0.05,
                            tm=512, tk=512):
    """JAX/Pallas equivalent of NegativeLogLikelihood.forward.

    output:  (N, 1) float  -- risk predictions
    label:   (N, 1) int    -- event occurrence (0/1)
    periods: (N, 1) float  -- event/censoring times
    weights: list of 2-D weight matrices of the "network" (biases excluded,
             mirroring the `'weight' in name` filter of Regularization)
    tm, tk:  row-block / risk-set-block tile sizes (multiples of 128)
    """
    assert tm % 128 == 0 and tk % 128 == 0, "tile sizes must be multiples of 128"

    output = output.astype(jnp.float32).reshape(-1)
    label_f = label.astype(jnp.float32).reshape(-1)
    periods = periods.astype(jnp.float32).reshape(-1)
    n = output.shape[0]

    lcm = int(np.lcm(tm, tk))
    n_pad = ((n + lcm - 1) // lcm) * lcm
    pad = n_pad - n

    # Numerically-safe, mathematically identical shift: exp(o - M) and add M back
    # implicitly via the shifted output in the final (output - log_risk) term.
    m = jnp.max(output)
    out_shift = output - m
    exp_shift = jnp.exp(out_shift)

    # Padding: periods = -1e30 pushes padded samples out of every real risk set
    # (excluded[i, pad] = p_i - (-1e30) > 0); exp pad = 0 so a padded column can never
    # contribute to a numerator; labels pad = 0 so padded rows contribute nothing.
    p_row = _pad_row(periods, pad, -1e30)
    e_row = _pad_row(exp_shift, pad, 0.0)
    o_row = _pad_row(out_shift, pad, 0.0)
    l_row = _pad_row(label_f, pad, 0.0)

    grid = (n_pad // tm, n_pad // tk)

    c_row = pl.pallas_call(
        _nll_kernel,
        out_shape=jax.ShapeDtypeStruct((1, n_pad), jnp.float32),
        grid_spec=pltpu.PrefetchScalarGridSpec(
            num_scalar_prefetch=0,
            grid=grid,
            in_specs=[
                pl.BlockSpec((1, tm), lambda i, k: (0, i)),   # periods, row block
                pl.BlockSpec((1, tk), lambda i, k: (0, k)),   # periods, risk-set block
                pl.BlockSpec((1, tk), lambda i, k: (0, k)),   # exp(out - M), risk-set blk
                pl.BlockSpec((1, tm), lambda i, k: (0, i)),   # out - M, row block
                pl.BlockSpec((1, tm), lambda i, k: (0, i)),   # label, row block
            ],
            out_specs=pl.BlockSpec((1, tm), lambda i, k: (0, i)),
            scratch_shapes=[
                pltpu.VMEM((tm, 1), jnp.float32),   # cached periods column
                pltpu.VMEM((tm, 1), jnp.float32),   # numer accumulator
                pltpu.VMEM((tm, 1), jnp.float32),   # denom accumulator
            ]),
        compiler_params=pltpu.CompilerParams(
            dimension_semantics=("parallel", "arbitrary"),
            vmem_limit_bytes=32 * 1024 * 1024),
    )(p_row, p_row, e_row, o_row, l_row)

    num_occurs = jnp.sum(label_f)
    neg_sum = -jnp.sum(c_row)

    # L2 regularization over weight matrices: tiny, plain jnp (XLA fuses it).
    reg_loss = jnp.float32(0.0)
    for w in weights:
        w32 = w.astype(jnp.float32)
        reg_loss = reg_loss + jnp.sqrt(jnp.sum(w32 * w32))
    l2_loss = jnp.float32(l2_reg) * reg_loss

    # TODO(synk): the reference uses a Python-level `if num_occurs.item() == 0` branch;
    # reproduced as a traceable select (safe denominator keeps grad NaN-free).
    safe_occurs = jnp.maximum(num_occurs, 1.0)
    loss = jnp.where(num_occurs == 0.0,
                     jnp.float32(1e-07),
                     neg_sum / safe_occurs + l2_loss)
    return loss


# ----------------------------- reference ------------------------------------ #

def _reference(output, label, periods, weights, l2_reg=0.05):
    output = output.astype(jnp.float32)
    label_f = label.astype(jnp.float32)
    periods = periods.astype(jnp.float32)
    N = periods.shape[0]
    mask = jnp.ones((N, N), jnp.float32)
    mask = jnp.where((periods.T - periods) > 0.0, 0.0, mask)
    _loss = jnp.exp(output) * mask
    _loss = jnp.sum(_loss, axis=0) / jnp.sum(mask, axis=0)
    _loss = jnp.log(_loss).reshape(-1, 1)
    num_occurs = jnp.sum(label_f)
    neg = -jnp.sum((output - _loss) * label_f) / num_occurs
    reg = sum(jnp.sqrt(jnp.sum(w.astype(jnp.float32) ** 2)) for w in weights)
    return jnp.where(num_occurs == 0.0, jnp.float32(1e-07), neg + l2_reg * reg)


# ------------------------------- main ---------------------------------------- #

if __name__ == "__main__":
    def run_case(n, feats, hidden, key, **tile_kwargs):
        k_out, k_per, k_lab, k_w1, k_w2 = jax.random.split(key, 5)
        output = jax.random.normal(k_out, (n, 1), jnp.float32)
        periods = jax.random.uniform(k_per, (n, 1), jnp.float32, 0.1, 5.0)
        label = jax.random.bernoulli(k_lab, 0.5, (n, 1)).astype(jnp.int32)
        label = label.at[0, 0].set(1)  # guarantee at least one event
        # Deterministic synthetic "network" weights (torch.nn.Linear layout: (out, in)).
        w1 = 0.1 * jax.random.normal(k_w1, (hidden, feats), jnp.float32)
        w2 = 0.1 * jax.random.normal(k_w2, (1, hidden), jnp.float32)
        weights = [w1, w2]

        loss = jax.block_until_ready(
            negative_log_likelihood(output, label, periods, weights, **tile_kwargs))
        ref = jax.block_until_ready(_reference(output, label, periods, weights))
        np.testing.assert_allclose(np.asarray(loss), np.asarray(ref),
                                   rtol=1e-3, atol=1e-5)

    key = jax.random.PRNGKey(0)
    k1, k2 = jax.random.split(key)

    # Case 1: tiny batch, default tiles (single grid step).
    run_case(n=8, feats=16, hidden=32, key=k1)
    # Case 2: non-multiple batch + small tiles -> multi-block grid (3x3) exercising the
    # k-accumulation, padding and finalize paths.
    run_case(n=300, feats=16, hidden=32, key=k2, tm=128, tk=128)

    print("KERNEL_OK")
</pallas_src>

<mosaic_0001>
module attributes {stable_mosaic.version = 11 : i64} {
  func.func @_nll_kernel(%arg0: i32, %arg1: i32, %arg2: memref<1x512xf32, #tpu.memory_space<vmem>>, %arg3: memref<1x512xf32, #tpu.memory_space<vmem>>, %arg4: memref<1x512xf32, #tpu.memory_space<vmem>>, %arg5: memref<1x512xf32, #tpu.memory_space<vmem>>, %arg6: memref<1x512xf32, #tpu.memory_space<vmem>>, %arg7: memref<1x512xf32, #tpu.memory_space<vmem>>, %arg8: memref<512x1xf32, #tpu.memory_space<vmem>>, %arg9: memref<512x1xf32, #tpu.memory_space<vmem>>, %arg10: memref<512x1xf32, #tpu.memory_space<vmem>>) attributes {dimension_semantics = [#tpu.dimension_semantics<parallel>, #tpu.dimension_semantics<arbitrary>], iteration_bounds = array<i64: 1, 1>, scalar_prefetch = 0 : i64, scratch_operands = 3 : i64, tpu.core_type = #tpu.core_type<tc>, window_params = [{transform_indices = @transform_0, window_bounds = array<i64: 1, 512>}, {transform_indices = @transform_1, window_bounds = array<i64: 1, 512>}, {transform_indices = @transform_2, window_bounds = array<i64: 1, 512>}, {transform_indices = @transform_3, window_bounds = array<i64: 1, 512>}, {transform_indices = @transform_4, window_bounds = array<i64: 1, 512>}, {transform_indices = @transform_5, window_bounds = array<i64: 1, 512>}]} {
    %c0_i32 = arith.constant 0 : i32
    %0 = arith.cmpi eq, %arg1, %c0_i32 : i32
    %1 = arith.extui %0 : i1 to i32
    %c0_i32_0 = arith.constant 0 : i32
    %2 = arith.cmpi ne, %1, %c0_i32_0 : i32
    scf.if %2 {
      %c0_21 = arith.constant 0 : index
      %c0_22 = arith.constant 0 : index
      %31 = vector.load %arg2[%c0_21, %c0_22] : memref<1x512xf32, #tpu.memory_space<vmem>>, vector<1x512xf32>
      %32 = tpu.transpose %31, [1, 0] : vector<1x512xf32> -> vector<512x1xf32>
      %c0_23 = arith.constant 0 : index
      %c0_24 = arith.constant 0 : index
      %33 = vector.load %arg8[%c0_23, %c0_24] : memref<512x1xf32, #tpu.memory_space<vmem>>, vector<512x1xf32>
      tpu.vector_store %arg8[%c0_23, %c0_24], %32 {strides = array<i32>} : memref<512x1xf32, #tpu.memory_space<vmem>>, vector<512x1xf32>,
      %cst_25 = arith.constant 0.000000e+00 : f32
      %34 = vector.broadcast %cst_25 : f32 to vector<512x1xf32>
      %c0_26 = arith.constant 0 : index
      %c0_27 = arith.constant 0 : index
      %35 = vector.load %arg9[%c0_26, %c0_27] : memref<512x1xf32, #tpu.memory_space<vmem>>, vector<512x1xf32>
      tpu.vector_store %arg9[%c0_26, %c0_27], %34 {strides = array<i32>} : memref<512x1xf32, #tpu.memory_space<vmem>>, vector<512x1xf32>,
      %cst_28 = arith.constant 0.000000e+00 : f32
      %36 = vector.broadcast %cst_28 : f32 to vector<512x1xf32>
      %c0_29 = arith.constant 0 : index
      %c0_30 = arith.constant 0 : index
      %37 = vector.load %arg10[%c0_29, %c0_30] : memref<512x1xf32, #tpu.memory_space<vmem>>, vector<512x1xf32>
      tpu.vector_store %arg10[%c0_29, %c0_30], %36 {strides = array<i32>} : memref<512x1xf32, #tpu.memory_space<vmem>>, vector<512x1xf32>,
    } else {
    }
    %c0 = arith.constant 0 : index
    %c0_1 = arith.constant 0 : index
    %3 = vector.load %arg8[%c0, %c0_1] : memref<512x1xf32, #tpu.memory_space<vmem>>, vector<512x1xf32>
    %c0_2 = arith.constant 0 : index
    %c0_3 = arith.constant 0 : index
    %4 = vector.load %arg3[%c0_2, %c0_3] : memref<1x512xf32, #tpu.memory_space<vmem>>, vector<1x512xf32>
    %5 = vector.broadcast %3 : vector<512x1xf32> to vector<512x512xf32>
    %6 = vector.broadcast %4 : vector<1x512xf32> to vector<512x512xf32>
    %7 = arith.subf %5, %6 : vector<512x512xf32>
    %cst = arith.constant 0.000000e+00 : f32
    %8 = vector.broadcast %cst : f32 to vector<512x512xf32>
    %9 = arith.cmpf ogt, %7, %8 : vector<512x512xf32>
    %c0_4 = arith.constant 0 : index
    %c0_5 = arith.constant 0 : index
    %10 = vector.load %arg4[%c0_4, %c0_5] : memref<1x512xf32, #tpu.memory_space<vmem>>, vector<1x512xf32>
    %c0_6 = arith.constant 0 : index
    %c0_7 = arith.constant 0 : index
    %11 = vector.load %arg9[%c0_6, %c0_7] : memref<512x1xf32, #tpu.memory_space<vmem>>, vector<512x1xf32>
    %cst_8 = arith.constant 0.000000e+00 : f32
    %12 = vector.broadcast %cst_8 : f32 to vector<512x512xf32>
    %13 = vector.shape_cast %10 : vector<1x512xf32> to vector<1x512xf32>
    %14 = vector.broadcast %13 : vector<1x512xf32> to vector<512x512xf32>
    %15 = arith.select %9, %12, %14 : vector<512x512xi1>, vector<512x512xf32>
    %cst_9 = arith.constant dense<0.000000e+00> : vector<512xf32>
    %16 = vector.multi_reduction <add>, %15, %cst_9 [1] : vector<512x512xf32> to vector<512xf32>
    %17 = vector.shape_cast %16 : vector<512xf32> to vector<512x1xf32>
    %18 = arith.addf %11, %17 : vector<512x1xf32>
    %c0_10 = arith.constant 0 : index
    %c0_11 = arith.constant 0 : index
    %19 = vector.load %arg9[%c0_10, %c0_11] : memref<512x1xf32, #tpu.memory_space<vmem>>, vector<512x1xf32>
    tpu.vector_store %arg9[%c0_10, %c0_11], %18 {strides = array<i32>} : memref<512x1xf32, #tpu.memory_space<vmem>>, vector<512x1xf32>,
    %c0_12 = arith.constant 0 : index
    %c0_13 = arith.constant 0 : index
    %20 = vector.load %arg10[%c0_12, %c0_13] : memref<512x1xf32, #tpu.memory_space<vmem>>, vector<512x1xf32>
    %cst_14 = arith.constant 0.000000e+00 : f32
    %cst_15 = arith.constant 1.000000e+00 : f32
    %21 = vector.broadcast %cst_14 : f32 to vector<512x512xf32>
    %22 = vector.broadcast %cst_15 : f32 to vector<512x512xf32>
    %23 = arith.select %9, %21, %22 : vector<512x512xi1>, vector<512x512xf32>
    %cst_16 = arith.constant dense<0.000000e+00> : vector<512xf32>
    %24 = vector.multi_reduction <add>, %23, %cst_16 [1] : vector<512x512xf32> to vector<512xf32>
    %25 = vector.shape_cast %24 : vector<512xf32> to vector<512x1xf32>
    %26 = arith.addf %20, %25 : vector<512x1xf32>
    %c0_17 = arith.constant 0 : index
    %c0_18 = arith.constant 0 : index
    %27 = vector.load %arg10[%c0_17, %c0_18] : memref<512x1xf32, #tpu.memory_space<vmem>>, vector<512x1xf32>
    tpu.vector_store %arg10[%c0_17, %c0_18], %26 {strides = array<i32>} : memref<512x1xf32, #tpu.memory_space<vmem>>, vector<512x1xf32>,
    %c0_i32_19 = arith.constant 0 : i32
    %28 = arith.cmpi eq, %arg1, %c0_i32_19 : i32
    %29 = arith.extui %28 : i1 to i32
    %c0_i32_20 = arith.constant 0 : i32
    %30 = arith.cmpi ne, %29, %c0_i32_20 : i32
    scf.if %30 {
      %c0_21 = arith.constant 0 : index
      %c0_22 = arith.constant 0 : index
      %31 = vector.load %arg9[%c0_21, %c0_22] : memref<512x1xf32, #tpu.memory_space<vmem>>, vector<512x1xf32>
      %32 = tpu.transpose %31, [1, 0] : vector<512x1xf32> -> vector<1x512xf32>
      %c0_23 = arith.constant 0 : index
      %c0_24 = arith.constant 0 : index
      %33 = vector.load %arg10[%c0_23, %c0_24] : memref<512x1xf32, #tpu.memory_space<vmem>>, vector<512x1xf32>
      %34 = tpu.transpose %33, [1, 0] : vector<512x1xf32> -> vector<1x512xf32>
      %35 = math.log %32 : vector<1x512xf32>
      %36 = math.log %34 : vector<1x512xf32>
      %37 = arith.subf %35, %36 : vector<1x512xf32>
      %c0_25 = arith.constant 0 : index
      %c0_26 = arith.constant 0 : index
      %38 = vector.load %arg5[%c0_25, %c0_26] : memref<1x512xf32, #tpu.memory_space<vmem>>, vector<1x512xf32>
      %39 = arith.subf %38, %37 : vector<1x512xf32>
      %c0_27 = arith.constant 0 : index
      %c0_28 = arith.constant 0 : index
      %40 = vector.load %arg6[%c0_27, %c0_28] : memref<1x512xf32, #tpu.memory_space<vmem>>, vector<1x512xf32>
      %41 = arith.mulf %39, %40 : vector<1x512xf32>
      %c0_29 = arith.constant 0 : index
      %c0_30 = arith.constant 0 : index
      %42 = vector.load %arg7[%c0_29, %c0_30] : memref<1x512xf32, #tpu.memory_space<vmem>>, vector<1x512xf32>
      tpu.vector_store %arg7[%c0_29, %c0_30], %41 {strides = array<i32>} : memref<1x512xf32, #tpu.memory_space<vmem>>, vector<1x512xf32>,
    } else {
    }
    return
  }
  func.func @transform_0(%arg0: i32, %arg1: i32) -> (i32, i32) {
    %c0_i32 = arith.constant 0 : i32
    %c0_i32_0 = arith.constant 0 : i32
    return %c0_i32, %arg0 : i32, i32
  }
  func.func @transform_1(%arg0: i32, %arg1: i32) -> (i32, i32) {
    %c0_i32 = arith.constant 0 : i32
    %c0_i32_0 = arith.constant 0 : i32
    return %c0_i32, %arg1 : i32, i32
  }
  func.func @transform_2(%arg0: i32, %arg1: i32) -> (i32, i32) {
    %c0_i32 = arith.constant 0 : i32
    %c0_i32_0 = arith.constant 0 : i32
    return %c0_i32, %arg1 : i32, i32
  }
  func.func @transform_3(%arg0: i32, %arg1: i32) -> (i32, i32) {
    %c0_i32 = arith.constant 0 : i32
    %c0_i32_0 = arith.constant 0 : i32
    return %c0_i32, %arg0 : i32, i32
  }
  func.func @transform_4(%arg0: i32, %arg1: i32) -> (i32, i32) {
    %c0_i32 = arith.constant 0 : i32
    %c0_i32_0 = arith.constant 0 : i32
    return %c0_i32, %arg0 : i32, i32
  }
  func.func @transform_5(%arg0: i32, %arg1: i32) -> (i32, i32) {
    %c0_i32 = arith.constant 0 : i32
    %c0_i32_0 = arith.constant 0 : i32
    return %c0_i32, %arg0 : i32, i32
  }
}

</mosaic_0001>

<llo_original>
// kernel: tpu_custom_call.1
$region0: #{tpu_custom_call.1}
  #allocation0 [shape = 'u32[]', space=smem, size = 0x4, offset = 0x4, fixed_abs, tag = 'smem constant byte address 0x4 - core index']
  #allocation1 [shape = 'u32[144,128]{1,0:T(1,128)}', space=vmem, size = 0x12000, scoped, tag = 'internal scratch']
  #allocation2 [shape = 'f32[512,1]{1,0:T(8,128)}', space=vmem, size = 0x40000, scoped, tag = 'scratch operand']
  #allocation3 [shape = 'f32[512,1]{1,0:T(8,128)}', space=vmem, size = 0x40000, scoped, tag = 'scratch operand']
  #allocation4 [shape = 'f32[512,1]{1,0:T(8,128)}', space=vmem, size = 0x40000, scoped, tag = 'scratch operand']
  %s0 = inlined_call_operand.hbm [shape: f32[1,512], index: 0, kind: input, shape index: {}]
  %s1 = inlined_call_operand.hbm [shape: f32[1,512], index: 1, kind: input, shape index: {}]
  %s2 = inlined_call_operand.hbm [shape: f32[1,512], index: 2, kind: input, shape index: {}]
  %s3 = inlined_call_operand.vmem [shape: f32[1,512], index: 3, kind: input, shape index: {}]
  %s4 = inlined_call_operand.hbm [shape: f32[1,512], index: 4, kind: input, shape index: {}]
  %s5 = inlined_call_operand.hbm [shape: f32[1,512], index: 5, kind: output, shape index: {}]
  %s6 = sld [smem:[#allocation0]]
  $region54: #{tpu_custom_call.1} parent=0
    _
  %s8 = ssub.s32 1, %s6
  %s9 = scalar_select 0, %s8, %s6
  $region1: #{tpu_custom_call.1} parent=0
    #allocation5 [shape = 'u8[2048]{0}', space=vmem, size = 0x800, scoped, tag = 'input window, operand 0, single buffered']
    #allocation6 [shape = 's32[1]{0}', space=sflag, size = 0x4, scoped, tag = 'scoped memory for tpu_custom_call.1']
    #allocation7 [shape = 's32[1]{0}', space=sflag, size = 0x4, scoped, tag = 'scoped memory for tpu_custom_call.1']
    #allocation8 [shape = 'u8[2048]{0}', space=vmem, size = 0x800, scoped, tag = 'input window, operand 1, single buffered']
    #allocation9 [shape = 's32[1]{0}', space=sflag, size = 0x4, scoped, tag = 'scoped memory for tpu_custom_call.1']
    #allocation10 [shape = 'u8[2048]{0}', space=vmem, size = 0x800, scoped, tag = 'input window, operand 2, single buffered']
    #allocation11 [shape = 'u8[2048]{0}', space=vmem, size = 0x800, scoped, tag = 'input window, operand 4, single buffered']
    #allocation12 [shape = 's32[1]{0}', space=sflag, size = 0x4, scoped, tag = 'scoped memory for tpu_custom_call.1']
    #allocation13 [shape = 'u8[2048]{0}', space=vmem, size = 0x800, scoped, tag = 'output window, operand 0, single buffered']
    %10 = vsyncpa [#allocation6], 0
    %11 = vsyncpa [#allocation9], 0
    %12 = vsyncpa [#allocation12], 0
    %13 = vsyncpa [#allocation7], 0
    // Predicated region
    $region2: #{tpu_custom_call.1} parent=1 // pred_check
      _
    $region3: #{tpu_custom_call.1} parent=1 // pred_check_branch
      %15 = sbr.rel (0) target = $region5
    $region4: #{tpu_custom_call.1} parent=1 // pred_region
      %s17 = ssub.s32 64, 64
      %18 = vsyncadd [#allocation6], %s17
      %s20 = sshll.u32 [#allocation5], 4
      %s21 = int_to_ptr.vmem [resolvable:$true] %s20
      %23 = dma.hbm_to_vmem [thread:$0]  %s0, 64, %s21, [#allocation6]
    $region5: #{tpu_custom_call.1} parent=1 // pred_fallthru
      _
    // Predicated region
    $region6: #{tpu_custom_call.1} parent=1 // pred_check
      _
    $region7: #{tpu_custom_call.1} parent=1 // pred_check_branch
      %25 = sbr.rel (0) target = $region9
    $region8: #{tpu_custom_call.1} parent=1 // pred_region
      %s27 = ssub.s32 64, 64
      %28 = vsyncadd [#allocation9], %s27
      %s30 = sshll.u32 [#allocation8], 4
      %s31 = int_to_ptr.vmem [resolvable:$true] %s30
      %33 = dma.hbm_to_vmem [thread:$0]  %s1, 64, %s31, [#allocation9]
    $region9: #{tpu_custom_call.1} parent=1 // pred_fallthru
      _
    // Predicated region
    $region10: #{tpu_custom_call.1} parent=1 // pred_check
      _
    $region11: #{tpu_custom_call.1} parent=1 // pred_check_branch
      %35 = sbr.rel (0) target = $region13
    $region12: #{tpu_custom_call.1} parent=1 // pred_region
      %s37 = ssub.s32 64, 64
      %38 = vsyncadd [#allocation9], %s37
      %s40 = sshll.u32 [#allocation10], 4
      %s41 = int_to_ptr.vmem [resolvable:$true] %s40
      %43 = dma.hbm_to_vmem [thread:$0]  %s2, 64, %s41, [#allocation9]
    $region13: #{tpu_custom_call.1} parent=1 // pred_fallthru
      _
    // Predicated region
    $region14: #{tpu_custom_call.1} parent=1 // pred_check
      _
    $region15: #{tpu_custom_call.1} parent=1 // pred_check_branch
      %45 = sbr.rel (0) target = $region17
    $region16: #{tpu_custom_call.1} parent=1 // pred_region
      _
    $region17: #{tpu_custom_call.1} parent=1 // pred_fallthru
      _
    // Predicated region
    $region18: #{tpu_custom_call.1} parent=1 // pred_check
      _
    $region19: #{tpu_custom_call.1} parent=1 // pred_check_branch
      %47 = sbr.rel (0) target = $region21
    $region20: #{tpu_custom_call.1} parent=1 // pred_region
      %s49 = ssub.s32 64, 64
      %50 = vsyncadd [#allocation12], %s49
      %s52 = sshll.u32 [#allocation11], 4
      %s53 = int_to_ptr.vmem [resolvable:$true] %s52
      %55 = dma.hbm_to_vmem [thread:$0]  %s4, 64, %s53, [#allocation12]
    $region21: #{tpu_custom_call.1} parent=1 // pred_fallthru
      _
    // Predicated region
    $region22: #{tpu_custom_call.1} parent=1 // pred_check
      _
    $region23: #{tpu_custom_call.1} parent=1 // pred_check_branch
      %57 = sbr.rel (0) target = $region25
    $region24: #{tpu_custom_call.1} parent=1 // pred_region
      %58 = dma.done [#allocation6], 64
    $region25: #{tpu_custom_call.1} parent=1 // pred_fallthru
      _
    // Predicated region
    $region26: #{tpu_custom_call.1} parent=1 // pred_check
      _
    $region27: #{tpu_custom_call.1} parent=1 // pred_check_branch
      %60 = sbr.rel (0) target = $region29
    $region28: #{tpu_custom_call.1} parent=1 // pred_region
      %61 = dma.done [#allocation9], 64
    $region29: #{tpu_custom_call.1} parent=1 // pred_fallthru
      _
    // Predicated region
    $region30: #{tpu_custom_call.1} parent=1 // pred_check
      _
    $region31: #{tpu_custom_call.1} parent=1 // pred_check_branch
      %63 = sbr.rel (0) target = $region33
    $region32: #{tpu_custom_call.1} parent=1 // pred_region
      %64 = dma.done [#allocation9], 64
    $region33: #{tpu_custom_call.1} parent=1 // pred_fallthru
      _
    // Predicated region
    $region34: #{tpu_custom_call.1} parent=1 // pred_check
      _
    $region35: #{tpu_custom_call.1} parent=1 // pred_check_branch
      %66 = sbr.rel (0) target = $region37
    $region36: #{tpu_custom_call.1} parent=1 // pred_region
      %67 = dma.done [#allocation12], 64
    $region37: #{tpu_custom_call.1} parent=1 // pred_fallthru
      _
    %p68 = scmp.eq.s32.totalorder 0, 0
    // Predicated region
    $region38: #{tpu_custom_call.1} parent=1 // pred_check
      %p69 = pneg %p68
    $region39: #{tpu_custom_call.1} parent=1 // pred_check_branch
      %71 = sbr.rel (%p69) target = $region41
    $region40: #{tpu_custom_call.1} parent=1 // pred_region
      %v72 = vld [vmem:[#allocation5] sm:$0xf]
      %v74 = vlaneseq
      %v75 = vshrl.u32 %v74, 7
      %v76 = vsub.s32 0, %v75
      %v77 = vrot.slane %v72, %v76
      %v78 = vlaneseq
      %v79 = vshrl.u32 %v78, 7
      %v80 = vsub.s32 1, %v79
      %v81 = vrot.slane %v72, %v80
      %v82 = vlaneseq
      %v83 = vshrl.u32 %v82, 7
      %v84 = vsub.s32 2, %v83
      %v85 = vrot.slane %v72, %v84
      %v86 = vlaneseq
      %v87 = vshrl.u32 %v86, 7
      %v88 = vsub.s32 3, %v87
      %v89 = vrot.slane %v72, %v88
      %94 = vxpose.xlu0.b32.start [1/16] %v77, 128
      %95 = vxpose.xlu0.b32.cont [2/16] 0.0, 128
      %96 = vxpose.xlu0.b32.cont [3/16] 0.0, 128
      %97 = vxpose.xlu0.b32.cont [4/16] 0.0, 128
      %98 = vxpose.xlu0.b32.cont [5/16] 0.0, 128
      %99 = vxpose.xlu0.b32.cont [6/16] 0.0, 128
      %100 = vxpose.xlu0.b32.cont [7/16] 0.0, 128
      %101 = vxpose.xlu0.b32.cont [8/16] 0.0, 128
      %102 = vxpose.xlu0.b32.cont [9/16] 0.0, 128
      %103 = vxpose.xlu0.b32.cont [10/16] 0.0, 128
      %104 = vxpose.xlu0.b32.cont [11/16] 0.0, 128
      %105 = vxpose.xlu0.b32.cont [12/16] 0.0, 128
      %106 = vxpose.xlu0.b32.cont [13/16] 0.0, 128
      %107 = vxpose.xlu0.b32.cont [14/16] 0.0, 128
      %108 = vxpose.xlu0.b32.cont [15/16] 0.0, 128
      %109 = vxpose.xlu0.b32.end [16/16] 0.0, 128
      %v110 = vpop.trf.xlu0
      %v111 = vpop.trf.xlu0
      %v112 = vpop.trf.xlu0
      %v113 = vpop.trf.xlu0
      %v114 = vpop.trf.xlu0
      %v115 = vpop.trf.xlu0
      %v116 = vpop.trf.xlu0
      %v117 = vpop.trf.xlu0
      %v118 = vpop.trf.xlu0
      %v119 = vpop.trf.xlu0
      %v120 = vpop.trf.xlu0
      %v121 = vpop.trf.xlu0
      %v122 = vpop.trf.xlu0
      %v123 = vpop.trf.xlu0
      %v124 = vpop.trf.xlu0
      %v125 = vpop.trf.xlu0
      %126 = vxpose.xlu0.b32.start [1/16] %v81, 128
      %127 = vxpose.xlu0.b32.cont [2/16] 0.0, 128
      %128 = vxpose.xlu0.b32.cont [3/16] 0.0, 128
      %129 = vxpose.xlu0.b32.cont [4/16] 0.0, 128
      %130 = vxpose.xlu0.b32.cont [5/16] 0.0, 128
      %131 = vxpose.xlu0.b32.cont [6/16] 0.0, 128
      %132 = vxpose.xlu0.b32.cont [7/16] 0.0, 128
      %133 = vxpose.xlu0.b32.cont [8/16] 0.0, 128
      %134 = vxpose.xlu0.b32.cont [9/16] 0.0, 128
      %135 = vxpose.xlu0.b32.cont [10/16] 0.0, 128
      %136 = vxpose.xlu0.b32.cont [11/16] 0.0, 128
      %137 = vxpose.xlu0.b32.cont [12/16] 0.0, 128
      %138 = vxpose.xlu0.b32.cont [13/16] 0.0, 128
      %139 = vxpose.xlu0.b32.cont [14/16] 0.0, 128
      %140 = vxpose.xlu0.b32.cont [15/16] 0.0, 128
      %141 = vxpose.xlu0.b32.end [16/16] 0.0, 128
      %v142 = vpop.trf.xlu0
      %v143 = vpop.trf.xlu0
      %v144 = vpop.trf.xlu0
      %v145 = vpop.trf.xlu0
      %v146 = vpop.trf.xlu0
      %v147 = vpop.trf.xlu0
      %v148 = vpop.trf.xlu0
      %v149 = vpop.trf.xlu0
      %v150 = vpop.trf.xlu0
      %v151 = vpop.trf.xlu0
      %v152 = vpop.trf.xlu0
      %v153 = vpop.trf.xlu0
      %v154 = vpop.trf.xlu0
      %v155 = vpop.trf.xlu0
      %v156 = vpop.trf.xlu0
      %v157 = vpop.trf.xlu0
      %158 = vxpose.xlu0.b32.start [1/16] %v85, 128
      %159 = vxpose.xlu0.b32.cont [2/16] 0.0, 128
      %160 = vxpose.xlu0.b32.cont [3/16] 0.0, 128
      %161 = vxpose.xlu0.b32.cont [4/16] 0.0, 128
      %162 = vxpose.xlu0.b32.cont [5/16] 0.0, 128
      %163 = vxpose.xlu0.b32.cont [6/16] 0.0, 128
      %164 = vxpose.xlu0.b32.cont [7/16] 0.0, 128
      %165 = vxpose.xlu0.b32.cont [8/16] 0.0, 128
      %166 = vxpose.xlu0.b32.cont [9/16] 0.0, 128
      %167 = vxpose.xlu0.b32.cont [10/16] 0.0, 128
      %168 = vxpose.xlu0.b32.cont [11/16] 0.0, 128
      %169 = vxpose.xlu0.b32.cont [12/16] 0.0, 128
      %170 = vxpose.xlu0.b32.cont [13/16] 0.0, 128
      %171 = vxpose.xlu0.b32.cont [14/16] 0.0, 128
      %172 = vxpose.xlu0.b32.cont [15/16] 0.0, 128
      %173 = vxpose.xlu0.b32.end [16/16] 0.0, 128
      %v174 = vpop.trf.xlu0
      %v175 = vpop.trf.xlu0
      %v176 = vpop.trf.xlu0
      %v177 = vpop.trf.xlu0
      %v178 = vpop.trf.xlu0
      %v179 = vpop.trf.xlu0
      %v180 = vpop.trf.xlu0
      %v181 = vpop.trf.xlu0
      %v182 = vpop.trf.xlu0
      %v183 = vpop.trf.xlu0
      %v184 = vpop.trf.xlu0
      %v185 = vpop.trf.xlu0
      %v186 = vpop.trf.xlu0
      %v187 = vpop.trf.xlu0
      %v188 = vpop.trf.xlu0
      %v189 = vpop.trf.xlu0
      %190 = vxpose.xlu0.b32.start [1/16] %v89, 128
      %191 = vxpose.xlu0.b32.cont [2/16] 0.0, 128
      %192 = vxpose.xlu0.b32.cont [3/16] 0.0, 128
      %193 = vxpose.xlu0.b32.cont [4/16] 0.0, 128
      %194 = vxpose.xlu0.b32.cont [5/16] 0.0, 128
      %195 = vxpose.xlu0.b32.cont [6/16] 0.0, 128
      %196 = vxpose.xlu0.b32.cont [7/16] 0.0, 128
      %197 = vxpose.xlu0.b32.cont [8/16] 0.0, 128
      %198 = vxpose.xlu0.b32.cont [9/16] 0.0, 128
      %199 = vxpose.xlu0.b32.cont [10/16] 0.0, 128
      %200 = vxpose.xlu0.b32.cont [11/16] 0.0, 128
      %201 = vxpose.xlu0.b32.cont [12/16] 0.0, 128
      %202 = vxpose.xlu0.b32.cont [13/16] 0.0, 128
      %203 = vxpose.xlu0.b32.cont [14/16] 0.0, 128
      %204 = vxpose.xlu0.b32.cont [15/16] 0.0, 128
      %205 = vxpose.xlu0.b32.end [16/16] 0.0, 128
      %v206 = vpop.trf.xlu0
      %v207 = vpop.trf.xlu0
      %v208 = vpop.trf.xlu0
      %v209 = vpop.trf.xlu0
      %v210 = vpop.trf.xlu0
      %v211 = vpop.trf.xlu0
      %v212 = vpop.trf.xlu0
      %v213 = vpop.trf.xlu0
      %v214 = vpop.trf.xlu0
      %v215 = vpop.trf.xlu0
      %v216 = vpop.trf.xlu0
      %v217 = vpop.trf.xlu0
      %v218 = vpop.trf.xlu0
      %v219 = vpop.trf.xlu0
      %v220 = vpop.trf.xlu0
      %v221 = vpop.trf.xlu0
      %vm222 = vcmask 7168
      %223 = vst.msk [vmem:[#allocation2] sm:$0xff] %vm222, %v110
      %224 = vst.msk [vmem:[#allocation2 + $0x8] sm:$0xff] %vm222, %v111
      %225 = vst.msk [vmem:[#allocation2 + $0x10] sm:$0xff] %vm222, %v112
      %226 = vst.msk [vmem:[#allocation2 + $0x18] sm:$0xff] %vm222, %v113
      %227 = vst.msk [vmem:[#allocation2 + $0x20] sm:$0xff] %vm222, %v114
      %228 = vst.msk [vmem:[#allocation2 + $0x28] sm:$0xff] %vm222, %v115
      %229 = vst.msk [vmem:[#allocation2 + $0x30] sm:$0xff] %vm222, %v116
      %230 = vst.msk [vmem:[#allocation2 + $0x38] sm:$0xff] %vm222, %v117
      %231 = vst.msk [vmem:[#allocation2 + $0x40] sm:$0xff] %vm222, %v118
      %232 = vst.msk [vmem:[#allocation2 + $0x48] sm:$0xff] %vm222, %v119
      %233 = vst.msk [vmem:[#allocation2 + $0x50] sm:$0xff] %vm222, %v120
      %234 = vst.msk [vmem:[#allocation2 + $0x58] sm:$0xff] %vm222, %v121
      %235 = vst.msk [vmem:[#allocation2 + $0x60] sm:$0xff] %vm222, %v122
      %236 = vst.msk [vmem:[#allocation2 + $0x68] sm:$0xff] %vm222, %v123
      %237 = vst.msk [vmem:[#allocation2 + $0x70] sm:$0xff] %vm222, %v124
      %238 = vst.msk [vmem:[#allocation2 + $0x78] sm:$0xff] %vm222, %v125
      %239 = vst.msk [vmem:[#allocation2 + $0x80] sm:$0xff] %vm222, %v142
      %240 = vst.msk [vmem:[#allocation2 + $0x88] sm:$0xff] %vm222, %v143
      %241 = vst.msk [vmem:[#allocation2 + $0x90] sm:$0xff] %vm222, %v144
      %242 = vst.msk [vmem:[#allocation2 + $0x98] sm:$0xff] %vm222, %v145
      %243 = vst.msk [vmem:[#allocation2 + $0xa0] sm:$0xff] %vm222, %v146
      %244 = vst.msk [vmem:[#allocation2 + $0xa8] sm:$0xff] %vm222, %v147
      %245 = vst.msk [vmem:[#allocation2 + $0xb0] sm:$0xff] %vm222, %v148
      %246 = vst.msk [vmem:[#allocation2 + $0xb8] sm:$0xff] %vm222, %v149
      %247 = vst.msk [vmem:[#allocation2 + $0xc0] sm:$0xff] %vm222, %v150
      %248 = vst.msk [vmem:[#allocation2 + $0xc8] sm:$0xff] %vm222, %v151
      %249 = vst.msk [vmem:[#allocation2 + $0xd0] sm:$0xff] %vm222, %v152
      %250 = vst.msk [vmem:[#allocation2 + $0xd8] sm:$0xff] %vm222, %v153
      %251 = vst.msk [vmem:[#allocation2 + $0xe0] sm:$0xff] %vm222, %v154
      %252 = vst.msk [vmem:[#allocation2 + $0xe8] sm:$0xff] %vm222, %v155
      %253 = vst.msk [vmem:[#allocation2 + $0xf0] sm:$0xff] %vm222, %v156
      %254 = vst.msk [vmem:[#allocation2 + $0xf8] sm:$0xff] %vm222, %v157
      %255 = vst.msk [vmem:[#allocation2 + $0x100] sm:$0xff] %vm222, %v174
      %256 = vst.msk [vmem:[#allocation2 + $0x108] sm:$0xff] %vm222, %v175
      %257 = vst.msk [vmem:[#allocation2 + $0x110] sm:$0xff] %vm222, %v176
      %258 = vst.msk [vmem:[#allocation2 + $0x118] sm:$0xff] %vm222, %v177
      %259 = vst.msk [vmem:[#allocation2 + $0x120] sm:$0xff] %vm222, %v178
      %260 = vst.msk [vmem:[#allocation2 + $0x128] sm:$0xff] %vm222, %v179
      %261 = vst.msk [vmem:[#allocation2 + $0x130] sm:$0xff] %vm222, %v180
      %262 = vst.msk [vmem:[#allocation2 + $0x138] sm:$0xff] %vm222, %v181
      %263 = vst.msk [vmem:[#allocation2 + $0x140] sm:$0xff] %vm222, %v182
      %264 = vst.msk [vmem:[#allocation2 + $0x148] sm:$0xff] %vm222, %v183
      %265 = vst.msk [vmem:[#allocation2 + $0x150] sm:$0xff] %vm222, %v184
      %266 = vst.msk [vmem:[#allocation2 + $0x158] sm:$0xff] %vm222, %v185
      %267 = vst.msk [vmem:[#allocation2 + $0x160] sm:$0xff] %vm222, %v186
      %268 = vst.msk [vmem:[#allocation2 + $0x168] sm:$0xff] %vm222, %v187
      %269 = vst.msk [vmem:[#allocation2 + $0x170] sm:$0xff] %vm222, %v188
      %270 = vst.msk [vmem:[#allocation2 + $0x178] sm:$0xff] %vm222, %v189
      %271 = vst.msk [vmem:[#allocation2 + $0x180] sm:$0xff] %vm222, %v206
      %272 = vst.msk [vmem:[#allocation2 + $0x188] sm:$0xff] %vm222, %v207
      %273 = vst.msk [vmem:[#allocation2 + $0x190] sm:$0xff] %vm222, %v208
      %274 = vst.msk [vmem:[#allocation2 + $0x198] sm:$0xff] %vm222, %v209
      %275 = vst.msk [vmem:[#allocation2 + $0x1a0] sm:$0xff] %vm222, %v210
      %276 = vst.msk [vmem:[#allocation2 + $0x1a8] sm:$0xff] %vm222, %v211
      %277 = vst.msk [vmem:[#allocation2 + $0x1b0] sm:$0xff] %vm222, %v212
      %278 = vst.msk [vmem:[#allocation2 + $0x1b8] sm:$0xff] %vm222, %v213
      %279 = vst.msk [vmem:[#allocation2 + $0x1c0] sm:$0xff] %vm222, %v214
      %280 = vst.msk [vmem:[#allocation2 + $0x1c8] sm:$0xff] %vm222, %v215
      %281 = vst.msk [vmem:[#allocation2 + $0x1d0] sm:$0xff] %vm222, %v216
      %282 = vst.msk [vmem:[#allocation2 + $0x1d8] sm:$0xff] %vm222, %v217
      %283 = vst.msk [vmem:[#allocation2 + $0x1e0] sm:$0xff] %vm222, %v218
      %284 = vst.msk [vmem:[#allocation2 + $0x1e8] sm:$0xff] %vm222, %v219
      %285 = vst.msk [vmem:[#allocation2 + $0x1f0] sm:$0xff] %vm222, %v220
      %286 = vst.msk [vmem:[#allocation2 + $0x1f8] sm:$0xff] %vm222, %v221
      %287 = vst.msk [vmem:[#allocation3] sm:$0xff] %vm222, 0.0
      %288 = vst.msk [vmem:[#allocation3 + $0x8] sm:$0xff] %vm222, 0.0
      %289 = vst.msk [vmem:[#allocation3 + $0x10] sm:$0xff] %vm222, 0.0
      %290 = vst.msk [vmem:[#allocation3 + $0x18] sm:$0xff] %vm222, 0.0
      %291 = vst.msk [vmem:[#allocation3 + $0x20] sm:$0xff] %vm222, 0.0
      %292 = vst.msk [vmem:[#allocation3 + $0x28] sm:$0xff] %vm222, 0.0
      %293 = vst.msk [vmem:[#allocation3 + $0x30] sm:$0xff] %vm222, 0.0
      %294 = vst.msk [vmem:[#allocation3 + $0x38] sm:$0xff] %vm222, 0.0
      %295 = vst.msk [vmem:[#allocation3 + $0x40] sm:$0xff] %vm222, 0.0
      %296 = vst.msk [vmem:[#allocation3 + $0x48] sm:$0xff] %vm222, 0.0
      %297 = vst.msk [vmem:[#allocation3 + $0x50] sm:$0xff] %vm222, 0.0
      %298 = vst.msk [vmem:[#allocation3 + $0x58] sm:$0xff] %vm222, 0.0
      %299 = vst.msk [vmem:[#allocation3 + $0x60] sm:$0xff] %vm222, 0.0
      %300 = vst.msk [vmem:[#allocation3 + $0x68] sm:$0xff] %vm222, 0.0
      %301 = vst.msk [vmem:[#allocation3 + $0x70] sm:$0xff] %vm222, 0.0
      %302 = vst.msk [vmem:[#allocation3 + $0x78] sm:$0xff] %vm222, 0.0
      %303 = vst.msk [vmem:[#allocation3 + $0x80] sm:$0xff] %vm222, 0.0
      %304 = vst.msk [vmem:[#allocation3 + $0x88] sm:$0xff] %vm222, 0.0
      %305 = vst.msk [vmem:[#allocation3 + $0x90] sm:$0xff] %vm222, 0.0
      %306 = vst.msk [vmem:[#allocation3 + $0x98] sm:$0xff] %vm222, 0.0
      %307 = vst.msk [vmem:[#allocation3 + $0xa0] sm:$0xff] %vm222, 0.0
      %308 = vst.msk [vmem:[#allocation3 + $0xa8] sm:$0xff] %vm222, 0.0
      %309 = vst.msk [vmem:[#allocation3 + $0xb0] sm:$0xff] %vm222, 0.0
      %310 = vst.msk [vmem:[#allocation3 + $0xb8] sm:$0xff] %vm222, 0.0
      %311 = vst.msk [vmem:[#allocation3 + $0xc0] sm:$0xff] %vm222, 0.0
      %312 = vst.msk [vmem:[#allocation3 + $0xc8] sm:$0xff] %vm222, 0.0
      %313 = vst.msk [vmem:[#allocation3 + $0xd0] sm:$0xff] %vm222, 0.0
      %314 = vst.msk [vmem:[#allocation3 + $0xd8] sm:$0xff] %vm222, 0.0
      %315 = vst.msk [vmem:[#allocation3 + $0xe0] sm:$0xff] %vm222, 0.0
      %316 = vst.msk [vmem:[#allocation3 + $0xe8] sm:$0xff] %vm222, 0.0
      %317 = vst.msk [vmem:[#allocation3 + $0xf0] sm:$0xff] %vm222, 0.0
      %318 = vst.msk [vmem:[#allocation3 + $0xf8] sm:$0xff] %vm222, 0.0
      %319 = vst.msk [vmem:[#allocation3 + $0x100] sm:$0xff] %vm222, 0.0
      %320 = vst.msk [vmem:[#allocation3 + $0x108] sm:$0xff] %vm222, 0.0
      %321 = vst.msk [vmem:[#allocation3 + $0x110] sm:$0xff] %vm222, 0.0
      %322 = vst.msk [vmem:[#allocation3 + $0x118] sm:$0xff] %vm222, 0.0
      %323 = vst.msk [vmem:[#allocation3 + $0x120] sm:$0xff] %vm222, 0.0
      %324 = vst.msk [vmem:[#allocation3 + $0x128] sm:$0xff] %vm222, 0.0
      %325 = vst.msk [vmem:[#allocation3 + $0x130] sm:$0xff] %vm222, 0.0
      %326 = vst.msk [vmem:[#allocation3 + $0x138] sm:$0xff] %vm222, 0.0
      %327 = vst.msk [vmem:[#allocation3 + $0x140] sm:$0xff] %vm222, 0.0
      %328 = vst.msk [vmem:[#allocation3 + $0x148] sm:$0xff] %vm222, 0.0
      %329 = vst.msk [vmem:[#allocation3 + $0x150] sm:$0xff] %vm222, 0.0
      %330 = vst.msk [vmem:[#allocation3 + $0x158] sm:$0xff] %vm222, 0.0
      %331 = vst.msk [vmem:[#allocation3 + $0x160] sm:$0xff] %vm222, 0.0
      %332 = vst.msk [vmem:[#allocation3 + $0x168] sm:$0xff] %vm222, 0.0
      %333 = vst.msk [vmem:[#allocation3 + $0x170] sm:$0xff] %vm222, 0.0
      %334 = vst.msk [vmem:[#allocation3 + $0x178] sm:$0xff] %vm222, 0.0
      %335 = vst.msk [vmem:[#allocation3 + $0x180] sm:$0xff] %vm222, 0.0
      %336 = vst.msk [vmem:[#allocation3 + $0x188] sm:$0xff] %vm222, 0.0
      %337 = vst.msk [vmem:[#allocation3 + $0x190] sm:$0xff] %vm222, 0.0
      %338 = vst.msk [vmem:[#allocation3 + $0x198] sm:$0xff] %vm222, 0.0
      %339 = vst.msk [vmem:[#allocation3 + $0x1a0] sm:$0xff] %vm222, 0.0
      %340 = vst.msk [vmem:[#allocation3 + $0x1a8] sm:$0xff] %vm222, 0.0
      %341 = vst.msk [vmem:[#allocation3 + $0x1b0] sm:$0xff] %vm222, 0.0
      %342 = vst.msk [vmem:[#allocation3 + $0x1b8] sm:$0xff] %vm222, 0.0
      %343 = vst.msk [vmem:[#allocation3 + $0x1c0] sm:$0xff] %vm222, 0.0
      %344 = vst.msk [vmem:[#allocation3 + $0x1c8] sm:$0xff] %vm222, 0.0
      %345 = vst.msk [vmem:[#allocation3 + $0x1d0] sm:$0xff] %vm222, 0.0
      %346 = vst.msk [vmem:[#allocation3 + $0x1d8] sm:$0xff] %vm222, 0.0
      %347 = vst.msk [vmem:[#allocation3 + $0x1e0] sm:$0xff] %vm222, 0.0
      %348 = vst.msk [vmem:[#allocation3 + $0x1e8] sm:$0xff] %vm222, 0.0
      %349 = vst.msk [vmem:[#allocation3 + $0x1f0] sm:$0xff] %vm222, 0.0
      %350 = vst.msk [vmem:[#allocation3 + $0x1f8] sm:$0xff] %vm222, 0.0
      %351 = vst.msk [vmem:[#allocation4] sm:$0xff] %vm222, 0.0
      %352 = vst.msk [vmem:[#allocation4 + $0x8] sm:$0xff] %vm222, 0.0
      %353 = vst.msk [vmem:[#allocation4 + $0x10] sm:$0xff] %vm222, 0.0
      %354 = vst.msk [vmem:[#allocation4 + $0x18] sm:$0xff] %vm222, 0.0
      %355 = vst.msk [vmem:[#allocation4 + $0x20] sm:$0xff] %vm222, 0.0
      %356 = vst.msk [vmem:[#allocation4 + $0x28] sm:$0xff] %vm222, 0.0
      %357 = vst.msk [vmem:[#allocation4 + $0x30] sm:$0xff] %vm222, 0.0
      %358 = vst.msk [vmem:[#allocation4 + $0x38] sm:$0xff] %vm222, 0.0
      %359 = vst.msk [vmem:[#allocation4 + $0x40] sm:$0xff] %vm222, 0.0
      %360 = vst.msk [vmem:[#allocation4 + $0x48] sm:$0xff] %vm222, 0.0
      %361 = vst.msk [vmem:[#allocation4 + $0x50] sm:$0xff] %vm222, 0.0
      %362 = vst.msk [vmem:[#allocation4 + $0x58] sm:$0xff] %vm222, 0.0
      %363 = vst.msk [vmem:[#allocation4 + $0x60] sm:$0xff] %vm222, 0.0
      %364 = vst.msk [vmem:[#allocation4 + $0x68] sm:$0xff] %vm222, 0.0
      %365 = vst.msk [vmem:[#allocation4 + $0x70] sm:$0xff] %vm222, 0.0
      %366 = vst.msk [vmem:[#allocation4 + $0x78] sm:$0xff] %vm222, 0.0
      %367 = vst.msk [vmem:[#allocation4 + $0x80] sm:$0xff] %vm222, 0.0
      %368 = vst.msk [vmem:[#allocation4 + $0x88] sm:$0xff] %vm222, 0.0
      %369 = vst.msk [vmem:[#allocation4 + $0x90] sm:$0xff] %vm222, 0.0
      %370 = vst.msk [vmem:[#allocation4 + $0x98] sm:$0xff] %vm222, 0.0
      %371 = vst.msk [vmem:[#allocation4 + $0xa0] sm:$0xff] %vm222, 0.0
      %372 = vst.msk [vmem:[#allocation4 + $0xa8] sm:$0xff] %vm222, 0.0
      %373 = vst.msk [vmem:[#allocation4 + $0xb0] sm:$0xff] %vm222, 0.0
      %374 = vst.msk [vmem:[#allocation4 + $0xb8] sm:$0xff] %vm222, 0.0
      %375 = vst.msk [vmem:[#allocation4 + $0xc0] sm:$0xff] %vm222, 0.0
      %376 = vst.msk [vmem:[#allocation4 + $0xc8] sm:$0xff] %vm222, 0.0
      %377 = vst.msk [vmem:[#allocation4 + $0xd0] sm:$0xff] %vm222, 0.0
      %378 = vst.msk [vmem:[#allocation4 + $0xd8] sm:$0xff] %vm222, 0.0
      %379 = vst.msk [vmem:[#allocation4 + $0xe0] sm:$0xff] %vm222, 0.0
      %380 = vst.msk [vmem:[#allocation4 + $0xe8] sm:$0xff] %vm222, 0.0
      %381 = vst.msk [vmem:[#allocation4 + $0xf0] sm:$0xff] %vm222, 0.0
      %382 = vst.msk [vmem:[#allocation4 + $0xf8] sm:$0xff] %vm222, 0.0
      %383 = vst.msk [vmem:[#allocation4 + $0x100] sm:$0xff] %vm222, 0.0
      %384 = vst.msk [vmem:[#allocation4 + $0x108] sm:$0xff] %vm222, 0.0
      %385 = vst.msk [vmem:[#allocation4 + $0x110] sm:$0xff] %vm222, 0.0
      %386 = vst.msk [vmem:[#allocation4 + $0x118] sm:$0xff] %vm222, 0.0
      %387 = vst.msk [vmem:[#allocation4 + $0x120] sm:$0xff] %vm222, 0.0
      %388 = vst.msk [vmem:[#allocation4 + $0x128] sm:$0xff] %vm222, 0.0
      %389 = vst.msk [vmem:[#allocation4 + $0x130] sm:$0xff] %vm222, 0.0
      %390 = vst.msk [vmem:[#allocation4 + $0x138] sm:$0xff] %vm222, 0.0
      %391 = vst.msk [vmem:[#allocation4 + $0x140] sm:$0xff] %vm222, 0.0
      %392 = vst.msk [vmem:[#allocation4 + $0x148] sm:$0xff] %vm222, 0.0
      %393 = vst.msk [vmem:[#allocation4 + $0x150] sm:$0xff] %vm222, 0.0
      %394 = vst.msk [vmem:[#allocation4 + $0x158] sm:$0xff] %vm222, 0.0
      %395 = vst.msk [vmem:[#allocation4 + $0x160] sm:$0xff] %vm222, 0.0
      %396 = vst.msk [vmem:[#allocation4 + $0x168] sm:$0xff] %vm222, 0.0
      %397 = vst.msk [vmem:[#allocation4 + $0x170] sm:$0xff] %vm222, 0.0
      %398 = vst.msk [vmem:[#allocation4 + $0x178] sm:$0xff] %vm222, 0.0
      %399 = vst.msk [vmem:[#allocation4 + $0x180] sm:$0xff] %vm222, 0.0
      %400 = vst.msk [vmem:[#allocation4 + $0x188] sm:$0xff] %vm222, 0.0
      %401 = vst.msk [vmem:[#allocation4 + $0x190] sm:$0xff] %vm222, 0.0
      %402 = vst.msk [vmem:[#allocation4 + $0x198] sm:$0xff] %vm222, 0.0
      %403 = vst.msk [vmem:[#allocation4 + $0x1a0] sm:$0xff] %vm222, 0.0
      %404 = vst.msk [vmem:[#allocation4 + $0x1a8] sm:$0xff] %vm222, 0.0
      %405 = vst.msk [vmem:[#allocation4 + $0x1b0] sm:$0xff] %vm222, 0.0
      %406 = vst.msk [vmem:[#allocation4 + $0x1b8] sm:$0xff] %vm222, 0.0
      %407 = vst.msk [vmem:[#allocation4 + $0x1c0] sm:$0xff] %vm222, 0.0
      %408 = vst.msk [vmem:[#allocation4 + $0x1c8] sm:$0xff] %vm222, 0.0
      %409 = vst.msk [vmem:[#allocation4 + $0x1d0] sm:$0xff] %vm222, 0.0
      %410 = vst.msk [vmem:[#allocation4 + $0x1d8] sm:$0xff] %vm222, 0.0
      %411 = vst.msk [vmem:[#allocation4 + $0x1e0] sm:$0xff] %vm222, 0.0
      %412 = vst.msk [vmem:[#allocation4 + $0x1e8] sm:$0xff] %vm222, 0.0
      %413 = vst.msk [vmem:[#allocation4 + $0x1f0] sm:$0xff] %vm222, 0.0
      %414 = vst.msk [vmem:[#allocation4 + $0x1f8] sm:$0xff] %vm222, 0.0
    $region41: #{tpu_custom_call.1} parent=1 // pred_fallthru
      _
    %v415 = vld [vmem:[#allocation2] sm:$0xff]
    %v416 = vld [vmem:[#allocation2 + $0x8] sm:$0xff]
    %v417 = vld [vmem:[#allocation2 + $0x10] sm:$0xff]
    %v418 = vld [vmem:[#allocation2 + $0x18] sm:$0xff]
    %v419 = vld [vmem:[#allocation2 + $0x20] sm:$0xff]
    %v420 = vld [vmem:[#allocation2 + $0x28] sm:$0xff]
    %v421 = vld [vmem:[#allocation2 + $0x30] sm:$0xff]
    %v422 = vld [vmem:[#allocation2 + $0x38] sm:$0xff]
    %v423 = vld [vmem:[#allocation2 + $0x40] sm:$0xff]
    %v424 = vld [vmem:[#allocation2 + $0x48] sm:$0xff]
    %v425 = vld [vmem:[#allocation2 + $0x50] sm:$0xff]
    %v426 = vld [vmem:[#allocation2 + $0x58] sm:$0xff]
    %v427 = vld [vmem:[#allocation2 + $0x60] sm:$0xff]
    %v428 = vld [vmem:[#allocation2 + $0x68] sm:$0xff]
    %v429 = vld [vmem:[#allocation2 + $0x70] sm:$0xff]
    %v430 = vld [vmem:[#allocation2 + $0x78] sm:$0xff]
    %v431 = vld [vmem:[#allocation2 + $0x80] sm:$0xff]
    %v432 = vld [vmem:[#allocation2 + $0x88] sm:$0xff]
    %v433 = vld [vmem:[#allocation2 + $0x90] sm:$0xff]
    %v434 = vld [vmem:[#allocation2 + $0x98] sm:$0xff]
    %v435 = vld [vmem:[#allocation2 + $0xa0] sm:$0xff]
    %v436 = vld [vmem:[#allocation2 + $0xa8] sm:$0xff]
    %v437 = vld [vmem:[#allocation2 + $0xb0] sm:$0xff]
    %v438 = vld [vmem:[#allocation2 + $0xb8] sm:$0xff]
    %v439 = vld [vmem:[#allocation2 + $0xc0] sm:$0xff]
    %v440 = vld [vmem:[#allocation2 + $0xc8] sm:$0xff]
    %v441 = vld [vmem:[#allocation2 + $0xd0] sm:$0xff]
    %v442 = vld [vmem:[#allocation2 + $0xd8] sm:$0xff]
    %v443 = vld [vmem:[#allocation2 + $0xe0] sm:$0xff]
    %v444 = vld [vmem:[#allocation2 + $0xe8] sm:$0xff]
    %v445 = vld [vmem:[#allocation2 + $0xf0] sm:$0xff]
    %v446 = vld [vmem:[#allocation2 + $0xf8] sm:$0xff]
    %v447 = vld [vmem:[#allocation2 + $0x100] sm:$0xff]
    %v448 = vld [vmem:[#allocation2 + $0x108] sm:$0xff]
    %v449 = vld [vmem:[#allocation2 + $0x110] sm:$0xff]
    %v450 = vld [vmem:[#allocation2 + $0x118] sm:$0xff]
    %v451 = vld [vmem:[#allocation2 + $0x120] sm:$0xff]
    %v452 = vld [vmem:[#allocation2 + $0x128] sm:$0xff]
    %v453 = vld [vmem:[#allocation2 + $0x130] sm:$0xff]
    %v454 = vld [vmem:[#allocation2 + $0x138] sm:$0xff]
    %v455 = vld [vmem:[#allocation2 + $0x140] sm:$0xff]
    %v456 = vld [vmem:[#allocation2 + $0x148] sm:$0xff]
    %v457 = vld [vmem:[#allocation2 + $0x150] sm:$0xff]
    %v458 = vld [vmem:[#allocation2 + $0x158] sm:$0xff]
    %v459 = vld [vmem:[#allocation2 + $0x160] sm:$0xff]
    %v460 = vld [vmem:[#allocation2 + $0x168] sm:$0xff]
    %v461 = vld [vmem:[#allocation2 + $0x170] sm:$0xff]
    %v462 = vld [vmem:[#allocation2 + $0x178] sm:$0xff]
    %v463 = vld [vmem:[#allocation2 + $0x180] sm:$0xff]
    %v464 = vld [vmem:[#allocation2 + $0x188] sm:$0xff]
    %v465 = vld [vmem:[#allocation2 + $0x190] sm:$0xff]
    %v466 = vld [vmem:[#allocation2 + $0x198] sm:$0xff]
    %v467 = vld [vmem:[#allocation2 + $0x1a0] sm:$0xff]
    %v468 = vld [vmem:[#allocation2 + $0x1a8] sm:$0xff]
    %v469 = vld [vmem:[#allocation2 + $0x1b0] sm:$0xff]
    %v470 = vld [vmem:[#allocation2 + $0x1b8] sm:$0xff]
    %v471 = vld [vmem:[#allocation2 + $0x1c0] sm:$0xff]
    %v472 = vld [vmem:[#allocation2 + $0x1c8] sm:$0xff]
    %v473 = vld [vmem:[#allocation2 + $0x1d0] sm:$0xff]
    %v474 = vld [vmem:[#allocation2 + $0x1d8] sm:$0xff]
    %v475 = vld [vmem:[#allocation2 + $0x1e0] sm:$0xff]
    %v476 = vld [vmem:[#allocation2 + $0x1e8] sm:$0xff]
    %v477 = vld [vmem:[#allocation2 + $0x1f0] sm:$0xff]
    %v478 = vld [vmem:[#allocation2 + $0x1f8] sm:$0xff]
    %v479 = vld [vmem:[#allocation8] sm:$0xf]
    %481 = vset.pattern.permute.xlu0 0
    %482 = vperm.xlu0 %481, %v415
    %v483 = vpop.permute.xlu0 %482
    %486 = vset.pattern.permute.xlu0 0
    %487 = vperm.xlu0 %486, %v416
    %v488 = vpop.permute.xlu0 %487
    %491 = vset.pattern.permute.xlu0 0
    %492 = vperm.xlu0 %491, %v417
    %v493 = vpop.permute.xlu0 %492
    %496 = vset.pattern.permute.xlu0 0
    %497 = vperm.xlu0 %496, %v418
    %v498 = vpop.permute.xlu0 %497
    %501 = vset.pattern.permute.xlu0 0
    %502 = vperm.xlu0 %501, %v419
    %v503 = vpop.permute.xlu0 %502
    %506 = vset.pattern.permute.xlu0 0
    %507 = vperm.xlu0 %506, %v420
    %v508 = vpop.permute.xlu0 %507
    %511 = vset.pattern.permute.xlu0 0
    %512 = vperm.xlu0 %511, %v421
    %v513 = vpop.permute.xlu0 %512
    %516 = vset.pattern.permute.xlu0 0
    %517 = vperm.xlu0 %516, %v422
    %v518 = vpop.permute.xlu0 %517
    %521 = vset.pattern.permute.xlu0 0
    %522 = vperm.xlu0 %521, %v423
    %v523 = vpop.permute.xlu0 %522
    %526 = vset.pattern.permute.xlu0 0
    %527 = vperm.xlu0 %526, %v424
    %v528 = vpop.permute.xlu0 %527
    %531 = vset.pattern.permute.xlu0 0
    %532 = vperm.xlu0 %531, %v425
    %v533 = vpop.permute.xlu0 %532
    %536 = vset.pattern.permute.xlu0 0
    %537 = vperm.xlu0 %536, %v426
    %v538 = vpop.permute.xlu0 %537
    %541 = vset.pattern.permute.xlu0 0
    %542 = vperm.xlu0 %541, %v427
    %v543 = vpop.permute.xlu0 %542
    %546 = vset.pattern.permute.xlu0 0
    %547 = vperm.xlu0 %546, %v428
    %v548 = vpop.permute.xlu0 %547
    %551 = vset.pattern.permute.xlu0 0
    %552 = vperm.xlu0 %551, %v429
    %v553 = vpop.permute.xlu0 %552
    %556 = vset.pattern.permute.xlu0 0
    %557 = vperm.xlu0 %556, %v430
    %v558 = vpop.permute.xlu0 %557
    %561 = vset.pattern.permute.xlu0 0
    %562 = vperm.xlu0 %561, %v431
    %v563 = vpop.permute.xlu0 %562
    %566 = vset.pattern.permute.xlu0 0
    %567 = vperm.xlu0 %566, %v432
    %v568 = vpop.permute.xlu0 %567
    %571 = vset.pattern.permute.xlu0 0
    %572 = vperm.xlu0 %571, %v433
    %v573 = vpop.permute.xlu0 %572
    %576 = vset.pattern.permute.xlu0 0
    %577 = vperm.xlu0 %576, %v434
    %v578 = vpop.permute.xlu0 %577
    %581 = vset.pattern.permute.xlu0 0
    %582 = vperm.xlu0 %581, %v435
    %v583 = vpop.permute.xlu0 %582
    %586 = vset.pattern.permute.xlu0 0
    %587 = vperm.xlu0 %586, %v436
    %v588 = vpop.permute.xlu0 %587
    %591 = vset.pattern.permute.xlu0 0
    %592 = vperm.xlu0 %591, %v437
    %v593 = vpop.permute.xlu0 %592
    %596 = vset.pattern.permute.xlu0 0
    %597 = vperm.xlu0 %596, %v438
    %v598 = vpop.permute.xlu0 %597
    %601 = vset.pattern.permute.xlu0 0
    %602 = vperm.xlu0 %601, %v439
    %v603 = vpop.permute.xlu0 %602
    %606 = vset.pattern.permute.xlu0 0
    %607 = vperm.xlu0 %606, %v440
    %v608 = vpop.permute.xlu0 %607
    %611 = vset.pattern.permute.xlu0 0
    %612 = vperm.xlu0 %611, %v441
    %v613 = vpop.permute.xlu0 %612
    %616 = vset.pattern.permute.xlu0 0
    %617 = vperm.xlu0 %616, %v442
    %v618 = vpop.permute.xlu0 %617
    %621 = vset.pattern.permute.xlu0 0
    %622 = vperm.xlu0 %621, %v443
    %v623 = vpop.permute.xlu0 %622
    %626 = vset.pattern.permute.xlu0 0
    %627 = vperm.xlu0 %626, %v444
    %v628 = vpop.permute.xlu0 %627
    %631 = vset.pattern.permute.xlu0 0
    %632 = vperm.xlu0 %631, %v445
    %v633 = vpop.permute.xlu0 %632
    %636 = vset.pattern.permute.xlu0 0
    %637 = vperm.xlu0 %636, %v446
    %v638 = vpop.permute.xlu0 %637
    %641 = vset.pattern.permute.xlu0 0
    %642 = vperm.xlu0 %641, %v447
    %v643 = vpop.permute.xlu0 %642
    %646 = vset.pattern.permute.xlu0 0
    %647 = vperm.xlu0 %646, %v448
    %v648 = vpop.permute.xlu0 %647
    %651 = vset.pattern.permute.xlu0 0
    %652 = vperm.xlu0 %651, %v449
    %v653 = vpop.permute.xlu0 %652
    %656 = vset.pattern.permute.xlu0 0
    %657 = vperm.xlu0 %656, %v450
    %v658 = vpop.permute.xlu0 %657
    %661 = vset.pattern.permute.xlu0 0
    %662 = vperm.xlu0 %661, %v451
    %v663 = vpop.permute.xlu0 %662
    %666 = vset.pattern.permute.xlu0 0
    %667 = vperm.xlu0 %666, %v452
    %v668 = vpop.permute.xlu0 %667
    %671 = vset.pattern.permute.xlu0 0
    %672 = vperm.xlu0 %671, %v453
    %v673 = vpop.permute.xlu0 %672
    %676 = vset.pattern.permute.xlu0 0
    %677 = vperm.xlu0 %676, %v454
    %v678 = vpop.permute.xlu0 %677
    %681 = vset.pattern.permute.xlu0 0
    %682 = vperm.xlu0 %681, %v455
    %v683 = vpop.permute.xlu0 %682
    %686 = vset.pattern.permute.xlu0 0
    %687 = vperm.xlu0 %686, %v456
    %v688 = vpop.permute.xlu0 %687
    %691 = vset.pattern.permute.xlu0 0
    %692 = vperm.xlu0 %691, %v457
    %v693 = vpop.permute.xlu0 %692
    %696 = vset.pattern.permute.xlu0 0
    %697 = vperm.xlu0 %696, %v458
    %v698 = vpop.permute.xlu0 %697
    %701 = vset.pattern.permute.xlu0 0
    %702 = vperm.xlu0 %701, %v459
    %v703 = vpop.permute.xlu0 %702
    %706 = vset.pattern.permute.xlu0 0
    %707 = vperm.xlu0 %706, %v460
    %v708 = vpop.permute.xlu0 %707
    %711 = vset.pattern.permute.xlu0 0
    %712 = vperm.xlu0 %711, %v461
    %v713 = vpop.permute.xlu0 %712
    %716 = vset.pattern.permute.xlu0 0
    %717 = vperm.xlu0 %716, %v462
    %v718 = vpop.permute.xlu0 %717
    %721 = vset.pattern.permute.xlu0 0
    %722 = vperm.xlu0 %721, %v463
    %v723 = vpop.permute.xlu0 %722
    %726 = vset.pattern.permute.xlu0 0
    %727 = vperm.xlu0 %726, %v464
    %v728 = vpop.permute.xlu0 %727
    %731 = vset.pattern.permute.xlu0 0
    %732 = vperm.xlu0 %731, %v465
    %v733 = vpop.permute.xlu0 %732
    %736 = vset.pattern.permute.xlu0 0
    %737 = vperm.xlu0 %736, %v466
    %v738 = vpop.permute.xlu0 %737
    %741 = vset.pattern.permute.xlu0 0
    %742 = vperm.xlu0 %741, %v467
    %v743 = vpop.permute.xlu0 %742
    %746 = vset.pattern.permute.xlu0 0
    %747 = vperm.xlu0 %746, %v468
    %v748 = vpop.permute.xlu0 %747
    %751 = vset.pattern.permute.xlu0 0
    %752 = vperm.xlu0 %751, %v469
    %v753 = vpop.permute.xlu0 %752
    %756 = vset.pattern.permute.xlu0 0
    %757 = vperm.xlu0 %756, %v470
    %v758 = vpop.permute.xlu0 %757
    %761 = vset.pattern.permute.xlu0 0
    %762 = vperm.xlu0 %761, %v471
    %v763 = vpop.permute.xlu0 %762
    %766 = vset.pattern.permute.xlu0 0
    %767 = vperm.xlu0 %766, %v472
    %v768 = vpop.permute.xlu0 %767
    %771 = vset.pattern.permute.xlu0 0
    %772 = vperm.xlu0 %771, %v473
    %v773 = vpop.permute.xlu0 %772
    %776 = vset.pattern.permute.xlu0 0
    %777 = vperm.xlu0 %776, %v474
    %v778 = vpop.permute.xlu0 %777
    %781 = vset.pattern.permute.xlu0 0
    %782 = vperm.xlu0 %781, %v475
    %v783 = vpop.permute.xlu0 %782
    %786 = vset.pattern.permute.xlu0 0
    %787 = vperm.xlu0 %786, %v476
    %v788 = vpop.permute.xlu0 %787
    %791 = vset.pattern.permute.xlu0 0
    %792 = vperm.xlu0 %791, %v477
    %v793 = vpop.permute.xlu0 %792
    %796 = vset.pattern.permute.xlu0 0
    %797 = vperm.xlu0 %796, %v478
    %v798 = vpop.permute.xlu0 %797
    %v801 = vlaneseq
    %v802 = vshrl.u32 %v801, 7
    %v803 = vsub.s32 0, %v802
    %v804 = vrot.slane %v479, %v803
    %v805 = vlaneseq
    %v806 = vshrl.u32 %v805, 7
    %v807 = vsub.s32 1, %v806
    %v808 = vrot.slane %v479, %v807
    %v809 = vlaneseq
    %v810 = vshrl.u32 %v809, 7
    %v811 = vsub.s32 2, %v810
    %v812 = vrot.slane %v479, %v811
    %v813 = vlaneseq
    %v814 = vshrl.u32 %v813, 7
    %v815 = vsub.s32 3, %v814
    %v816 = vrot.slane %v479, %v815
    %v821 = vsub.f32 %v483, %v804
    %v822 = vsub.f32 %v483, %v808
    %v823 = vsub.f32 %v483, %v812
    %v824 = vsub.f32 %v483, %v816
    %v825 = vsub.f32 %v488, %v804
    %v826 = vsub.f32 %v488, %v808
    %v827 = vsub.f32 %v488, %v812
    %v828 = vsub.f32 %v488, %v816
    %v829 = vsub.f32 %v493, %v804
    %v830 = vsub.f32 %v493, %v808
    %v831 = vsub.f32 %v493, %v812
    %v832 = vsub.f32 %v493, %v816
    %v833 = vsub.f32 %v498, %v804
    %v834 = vsub.f32 %v498, %v808
    %v835 = vsub.f32 %v498, %v812
    %v836 = vsub.f32 %v498, %v816
    %v837 = vsub.f32 %v503, %v804
    %v838 = vsub.f32 %v503, %v808
    %v839 = vsub.f32 %v503, %v812
    %v840 = vsub.f32 %v503, %v816
    %v841 = vsub.f32 %v508, %v804
    %v842 = vsub.f32 %v508, %v808
    %v843 = vsub.f32 %v508, %v812
    %v844 = vsub.f32 %v508, %v816
    %v845 = vsub.f32 %v513, %v804
    %v846 = vsub.f32 %v513, %v808
    %v847 = vsub.f32 %v513, %v812
    %v848 = vsub.f32 %v513, %v816
    %v849 = vsub.f32 %v518, %v804
    %v850 = vsub.f32 %v518, %v808
    %v851 = vsub.f32 %v518, %v812
    %v852 = vsub.f32 %v518, %v816
    %v853 = vsub.f32 %v523, %v804
    %v854 = vsub.f32 %v523, %v808
    %v855 = vsub.f32 %v523, %v812
    %v856 = vsub.f32 %v523, %v816
    %v857 = vsub.f32 %v528, %v804
    %v858 = vsub.f32 %v528, %v808
    %v859 = vsub.f32 %v528, %v812
    %v860 = vsub.f32 %v528, %v816
    %v861 = vsub.f32 %v533, %v804
    %v862 = vsub.f32 %v533, %v808
    %v863 = vsub.f32 %v533, %v812
    %v864 = vsub.f32 %v533, %v816
    %v865 = vsub.f32 %v538, %v804
    %v866 = vsub.f32 %v538, %v808
    %v867 = vsub.f32 %v538, %v812
    %v868 = vsub.f32 %v538, %v816
    %v869 = vsub.f32 %v543, %v804
    %v870 = vsub.f32 %v543, %v808
    %v871 = vsub.f32 %v543, %v812
    %v872 = vsub.f32 %v543, %v816
    %v873 = vsub.f32 %v548, %v804
    %v874 = vsub.f32 %v548, %v808
    %v875 = vsub.f32 %v548, %v812
    %v876 = vsub.f32 %v548, %v816
    %v877 = vsub.f32 %v553, %v804
    %v878 = vsub.f32 %v553, %v808
    %v879 = vsub.f32 %v553, %v812
    %v880 = vsub.f32 %v553, %v816
    %v881 = vsub.f32 %v558, %v804
    %v882 = vsub.f32 %v558, %v808
    %v883 = vsub.f32 %v558, %v812
    %v884 = vsub.f32 %v558, %v816
    %v885 = vsub.f32 %v563, %v804
    %v886 = vsub.f32 %v563, %v808
    %v887 = vsub.f32 %v563, %v812
    %v888 = vsub.f32 %v563, %v816
    %v889 = vsub.f32 %v568, %v804
    %v890 = vsub.f32 %v568, %v808
    %v891 = vsub.f32 %v568, %v812
    %v892 = vsub.f32 %v568, %v816
    %v893 = vsub.f32 %v573, %v804
    %v894 = vsub.f32 %v573, %v808
    %v895 = vsub.f32 %v573, %v812
    %v896 = vsub.f32 %v573, %v816
    %v897 = vsub.f32 %v578, %v804
    %v898 = vsub.f32 %v578, %v808
    %v899 = vsub.f32 %v578, %v812
    %v900 = vsub.f32 %v578, %v816
    %v901 = vsub.f32 %v583, %v804
    %v902 = vsub.f32 %v583, %v808
    %v903 = vsub.f32 %v583, %v812
    %v904 = vsub.f32 %v583, %v816
    %v905 = vsub.f32 %v588, %v804
    %v906 = vsub.f32 %v588, %v808
    %v907 = vsub.f32 %v588, %v812
    %v908 = vsub.f32 %v588, %v816
    %v909 = vsub.f32 %v593, %v804
    %v910 = vsub.f32 %v593, %v808
    %v911 = vsub.f32 %v593, %v812
    %v912 = vsub.f32 %v593, %v816
    %v913 = vsub.f32 %v598, %v804
    %v914 = vsub.f32 %v598, %v808
    %v915 = vsub.f32 %v598, %v812
    %v916 = vsub.f32 %v598, %v816
    %v917 = vsub.f32 %v603, %v804
    %v918 = vsub.f32 %v603, %v808
    %v919 = vsub.f32 %v603, %v812
    %v920 = vsub.f32 %v603, %v816
    %v921 = vsub.f32 %v608, %v804
    %v922 = vsub.f32 %v608, %v808
    %v923 = vsub.f32 %v608, %v812
    %v924 = vsub.f32 %v608, %v816
    %v925 = vsub.f32 %v613, %v804
    %v926 = vsub.f32 %v613, %v808
    %v927 = vsub.f32 %v613, %v812
    %v928 = vsub.f32 %v613, %v816
    %v929 = vsub.f32 %v618, %v804
    %v930 = vsub.f32 %v618, %v808
    %v931 = vsub.f32 %v618, %v812
    %v932 = vsub.f32 %v618, %v816
    %v933 = vsub.f32 %v623, %v804
    %v934 = vsub.f32 %v623, %v808
    %v935 = vsub.f32 %v623, %v812
    %v936 = vsub.f32 %v623, %v816
    %v937 = vsub.f32 %v628, %v804
    %v938 = vsub.f32 %v628, %v808
    %v939 = vsub.f32 %v628, %v812
    %v940 = vsub.f32 %v628, %v816
    %v941 = vsub.f32 %v633, %v804
    %v942 = vsub.f32 %v633, %v808
    %v943 = vsub.f32 %v633, %v812
    %v944 = vsub.f32 %v633, %v816
    %v945 = vsub.f32 %v638, %v804
    %v946 = vsub.f32 %v638, %v808
    %v947 = vsub.f32 %v638, %v812
    %v948 = vsub.f32 %v638, %v816
    %v949 = vsub.f32 %v643, %v804
    %v950 = vsub.f32 %v643, %v808
    %v951 = vsub.f32 %v643, %v812
    %v952 = vsub.f32 %v643, %v816
    %v953 = vsub.f32 %v648, %v804
    %v954 = vsub.f32 %v648, %v808
    %v955 = vsub.f32 %v648, %v812
    %v956 = vsub.f32 %v648, %v816
    %v957 = vsub.f32 %v653, %v804
    %v958 = vsub.f32 %v653, %v808
    %v959 = vsub.f32 %v653, %v812
    %v960 = vsub.f32 %v653, %v816
    %v961 = vsub.f32 %v658, %v804
    %v962 = vsub.f32 %v658, %v808
    %v963 = vsub.f32 %v658, %v812
    %v964 = vsub.f32 %v658, %v816
    %v965 = vsub.f32 %v663, %v804
    %v966 = vsub.f32 %v663, %v808
    %v967 = vsub.f32 %v663, %v812
    %v968 = vsub.f32 %v663, %v816
    %v969 = vsub.f32 %v668, %v804
    %v970 = vsub.f32 %v668, %v808
    %v971 = vsub.f32 %v668, %v812
    %v972 = vsub.f32 %v668, %v816
    %v973 = vsub.f32 %v673, %v804
    %v974 = vsub.f32 %v673, %v808
    %v975 = vsub.f32 %v673, %v812
    %v976 = vsub.f32 %v673, %v816
    %v977 = vsub.f32 %v678, %v804
    %v978 = vsub.f32 %v678, %v808
    %v979 = vsub.f32 %v678, %v812
    %v980 = vsub.f32 %v678, %v816
    %v981 = vsub.f32 %v683, %v804
    %v982 = vsub.f32 %v683, %v808
    %v983 = vsub.f32 %v683, %v812
    %v984 = vsub.f32 %v683, %v816
    %v985 = vsub.f32 %v688, %v804
    %v986 = vsub.f32 %v688, %v808
    %v987 = vsub.f32 %v688, %v812
    %v988 = vsub.f32 %v688, %v816
    %v989 = vsub.f32 %v693, %v804
    %v990 = vsub.f32 %v693, %v808
    %v991 = vsub.f32 %v693, %v812
    %v992 = vsub.f32 %v693, %v816
    %v993 = vsub.f32 %v698, %v804
    %v994 = vsub.f32 %v698, %v808
    %v995 = vsub.f32 %v698, %v812
    %v996 = vsub.f32 %v698, %v816
    %v997 = vsub.f32 %v703, %v804
    %v998 = vsub.f32 %v703, %v808
    %v999 = vsub.f32 %v703, %v812
    %v1000 = vsub.f32 %v703, %v816
    %v1001 = vsub.f32 %v708, %v804
    %v1002 = vsub.f32 %v708, %v808
    %v1003 = vsub.f32 %v708, %v812
    %v1004 = vsub.f32 %v708, %v816
    %v1005 = vsub.f32 %v713, %v804
    %v1006 = vsub.f32 %v713, %v808
    %v1007 = vsub.f32 %v713, %v812
    %v1008 = vsub.f32 %v713, %v816
    %v1009 = vsub.f32 %v718, %v804
    %v1010 = vsub.f32 %v718, %v808
    %v1011 = vsub.f32 %v718, %v812
    %v1012 = vsub.f32 %v718, %v816
    %v1013 = vsub.f32 %v723, %v804
    %v1014 = vsub.f32 %v723, %v808
    %v1015 = vsub.f32 %v723, %v812
    %v1016 = vsub.f32 %v723, %v816
    %v1017 = vsub.f32 %v728, %v804
    %v1018 = vsub.f32 %v728, %v808
    %v1019 = vsub.f32 %v728, %v812
    %v1020 = vsub.f32 %v728, %v816
    %v1021 = vsub.f32 %v733, %v804
    %v1022 = vsub.f32 %v733, %v808
    %v1023 = vsub.f32 %v733, %v812
    %v1024 = vsub.f32 %v733, %v816
    %v1025 = vsub.f32 %v738, %v804
    %v1026 = vsub.f32 %v738, %v808
    %v1027 = vsub.f32 %v738, %v812
    %v1028 = vsub.f32 %v738, %v816
    %v1029 = vsub.f32 %v743, %v804
    %v1030 = vsub.f32 %v743, %v808
    %v1031 = vsub.f32 %v743, %v812
    %v1032 = vsub.f32 %v743, %v816
    %v1033 = vsub.f32 %v748, %v804
    %v1034 = vsub.f32 %v748, %v808
    %v1035 = vsub.f32 %v748, %v812
    %v1036 = vsub.f32 %v748, %v816
    %v1037 = vsub.f32 %v753, %v804
    %v1038 = vsub.f32 %v753, %v808
    %v1039 = vsub.f32 %v753, %v812
    %v1040 = vsub.f32 %v753, %v816
    %v1041 = vsub.f32 %v758, %v804
    %v1042 = vsub.f32 %v758, %v808
    %v1043 = vsub.f32 %v758, %v812
    %v1044 = vsub.f32 %v758, %v816
    %v1045 = vsub.f32 %v763, %v804
    %v1046 = vsub.f32 %v763, %v808
    %v1047 = vsub.f32 %v763, %v812
    %v1048 = vsub.f32 %v763, %v816
    %v1049 = vsub.f32 %v768, %v804
    %v1050 = vsub.f32 %v768, %v808
    %v1051 = vsub.f32 %v768, %v812
    %v1052 = vsub.f32 %v768, %v816
    %v1053 = vsub.f32 %v773, %v804
    %v1054 = vsub.f32 %v773, %v808
    %v1055 = vsub.f32 %v773, %v812
    %v1056 = vsub.f32 %v773, %v816
    %v1057 = vsub.f32 %v778, %v804
    %v1058 = vsub.f32 %v778, %v808
    %v1059 = vsub.f32 %v778, %v812
    %v1060 = vsub.f32 %v778, %v816
    %v1061 = vsub.f32 %v783, %v804
    %v1062 = vsub.f32 %v783, %v808
    %v1063 = vsub.f32 %v783, %v812
    %v1064 = vsub.f32 %v783, %v816
    %v1065 = vsub.f32 %v788, %v804
    %v1066 = vsub.f32 %v788, %v808
    %v1067 = vsub.f32 %v788, %v812
    %v1068 = vsub.f32 %v788, %v816
    %v1069 = vsub.f32 %v793, %v804
    %v1070 = vsub.f32 %v793, %v808
    %v1071 = vsub.f32 %v793, %v812
    %v1072 = vsub.f32 %v793, %v816
    %v1073 = vsub.f32 %v798, %v804
    %v1074 = vsub.f32 %v798, %v808
    %v1075 = vsub.f32 %v798, %v812
    %v1076 = vsub.f32 %v798, %v816
    %vm1077 = vcmp.gt.f32.partialorder %v821, 0.0
    %vm1078 = vcmp.gt.f32.partialorder %v822, 0.0
    %vm1079 = vcmp.gt.f32.partialorder %v823, 0.0
    %vm1080 = vcmp.gt.f32.partialorder %v824, 0.0
    %vm1081 = vcmp.gt.f32.partialorder %v825, 0.0
    %vm1082 = vcmp.gt.f32.partialorder %v826, 0.0
    %vm1083 = vcmp.gt.f32.partialorder %v827, 0.0
    %vm1084 = vcmp.gt.f32.partialorder %v828, 0.0
    %vm1085 = vcmp.gt.f32.partialorder %v829, 0.0
    %vm1086 = vcmp.gt.f32.partialorder %v830, 0.0
    %vm1087 = vcmp.gt.f32.partialorder %v831, 0.0
    %vm1088 = vcmp.gt.f32.partialorder %v832, 0.0
    %vm1089 = vcmp.gt.f32.partialorder %v833, 0.0
    %vm1090 = vcmp.gt.f32.partialorder %v834, 0.0
    %vm1091 = vcmp.gt.f32.partialorder %v835, 0.0
    %vm1092 = vcmp.gt.f32.partialorder %v836, 0.0
    %vm1093 = vcmp.gt.f32.partialorder %v837, 0.0
    %vm1094 = vcmp.gt.f32.partialorder %v838, 0.0
    %vm1095 = vcmp.gt.f32.partialorder %v839, 0.0
    %vm1096 = vcmp.gt.f32.partialorder %v840, 0.0
    %vm1097 = vcmp.gt.f32.partialorder %v841, 0.0
    %vm1098 = vcmp.gt.f32.partialorder %v842, 0.0
    %vm1099 = vcmp.gt.f32.partialorder %v843, 0.0
    %vm1100 = vcmp.gt.f32.partialorder %v844, 0.0
    %vm1101 = vcmp.gt.f32.partialorder %v845, 0.0
    %vm1102 = vcmp.gt.f32.partialorder %v846, 0.0
    %vm1103 = vcmp.gt.f32.partialorder %v847, 0.0
    %vm1104 = vcmp.gt.f32.partialorder %v848, 0.0
    %vm1105 = vcmp.gt.f32.partialorder %v849, 0.0
    %vm1106 = vcmp.gt.f32.partialorder %v850, 0.0
    %vm1107 = vcmp.gt.f32.partialorder %v851, 0.0
    %vm1108 = vcmp.gt.f32.partialorder %v852, 0.0
    %vm1109 = vcmp.gt.f32.partialorder %v853, 0.0
    %vm1110 = vcmp.gt.f32.partialorder %v854, 0.0
    %vm1111 = vcmp.gt.f32.partialorder %v855, 0.0
    %vm1112 = vcmp.gt.f32.partialorder %v856, 0.0
    %vm1113 = vcmp.gt.f32.partialorder %v857, 0.0
    %vm1114 = vcmp.gt.f32.partialorder %v858, 0.0
    %vm1115 = vcmp.gt.f32.partialorder %v859, 0.0
    %vm1116 = vcmp.gt.f32.partialorder %v860, 0.0
    %vm1117 = vcmp.gt.f32.partialorder %v861, 0.0
    %vm1118 = vcmp.gt.f32.partialorder %v862, 0.0
    %vm1119 = vcmp.gt.f32.partialorder %v863, 0.0
    %vm1120 = vcmp.gt.f32.partialorder %v864, 0.0
    %vm1121 = vcmp.gt.f32.partialorder %v865, 0.0
    %vm1122 = vcmp.gt.f32.partialorder %v866, 0.0
    %vm1123 = vcmp.gt.f32.partialorder %v867, 0.0
    %vm1124 = vcmp.gt.f32.partialorder %v868, 0.0
    %vm1125 = vcmp.gt.f32.partialorder %v869, 0.0
    %vm1126 = vcmp.gt.f32.partialorder %v870, 0.0
    %vm1127 = vcmp.gt.f32.partialorder %v871, 0.0
    %vm1128 = vcmp.gt.f32.partialorder %v872, 0.0
    %vm1129 = vcmp.gt.f32.partialorder %v873, 0.0
    %vm1130 = vcmp.gt.f32.partialorder %v874, 0.0
    %vm1131 = vcmp.gt.f32.partialorder %v875, 0.0
    %vm1132 = vcmp.gt.f32.partialorder %v876, 0.0
    %vm1133 = vcmp.gt.f32.partialorder %v877, 0.0
    %vm1134 = vcmp.gt.f32.partialorder %v878, 0.0
    %vm1135 = vcmp.gt.f32.partialorder %v879, 0.0
    %vm1136 = vcmp.gt.f32.partialorder %v880, 0.0
    %vm1137 = vcmp.gt.f32.partialorder %v881, 0.0
    %vm1138 = vcmp.gt.f32.partialorder %v882, 0.0
    %vm1139 = vcmp.gt.f32.partialorder %v883, 0.0
    %vm1140 = vcmp.gt.f32.partialorder %v884, 0.0
    %vm1141 = vcmp.gt.f32.partialorder %v885, 0.0
    %vm1142 = vcmp.gt.f32.partialorder %v886, 0.0
    %vm1143 = vcmp.gt.f32.partialorder %v887, 0.0
    %vm1144 = vcmp.gt.f32.partialorder %v888, 0.0
    %vm1145 = vcmp.gt.f32.partialorder %v889, 0.0
    %vm1146 = vcmp.gt.f32.partialorder %v890, 0.0
    %vm1147 = vcmp.gt.f32.partialorder %v891, 0.0
    %vm1148 = vcmp.gt.f32.partialorder %v892, 0.0
    %vm1149 = vcmp.gt.f32.partialorder %v893, 0.0
    %vm1150 = vcmp.gt.f32.partialorder %v894, 0.0
    %vm1151 = vcmp.gt.f32.partialorder %v895, 0.0
    %vm1152 = vcmp.gt.f32.partialorder %v896, 0.0
    %vm1153 = vcmp.gt.f32.partialorder %v897, 0.0
    %vm1154 = vcmp.gt.f32.partialorder %v898, 0.0
    %vm1155 = vcmp.gt.f32.partialorder %v899, 0.0
    %vm1156 = vcmp.gt.f32.partialorder %v900, 0.0
    %vm1157 = vcmp.gt.f32.partialorder %v901, 0.0
    %vm1158 = vcmp.gt.f32.partialorder %v902, 0.0
    %vm1159 = vcmp.gt.f32.partialorder %v903, 0.0
    %vm1160 = vcmp.gt.f32.partialorder %v904, 0.0
    %vm1161 = vcmp.gt.f32.partialorder %v905, 0.0
    %vm1162 = vcmp.gt.f32.partialorder %v906, 0.0
    %vm1163 = vcmp.gt.f32.partialorder %v907, 0.0
    %vm1164 = vcmp.gt.f32.partialorder %v908, 0.0
    %vm1165 = vcmp.gt.f32.partialorder %v909, 0.0
    %vm1166 = vcmp.gt.f32.partialorder %v910, 0.0
    %vm1167 = vcmp.gt.f32.partialorder %v911, 0.0
    %vm1168 = vcmp.gt.f32.partialorder %v912, 0.0
    %vm1169 = vcmp.gt.f32.partialorder %v913, 0.0
    %vm1170 = vcmp.gt.f32.partialorder %v914, 0.0
    %vm1171 = vcmp.gt.f32.partialorder %v915, 0.0
    %vm1172 = vcmp.gt.f32.partialorder %v916, 0.0
    %vm1173 = vcmp.gt.f32.partialorder %v917, 0.0
    %vm1174 = vcmp.gt.f32.partialorder %v918, 0.0
    %vm1175 = vcmp.gt.f32.partialorder %v919, 0.0
    %vm1176 = vcmp.gt.f32.partialorder %v920, 0.0
    %vm1177 = vcmp.gt.f32.partialorder %v921, 0.0
    %vm1178 = vcmp.gt.f32.partialorder %v922, 0.0
    %vm1179 = vcmp.gt.f32.partialorder %v923, 0.0
    %vm1180 = vcmp.gt.f32.partialorder %v924, 0.0
    %vm1181 = vcmp.gt.f32.partialorder %v925, 0.0
    %vm1182 = vcmp.gt.f32.partialorder %v926, 0.0
    %vm1183 = vcmp.gt.f32.partialorder %v927, 0.0
    %vm1184 = vcmp.gt.f32.partialorder %v928, 0.0
    %vm1185 = vcmp.gt.f32.partialorder %v929, 0.0
    %vm1186 = vcmp.gt.f32.partialorder %v930, 0.0
    %vm1187 = vcmp.gt.f32.partialorder %v931, 0.0
    %vm1188 = vcmp.gt.f32.partialorder %v932, 0.0
    %vm1189 = vcmp.gt.f32.partialorder %v933, 0.0
    %vm1190 = vcmp.gt.f32.partialorder %v934, 0.0
    %vm1191 = vcmp.gt.f32.partialorder %v935, 0.0
    %vm1192 = vcmp.gt.f32.partialorder %v936, 0.0
    %vm1193 = vcmp.gt.f32.partialorder %v937, 0.0
    %vm1194 = vcmp.gt.f32.partialorder %v938, 0.0
    %vm1195 = vcmp.gt.f32.partialorder %v939, 0.0
    %vm1196 = vcmp.gt.f32.partialorder %v940, 0.0
    %vm1197 = vcmp.gt.f32.partialorder %v941, 0.0
    %vm1198 = vcmp.gt.f32.partialorder %v942, 0.0
    %vm1199 = vcmp.gt.f32.partialorder %v943, 0.0
    %vm1200 = vcmp.gt.f32.partialorder %v944, 0.0
    %vm1201 = vcmp.gt.f32.partialorder %v945, 0.0
    %vm1202 = vcmp.gt.f32.partialorder %v946, 0.0
    %vm1203 = vcmp.gt.f32.partialorder %v947, 0.0
    %vm1204 = vcmp.gt.f32.partialorder %v948, 0.0
    %vm1205 = vcmp.gt.f32.partialorder %v949, 0.0
    %vm1206 = vcmp.gt.f32.partialorder %v950, 0.0
    %vm1207 = vcmp.gt.f32.partialorder %v951, 0.0
    %vm1208 = vcmp.gt.f32.partialorder %v952, 0.0
    %vm1209 = vcmp.gt.f32.partialorder %v953, 0.0
    %vm1210 = vcmp.gt.f32.partialorder %v954, 0.0
    %vm1211 = vcmp.gt.f32.partialorder %v955, 0.0
    %vm1212 = vcmp.gt.f32.partialorder %v956, 0.0
    %vm1213 = vcmp.gt.f32.partialorder %v957, 0.0
    %vm1214 = vcmp.gt.f32.partialorder %v958, 0.0
    %vm1215 = vcmp.gt.f32.partialorder %v959, 0.0
    %vm1216 = vcmp.gt.f32.partialorder %v960, 0.0
    %vm1217 = vcmp.gt.f32.partialorder %v961, 0.0
    %vm1218 = vcmp.gt.f32.partialorder %v962, 0.0
    %vm1219 = vcmp.gt.f32.partialorder %v963, 0.0
    %vm1220 = vcmp.gt.f32.partialorder %v964, 0.0
    %vm1221 = vcmp.gt.f32.partialorder %v965, 0.0
    %vm1222 = vcmp.gt.f32.partialorder %v966, 0.0
    %vm1223 = vcmp.gt.f32.partialorder %v967, 0.0
    %vm1224 = vcmp.gt.f32.partialorder %v968, 0.0
    %vm1225 = vcmp.gt.f32.partialorder %v969, 0.0
    %vm1226 = vcmp.gt.f32.partialorder %v970, 0.0
    %vm1227 = vcmp.gt.f32.partialorder %v971, 0.0
    %vm1228 = vcmp.gt.f32.partialorder %v972, 0.0
    %vm1229 = vcmp.gt.f32.partialorder %v973, 0.0
    %vm1230 = vcmp.gt.f32.partialorder %v974, 0.0
    %vm1231 = vcmp.gt.f32.partialorder %v975, 0.0
    %vm1232 = vcmp.gt.f32.partialorder %v976, 0.0
    %vm1233 = vcmp.gt.f32.partialorder %v977, 0.0
    %vm1234 = vcmp.gt.f32.partialorder %v978, 0.0
    %vm1235 = vcmp.gt.f32.partialorder %v979, 0.0
    %vm1236 = vcmp.gt.f32.partialorder %v980, 0.0
    %vm1237 = vcmp.gt.f32.partialorder %v981, 0.0
    %vm1238 = vcmp.gt.f32.partialorder %v982, 0.0
    %vm1239 = vcmp.gt.f32.partialorder %v983, 0.0
    %vm1240 = vcmp.gt.f32.partialorder %v984, 0.0
    %vm1241 = vcmp.gt.f32.partialorder %v985, 0.0
    %vm1242 = vcmp.gt.f32.partialorder %v986, 0.0
    %vm1243 = vcmp.gt.f32.partialorder %v987, 0.0
    %vm1244 = vcmp.gt.f32.partialorder %v988, 0.0
    %vm1245 = vcmp.gt.f32.partialorder %v989, 0.0
    %vm1246 = vcmp.gt.f32.partialorder %v990, 0.0
    %vm1247 = vcmp.gt.f32.partialorder %v991, 0.0
    %vm1248 = vcmp.gt.f32.partialorder %v992, 0.0
    %vm1249 = vcmp.gt.f32.partialorder %v993, 0.0
    %vm1250 = vcmp.gt.f32.partialorder %v994, 0.0
    %vm1251 = vcmp.gt.f32.partialorder %v995, 0.0
    %vm1252 = vcmp.gt.f32.partialorder %v996, 0.0
    %vm1253 = vcmp.gt.f32.partialorder %v997, 0.0
    %vm1254 = vcmp.gt.f32.partialorder %v998, 0.0
    %vm1255 = vcmp.gt.f32.partialorder %v999, 0.0
    %vm1256 = vcmp.gt.f32.partialorder %v1000, 0.0
    %vm1257 = vcmp.gt.f32.partialorder %v1001, 0.0
    %vm1258 = vcmp.gt.f32.partialorder %v1002, 0.0
    %vm1259 = vcmp.gt.f32.partialorder %v1003, 0.0
    %vm1260 = vcmp.gt.f32.partialorder %v1004, 0.0
    %vm1261 = vcmp.gt.f32.partialorder %v1005, 0.0
    %vm1262 = vcmp.gt.f32.partialorder %v1006, 0.0
    %vm1263 = vcmp.gt.f32.partialorder %v1007, 0.0
    %vm1264 = vcmp.gt.f32.partialorder %v1008, 0.0
    %vm1265 = vcmp.gt.f32.partialorder %v1009, 0.0
    %vm1266 = vcmp.gt.f32.partialorder %v1010, 0.0
    %vm1267 = vcmp.gt.f32.partialorder %v1011, 0.0
    %vm1268 = vcmp.gt.f32.partialorder %v1012, 0.0
    %vm1269 = vcmp.gt.f32.partialorder %v1013, 0.0
    %vm1270 = vcmp.gt.f32.partialorder %v1014, 0.0
    %vm1271 = vcmp.gt.f32.partialorder %v1015, 0.0
    %vm1272 = vcmp.gt.f32.partialorder %v1016, 0.0
    %vm1273 = vcmp.gt.f32.partialorder %v1017, 0.0
    %vm1274 = vcmp.gt.f32.partialorder %v1018, 0.0
    %vm1275 = vcmp.gt.f32.partialorder %v1019, 0.0
    %vm1276 = vcmp.gt.f32.partialorder %v1020, 0.0
    %vm1277 = vcmp.gt.f32.partialorder %v1021, 0.0
    %vm1278 = vcmp.gt.f32.partialorder %v1022, 0.0
    %vm1279 = vcmp.gt.f32.partialorder %v1023, 0.0
    %vm1280 = vcmp.gt.f32.partialorder %v1024, 0.0
    %vm1281 = vcmp.gt.f32.partialorder %v1025, 0.0
    %vm1282 = vcmp.gt.f32.partialorder %v1026, 0.0
    %vm1283 = vcmp.gt.f32.partialorder %v1027, 0.0
    %vm1284 = vcmp.gt.f32.partialorder %v1028, 0.0
    %vm1285 = vcmp.gt.f32.partialorder %v1029, 0.0
    %vm1286 = vcmp.gt.f32.partialorder %v1030, 0.0
    %vm1287 = vcmp.gt.f32.partialorder %v1031, 0.0
    %vm1288 = vcmp.gt.f32.partialorder %v1032, 0.0
    %vm1289 = vcmp.gt.f32.partialorder %v1033, 0.0
    %vm1290 = vcmp.gt.f32.partialorder %v1034, 0.0
    %vm1291 = vcmp.gt.f32.partialorder %v1035, 0.0
    %vm1292 = vcmp.gt.f32.partialorder %v1036, 0.0
    %vm1293 = vcmp.gt.f32.partialorder %v1037, 0.0
    %vm1294 = vcmp.gt.f32.partialorder %v1038, 0.0
    %vm1295 = vcmp.gt.f32.partialorder %v1039, 0.0
    %vm1296 = vcmp.gt.f32.partialorder %v1040, 0.0
    %vm1297 = vcmp.gt.f32.partialorder %v1041, 0.0
    %vm1298 = vcmp.gt.f32.partialorder %v1042, 0.0
    %vm1299 = vcmp.gt.f32.partialorder %v1043, 0.0
    %vm1300 = vcmp.gt.f32.partialorder %v1044, 0.0
    %vm1301 = vcmp.gt.f32.partialorder %v1045, 0.0
    %vm1302 = vcmp.gt.f32.partialorder %v1046, 0.0
    %vm1303 = vcmp.gt.f32.partialorder %v1047, 0.0
    %vm1304 = vcmp.gt.f32.partialorder %v1048, 0.0
    %vm1305 = vcmp.gt.f32.partialorder %v1049, 0.0
    %vm1306 = vcmp.gt.f32.partialorder %v1050, 0.0
    %vm1307 = vcmp.gt.f32.partialorder %v1051, 0.0
    %vm1308 = vcmp.gt.f32.partialorder %v1052, 0.0
    %vm1309 = vcmp.gt.f32.partialorder %v1053, 0.0
    %vm1310 = vcmp.gt.f32.partialorder %v1054, 0.0
    %vm1311 = vcmp.gt.f32.partialorder %v1055, 0.0
    %vm1312 = vcmp.gt.f32.partialorder %v1056, 0.0
    %vm1313 = vcmp.gt.f32.partialorder %v1057, 0.0
    %vm1314 = vcmp.gt.f32.partialorder %v1058, 0.0
    %vm1315 = vcmp.gt.f32.partialorder %v1059, 0.0
    %vm1316 = vcmp.gt.f32.partialorder %v1060, 0.0
    %vm1317 = vcmp.gt.f32.partialorder %v1061, 0.0
    %vm1318 = vcmp.gt.f32.partialorder %v1062, 0.0
    %vm1319 = vcmp.gt.f32.partialorder %v1063, 0.0
    %vm1320 = vcmp.gt.f32.partialorder %v1064, 0.0
    %vm1321 = vcmp.gt.f32.partialorder %v1065, 0.0
    %vm1322 = vcmp.gt.f32.partialorder %v1066, 0.0
    %vm1323 = vcmp.gt.f32.partialorder %v1067, 0.0
    %vm1324 = vcmp.gt.f32.partialorder %v1068, 0.0
    %vm1325 = vcmp.gt.f32.partialorder %v1069, 0.0
    %vm1326 = vcmp.gt.f32.partialorder %v1070, 0.0
    %vm1327 = vcmp.gt.f32.partialorder %v1071, 0.0
    %vm1328 = vcmp.gt.f32.partialorder %v1072, 0.0
    %vm1329 = vcmp.gt.f32.partialorder %v1073, 0.0
    %vm1330 = vcmp.gt.f32.partialorder %v1074, 0.0
    %vm1331 = vcmp.gt.f32.partialorder %v1075, 0.0
    %vm1332 = vcmp.gt.f32.partialorder %v1076, 0.0
    %v1333 = vld [vmem:[#allocation10] sm:$0xf]
    %v1334 = vld [vmem:[#allocation3] sm:$0xff]
    %v1335 = vld [vmem:[#allocation3 + $0x8] sm:$0xff]
    %v1336 = vld [vmem:[#allocation3 + $0x10] sm:$0xff]
    %v1337 = vld [vmem:[#allocation3 + $0x18] sm:$0xff]
    %v1338 = vld [vmem:[#allocation3 + $0x20] sm:$0xff]
    %v1339 = vld [vmem:[#allocation3 + $0x28] sm:$0xff]
    %v1340 = vld [vmem:[#allocation3 + $0x30] sm:$0xff]
    %v1341 = vld [vmem:[#allocation3 + $0x38] sm:$0xff]
    %v1342 = vld [vmem:[#allocation3 + $0x40] sm:$0xff]
    %v1343 = vld [vmem:[#allocation3 + $0x48] sm:$0xff]
    %v1344 = vld [vmem:[#allocation3 + $0x50] sm:$0xff]
    %v1345 = vld [vmem:[#allocation3 + $0x58] sm:$0xff]
    %v1346 = vld [vmem:[#allocation3 + $0x60] sm:$0xff]
    %v1347 = vld [vmem:[#allocation3 + $0x68] sm:$0xff]
    %v1348 = vld [vmem:[#allocation3 + $0x70] sm:$0xff]
    %v1349 = vld [vmem:[#allocation3 + $0x78] sm:$0xff]
    %v1350 = vld [vmem:[#allocation3 + $0x80] sm:$0xff]
    %v1351 = vld [vmem:[#allocation3 + $0x88] sm:$0xff]
    %v1352 = vld [vmem:[#allocation3 + $0x90] sm:$0xff]
    %v1353 = vld [vmem:[#allocation3 + $0x98] sm:$0xff]
    %v1354 = vld [vmem:[#allocation3 + $0xa0] sm:$0xff]
    %v1355 = vld [vmem:[#allocation3 + $0xa8] sm:$0xff]
    %v1356 = vld [vmem:[#allocation3 + $0xb0] sm:$0xff]
    %v1357 = vld [vmem:[#allocation3 + $0xb8] sm:$0xff]
    %v1358 = vld [vmem:[#allocation3 + $0xc0] sm:$0xff]
    %v1359 = vld [vmem:[#allocation3 + $0xc8] sm:$0xff]
    %v1360 = vld [vmem:[#allocation3 + $0xd0] sm:$0xff]
    %v1361 = vld [vmem:[#allocation3 + $0xd8] sm:$0xff]
    %v1362 = vld [vmem:[#allocation3 + $0xe0] sm:$0xff]
    %v1363 = vld [vmem:[#allocation3 + $0xe8] sm:$0xff]
    %v1364 = vld [vmem:[#allocation3 + $0xf0] sm:$0xff]
    %v1365 = vld [vmem:[#allocation3 + $0xf8] sm:$0xff]
    %v1366 = vld [vmem:[#allocation3 + $0x100] sm:$0xff]
    %v1367 = vld [vmem:[#allocation3 + $0x108] sm:$0xff]
    %v1368 = vld [vmem:[#allocation3 + $0x110] sm:$0xff]
    %v1369 = vld [vmem:[#allocation3 + $0x118] sm:$0xff]
    %v1370 = vld [vmem:[#allocation3 + $0x120] sm:$0xff]
    %v1371 = vld [vmem:[#allocation3 + $0x128] sm:$0xff]
    %v1372 = vld [vmem:[#allocation3 + $0x130] sm:$0xff]
    %v1373 = vld [vmem:[#allocation3 + $0x138] sm:$0xff]
    %v1374 = vld [vmem:[#allocation3 + $0x140] sm:$0xff]
    %v1375 = vld [vmem:[#allocation3 + $0x148] sm:$0xff]
    %v1376 = vld [vmem:[#allocation3 + $0x150] sm:$0xff]
    %v1377 = vld [vmem:[#allocation3 + $0x158] sm:$0xff]
    %v1378 = vld [vmem:[#allocation3 + $0x160] sm:$0xff]
    %v1379 = vld [vmem:[#allocation3 + $0x168] sm:$0xff]
    %v1380 = vld [vmem:[#allocation3 + $0x170] sm:$0xff]
    %v1381 = vld [vmem:[#allocation3 + $0x178] sm:$0xff]
    %v1382 = vld [vmem:[#allocation3 + $0x180] sm:$0xff]
    %v1383 = vld [vmem:[#allocation3 + $0x188] sm:$0xff]
    %v1384 = vld [vmem:[#allocation3 + $0x190] sm:$0xff]
    %v1385 = vld [vmem:[#allocation3 + $0x198] sm:$0xff]
    %v1386 = vld [vmem:[#allocation3 + $0x1a0] sm:$0xff]
    %v1387 = vld [vmem:[#allocation3 + $0x1a8] sm:$0xff]
    %v1388 = vld [vmem:[#allocation3 + $0x1b0] sm:$0xff]
    %v1389 = vld [vmem:[#allocation3 + $0x1b8] sm:$0xff]
    %v1390 = vld [vmem:[#allocation3 + $0x1c0] sm:$0xff]
    %v1391 = vld [vmem:[#allocation3 + $0x1c8] sm:$0xff]
    %v1392 = vld [vmem:[#allocation3 + $0x1d0] sm:$0xff]
    %v1393 = vld [vmem:[#allocation3 + $0x1d8] sm:$0xff]
    %v1394 = vld [vmem:[#allocation3 + $0x1e0] sm:$0xff]
    %v1395 = vld [vmem:[#allocation3 + $0x1e8] sm:$0xff]
    %v1396 = vld [vmem:[#allocation3 + $0x1f0] sm:$0xff]
    %v1397 = vld [vmem:[#allocation3 + $0x1f8] sm:$0xff]
    %v1399 = vlaneseq
    %v1400 = vshrl.u32 %v1399, 7
    %v1401 = vsub.s32 0, %v1400
    %v1402 = vrot.slane %v1333, %v1401
    %v1403 = vlaneseq
    %v1404 = vshrl.u32 %v1403, 7
    %v1405 = vsub.s32 1, %v1404
    %v1406 = vrot.slane %v1333, %v1405
    %v1407 = vlaneseq
    %v1408 = vshrl.u32 %v1407, 7
    %v1409 = vsub.s32 2, %v1408
    %v1410 = vrot.slane %v1333, %v1409
    %v1411 = vlaneseq
    %v1412 = vshrl.u32 %v1411, 7
    %v1413 = vsub.s32 3, %v1412
    %v1414 = vrot.slane %v1333, %v1413
    %v1419 = vsel %vm1077, 0.0, %v1402
    %v1420 = vsel %vm1078, 0.0, %v1406
    %v1421 = vsel %vm1079, 0.0, %v1410
    %v1422 = vsel %vm1080, 0.0, %v1414
    %v1423 = vsel %vm1081, 0.0, %v1402
    %v1424 = vsel %vm1082, 0.0, %v1406
    %v1425 = vsel %vm1083, 0.0, %v1410
    %v1426 = vsel %vm1084, 0.0, %v1414
    %v1427 = vsel %vm1085, 0.0, %v1402
    %v1428 = vsel %vm1086, 0.0, %v1406
    %v1429 = vsel %vm1087, 0.0, %v1410
    %v1430 = vsel %vm1088, 0.0, %v1414
    %v1431 = vsel %vm1089, 0.0, %v1402
    %v1432 = vsel %vm1090, 0.0, %v1406
    %v1433 = vsel %vm1091, 0.0, %v1410
    %v1434 = vsel %vm1092, 0.0, %v1414
    %v1435 = vsel %vm1093, 0.0, %v1402
    %v1436 = vsel %vm1094, 0.0, %v1406
    %v1437 = vsel %vm1095, 0.0, %v1410
    %v1438 = vsel %vm1096, 0.0, %v1414
    %v1439 = vsel %vm1097, 0.0, %v1402
    %v1440 = vsel %vm1098, 0.0, %v1406
    %v1441 = vsel %vm1099, 0.0, %v1410
    %v1442 = vsel %vm1100, 0.0, %v1414
    %v1443 = vsel %vm1101, 0.0, %v1402
    %v1444 = vsel %vm1102, 0.0, %v1406
    %v1445 = vsel %vm1103, 0.0, %v1410
    %v1446 = vsel %vm1104, 0.0, %v1414
    %v1447 = vsel %vm1105, 0.0, %v1402
    %v1448 = vsel %vm1106, 0.0, %v1406
    %v1449 = vsel %vm1107, 0.0, %v1410
    %v1450 = vsel %vm1108, 0.0, %v1414
    %v1451 = vsel %vm1109, 0.0, %v1402
    %v1452 = vsel %vm1110, 0.0, %v1406
    %v1453 = vsel %vm1111, 0.0, %v1410
    %v1454 = vsel %vm1112, 0.0, %v1414
    %v1455 = vsel %vm1113, 0.0, %v1402
    %v1456 = vsel %vm1114, 0.0, %v1406
    %v1457 = vsel %vm1115, 0.0, %v1410
    %v1458 = vsel %vm1116, 0.0, %v1414
    %v1459 = vsel %vm1117, 0.0, %v1402
    %v1460 = vsel %vm1118, 0.0, %v1406
    %v1461 = vsel %vm1119, 0.0, %v1410
    %v1462 = vsel %vm1120, 0.0, %v1414
    %v1463 = vsel %vm1121, 0.0, %v1402
    %v1464 = vsel %vm1122, 0.0, %v1406
    %v1465 = vsel %vm1123, 0.0, %v1410
    %v1466 = vsel %vm1124, 0.0, %v1414
    %v1467 = vsel %vm1125, 0.0, %v1402
    %v1468 = vsel %vm1126, 0.0, %v1406
    %v1469 = vsel %vm1127, 0.0, %v1410
    %v1470 = vsel %vm1128, 0.0, %v1414
    %v1471 = vsel %vm1129, 0.0, %v1402
    %v1472 = vsel %vm1130, 0.0, %v1406
    %v1473 = vsel %vm1131, 0.0, %v1410
    %v1474 = vsel %vm1132, 0.0, %v1414
    %v1475 = vsel %vm1133, 0.0, %v1402
    %v1476 = vsel %vm1134, 0.0, %v1406
    %v1477 = vsel %vm1135, 0.0, %v1410
    %v1478 = vsel %vm1136, 0.0, %v1414
    %v1479 = vsel %vm1137, 0.0, %v1402
    %v1480 = vsel %vm1138, 0.0, %v1406
    %v1481 = vsel %vm1139, 0.0, %v1410
    %v1482 = vsel %vm1140, 0.0, %v1414
    %v1483 = vsel %vm1141, 0.0, %v1402
    %v1484 = vsel %vm1142, 0.0, %v1406
    %v1485 = vsel %vm1143, 0.0, %v1410
    %v1486 = vsel %vm1144, 0.0, %v1414
    %v1487 = vsel %vm1145, 0.0, %v1402
    %v1488 = vsel %vm1146, 0.0, %v1406
    %v1489 = vsel %vm1147, 0.0, %v1410
    %v1490 = vsel %vm1148, 0.0, %v1414
    %v1491 = vsel %vm1149, 0.0, %v1402
    %v1492 = vsel %vm1150, 0.0, %v1406
    %v1493 = vsel %vm1151, 0.0, %v1410
    %v1494 = vsel %vm1152, 0.0, %v1414
    %v1495 = vsel %vm1153, 0.0, %v1402
    %v1496 = vsel %vm1154, 0.0, %v1406
    %v1497 = vsel %vm1155, 0.0, %v1410
    %v1498 = vsel %vm1156, 0.0, %v1414
    %v1499 = vsel %vm1157, 0.0, %v1402
    %v1500 = vsel %vm1158, 0.0, %v1406
    %v1501 = vsel %vm1159, 0.0, %v1410
    %v1502 = vsel %vm1160, 0.0, %v1414
    %v1503 = vsel %vm1161, 0.0, %v1402
    %v1504 = vsel %vm1162, 0.0, %v1406
    %v1505 = vsel %vm1163, 0.0, %v1410
    %v1506 = vsel %vm1164, 0.0, %v1414
    %v1507 = vsel %vm1165, 0.0, %v1402
    %v1508 = vsel %vm1166, 0.0, %v1406
    %v1509 = vsel %vm1167, 0.0, %v1410
    %v1510 = vsel %vm1168, 0.0, %v1414
    %v1511 = vsel %vm1169, 0.0, %v1402
    %v1512 = vsel %vm1170, 0.0, %v1406
    %v1513 = vsel %vm1171, 0.0, %v1410
    %v1514 = vsel %vm1172, 0.0, %v1414
    %v1515 = vsel %vm1173, 0.0, %v1402
    %v1516 = vsel %vm1174, 0.0, %v1406
    %v1517 = vsel %vm1175, 0.0, %v1410
    %v1518 = vsel %vm1176, 0.0, %v1414
    %v1519 = vsel %vm1177, 0.0, %v1402
    %v1520 = vsel %vm1178, 0.0, %v1406
    %v1521 = vsel %vm1179, 0.0, %v1410
    %v1522 = vsel %vm1180, 0.0, %v1414
    %v1523 = vsel %vm1181, 0.0, %v1402
    %v1524 = vsel %vm1182, 0.0, %v1406
    %v1525 = vsel %vm1183, 0.0, %v1410
    %v1526 = vsel %vm1184, 0.0, %v1414
    %v1527 = vsel %vm1185, 0.0, %v1402
    %v1528 = vsel %vm1186, 0.0, %v1406
    %v1529 = vsel %vm1187, 0.0, %v1410
    %v1530 = vsel %vm1188, 0.0, %v1414
    %v1531 = vsel %vm1189, 0.0, %v1402
    %v1532 = vsel %vm1190, 0.0, %v1406
    %v1533 = vsel %vm1191, 0.0, %v1410
    %v1534 = vsel %vm1192, 0.0, %v1414
    %v1535 = vsel %vm1193, 0.0, %v1402
    %v1536 = vsel %vm1194, 0.0, %v1406
    %v1537 = vsel %vm1195, 0.0, %v1410
    %v1538 = vsel %vm1196, 0.0, %v1414
    %v1539 = vsel %vm1197, 0.0, %v1402
    %v1540 = vsel %vm1198, 0.0, %v1406
    %v1541 = vsel %vm1199, 0.0, %v1410
    %v1542 = vsel %vm1200, 0.0, %v1414
    %v1543 = vsel %vm1201, 0.0, %v1402
    %v1544 = vsel %vm1202, 0.0, %v1406
    %v1545 = vsel %vm1203, 0.0, %v1410
    %v1546 = vsel %vm1204, 0.0, %v1414
    %v1547 = vsel %vm1205, 0.0, %v1402
    %v1548 = vsel %vm1206, 0.0, %v1406
    %v1549 = vsel %vm1207, 0.0, %v1410
    %v1550 = vsel %vm1208, 0.0, %v1414
    %v1551 = vsel %vm1209, 0.0, %v1402
    %v1552 = vsel %vm1210, 0.0, %v1406
    %v1553 = vsel %vm1211, 0.0, %v1410
    %v1554 = vsel %vm1212, 0.0, %v1414
    %v1555 = vsel %vm1213, 0.0, %v1402
    %v1556 = vsel %vm1214, 0.0, %v1406
    %v1557 = vsel %vm1215, 0.0, %v1410
    %v1558 = vsel %vm1216, 0.0, %v1414
    %v1559 = vsel %vm1217, 0.0, %v1402
    %v1560 = vsel %vm1218, 0.0, %v1406
    %v1561 = vsel %vm1219, 0.0, %v1410
    %v1562 = vsel %vm1220, 0.0, %v1414
    %v1563 = vsel %vm1221, 0.0, %v1402
    %v1564 = vsel %vm1222, 0.0, %v1406
    %v1565 = vsel %vm1223, 0.0, %v1410
    %v1566 = vsel %vm1224, 0.0, %v1414
    %v1567 = vsel %vm1225, 0.0, %v1402
    %v1568 = vsel %vm1226, 0.0, %v1406
    %v1569 = vsel %vm1227, 0.0, %v1410
    %v1570 = vsel %vm1228, 0.0, %v1414
    %v1571 = vsel %vm1229, 0.0, %v1402
    %v1572 = vsel %vm1230, 0.0, %v1406
    %v1573 = vsel %vm1231, 0.0, %v1410
    %v1574 = vsel %vm1232, 0.0, %v1414
    %v1575 = vsel %vm1233, 0.0, %v1402
    %v1576 = vsel %vm1234, 0.0, %v1406
    %v1577 = vsel %vm1235, 0.0, %v1410
    %v1578 = vsel %vm1236, 0.0, %v1414
    %v1579 = vsel %vm1237, 0.0, %v1402
    %v1580 = vsel %vm1238, 0.0, %v1406
    %v1581 = vsel %vm1239, 0.0, %v1410
    %v1582 = vsel %vm1240, 0.0, %v1414
    %v1583 = vsel %vm1241, 0.0, %v1402
    %v1584 = vsel %vm1242, 0.0, %v1406
    %v1585 = vsel %vm1243, 0.0, %v1410
    %v1586 = vsel %vm1244, 0.0, %v1414
    %v1587 = vsel %vm1245, 0.0, %v1402
    %v1588 = vsel %vm1246, 0.0, %v1406
    %v1589 = vsel %vm1247, 0.0, %v1410
    %v1590 = vsel %vm1248, 0.0, %v1414
    %v1591 = vsel %vm1249, 0.0, %v1402
    %v1592 = vsel %vm1250, 0.0, %v1406
    %v1593 = vsel %vm1251, 0.0, %v1410
    %v1594 = vsel %vm1252, 0.0, %v1414
    %v1595 = vsel %vm1253, 0.0, %v1402
    %v1596 = vsel %vm1254, 0.0, %v1406
    %v1597 = vsel %vm1255, 0.0, %v1410
    %v1598 = vsel %vm1256, 0.0, %v1414
    %v1599 = vsel %vm1257, 0.0, %v1402
    %v1600 = vsel %vm1258, 0.0, %v1406
    %v1601 = vsel %vm1259, 0.0, %v1410
    %v1602 = vsel %vm1260, 0.0, %v1414
    %v1603 = vsel %vm1261, 0.0, %v1402
    %v1604 = vsel %vm1262, 0.0, %v1406
    %v1605 = vsel %vm1263, 0.0, %v1410
    %v1606 = vsel %vm1264, 0.0, %v1414
    %v1607 = vsel %vm1265, 0.0, %v1402
    %v1608 = vsel %vm1266, 0.0, %v1406
    %v1609 = vsel %vm1267, 0.0, %v1410
    %v1610 = vsel %vm1268, 0.0, %v1414
    %v1611 = vsel %vm1269, 0.0, %v1402
    %v1612 = vsel %vm1270, 0.0, %v1406
    %v1613 = vsel %vm1271, 0.0, %v1410
    %v1614 = vsel %vm1272, 0.0, %v1414
    %v1615 = vsel %vm1273, 0.0, %v1402
    %v1616 = vsel %vm1274, 0.0, %v1406
    %v1617 = vsel %vm1275, 0.0, %v1410
    %v1618 = vsel %vm1276, 0.0, %v1414
    %v1619 = vsel %vm1277, 0.0, %v1402
    %v1620 = vsel %vm1278, 0.0, %v1406
    %v1621 = vsel %vm1279, 0.0, %v1410
    %v1622 = vsel %vm1280, 0.0, %v1414
    %v1623 = vsel %vm1281, 0.0, %v1402
    %v1624 = vsel %vm1282, 0.0, %v1406
    %v1625 = vsel %vm1283, 0.0, %v1410
    %v1626 = vsel %vm1284, 0.0, %v1414
    %v1627 = vsel %vm1285, 0.0, %v1402
    %v1628 = vsel %vm1286, 0.0, %v1406
    %v1629 = vsel %vm1287, 0.0, %v1410
    %v1630 = vsel %vm1288, 0.0, %v1414
    %v1631 = vsel %vm1289, 0.0, %v1402
    %v1632 = vsel %vm1290, 0.0, %v1406
    %v1633 = vsel %vm1291, 0.0, %v1410
    %v1634 = vsel %vm1292, 0.0, %v1414
    %v1635 = vsel %vm1293, 0.0, %v1402
    %v1636 = vsel %vm1294, 0.0, %v1406
    %v1637 = vsel %vm1295, 0.0, %v1410
    %v1638 = vsel %vm1296, 0.0, %v1414
    %v1639 = vsel %vm1297, 0.0, %v1402
    %v1640 = vsel %vm1298, 0.0, %v1406
    %v1641 = vsel %vm1299, 0.0, %v1410
    %v1642 = vsel %vm1300, 0.0, %v1414
    %v1643 = vsel %vm1301, 0.0, %v1402
    %v1644 = vsel %vm1302, 0.0, %v1406
    %v1645 = vsel %vm1303, 0.0, %v1410
    %v1646 = vsel %vm1304, 0.0, %v1414
    %v1647 = vsel %vm1305, 0.0, %v1402
    %v1648 = vsel %vm1306, 0.0, %v1406
    %v1649 = vsel %vm1307, 0.0, %v1410
    %v1650 = vsel %vm1308, 0.0, %v1414
    %v1651 = vsel %vm1309, 0.0, %v1402
    %v1652 = vsel %vm1310, 0.0, %v1406
    %v1653 = vsel %vm1311, 0.0, %v1410
    %v1654 = vsel %vm1312, 0.0, %v1414
    %v1655 = vsel %vm1313, 0.0, %v1402
    %v1656 = vsel %vm1314, 0.0, %v1406
    %v1657 = vsel %vm1315, 0.0, %v1410
    %v1658 = vsel %vm1316, 0.0, %v1414
    %v1659 = vsel %vm1317, 0.0, %v1402
    %v1660 = vsel %vm1318, 0.0, %v1406
    %v1661 = vsel %vm1319, 0.0, %v1410
    %v1662 = vsel %vm1320, 0.0, %v1414
    %v1663 = vsel %vm1321, 0.0, %v1402
    %v1664 = vsel %vm1322, 0.0, %v1406
    %v1665 = vsel %vm1323, 0.0, %v1410
    %v1666 = vsel %vm1324, 0.0, %v1414
    %v1667 = vsel %vm1325, 0.0, %v1402
    %v1668 = vsel %vm1326, 0.0, %v1406
    %v1669 = vsel %vm1327, 0.0, %v1410
    %v1670 = vsel %vm1328, 0.0, %v1414
    %v1671 = vsel %vm1329, 0.0, %v1402
    %v1672 = vsel %vm1330, 0.0, %v1406
    %v1673 = vsel %vm1331, 0.0, %v1410
    %v1674 = vsel %vm1332, 0.0, %v1414
    %v1675 = vadd.f32 %v1419, %v1420
    %v1676 = vadd.f32 %v1675, %v1421
    %v1677 = vadd.f32 %v1676, %v1422
    %1678 = vadd.xlane.f32.xlu0 %v1677
    %v1679 = vpop.xlane.xlu0 %1678
    %v1680 = vadd.f32 %v1423, %v1424
    %v1681 = vadd.f32 %v1680, %v1425
    %v1682 = vadd.f32 %v1681, %v1426
    %1683 = vadd.xlane.f32.xlu0 %v1682
    %v1684 = vpop.xlane.xlu0 %1683
    %v1685 = vadd.f32 %v1427, %v1428
    %v1686 = vadd.f32 %v1685, %v1429
    %v1687 = vadd.f32 %v1686, %v1430
    %1688 = vadd.xlane.f32.xlu0 %v1687
    %v1689 = vpop.xlane.xlu0 %1688
    %v1690 = vadd.f32 %v1431, %v1432
    %v1691 = vadd.f32 %v1690, %v1433
    %v1692 = vadd.f32 %v1691, %v1434
    %1693 = vadd.xlane.f32.xlu0 %v1692
    %v1694 = vpop.xlane.xlu0 %1693
    %v1695 = vadd.f32 %v1435, %v1436
    %v1696 = vadd.f32 %v1695, %v1437
    %v1697 = vadd.f32 %v1696, %v1438
    %1698 = vadd.xlane.f32.xlu0 %v1697
    %v1699 = vpop.xlane.xlu0 %1698
    %v1700 = vadd.f32 %v1439, %v1440
    %v1701 = vadd.f32 %v1700, %v1441
    %v1702 = vadd.f32 %v1701, %v1442
    %1703 = vadd.xlane.f32.xlu0 %v1702
    %v1704 = vpop.xlane.xlu0 %1703
    %v1705 = vadd.f32 %v1443, %v1444
    %v1706 = vadd.f32 %v1705, %v1445
    %v1707 = vadd.f32 %v1706, %v1446
    %1708 = vadd.xlane.f32.xlu0 %v1707
    %v1709 = vpop.xlane.xlu0 %1708
    %v1710 = vadd.f32 %v1447, %v1448
    %v1711 = vadd.f32 %v1710, %v1449
    %v1712 = vadd.f32 %v1711, %v1450
    %1713 = vadd.xlane.f32.xlu0 %v1712
    %v1714 = vpop.xlane.xlu0 %1713
    %v1715 = vadd.f32 %v1451, %v1452
    %v1716 = vadd.f32 %v1715, %v1453
    %v1717 = vadd.f32 %v1716, %v1454
    %1718 = vadd.xlane.f32.xlu0 %v1717
    %v1719 = vpop.xlane.xlu0 %1718
    %v1720 = vadd.f32 %v1455, %v1456
    %v1721 = vadd.f32 %v1720, %v1457
    %v1722 = vadd.f32 %v1721, %v1458
    %1723 = vadd.xlane.f32.xlu0 %v1722
    %v1724 = vpop.xlane.xlu0 %1723
    %v1725 = vadd.f32 %v1459, %v1460
    %v1726 = vadd.f32 %v1725, %v1461
    %v1727 = vadd.f32 %v1726, %v1462
    %1728 = vadd.xlane.f32.xlu0 %v1727
    %v1729 = vpop.xlane.xlu0 %1728
    %v1730 = vadd.f32 %v1463, %v1464
    %v1731 = vadd.f32 %v1730, %v1465
    %v1732 = vadd.f32 %v1731, %v1466
    %1733 = vadd.xlane.f32.xlu0 %v1732
    %v1734 = vpop.xlane.xlu0 %1733
    %v1735 = vadd.f32 %v1467, %v1468
    %v1736 = vadd.f32 %v1735, %v1469
    %v1737 = vadd.f32 %v1736, %v1470
    %1738 = vadd.xlane.f32.xlu0 %v1737
    %v1739 = vpop.xlane.xlu0 %1738
    %v1740 = vadd.f32 %v1471, %v1472
    %v1741 = vadd.f32 %v1740, %v1473
    %v1742 = vadd.f32 %v1741, %v1474
    %1743 = vadd.xlane.f32.xlu0 %v1742
    %v1744 = vpop.xlane.xlu0 %1743
    %v1745 = vadd.f32 %v1475, %v1476
    %v1746 = vadd.f32 %v1745, %v1477
    %v1747 = vadd.f32 %v1746, %v1478
    %1748 = vadd.xlane.f32.xlu0 %v1747
    %v1749 = vpop.xlane.xlu0 %1748
    %v1750 = vadd.f32 %v1479, %v1480
    %v1751 = vadd.f32 %v1750, %v1481
    %v1752 = vadd.f32 %v1751, %v1482
    %1753 = vadd.xlane.f32.xlu0 %v1752
    %v1754 = vpop.xlane.xlu0 %1753
    %v1755 = vadd.f32 %v1483, %v1484
    %v1756 = vadd.f32 %v1755, %v1485
    %v1757 = vadd.f32 %v1756, %v1486
    %1758 = vadd.xlane.f32.xlu0 %v1757
    %v1759 = vpop.xlane.xlu0 %1758
    %v1760 = vadd.f32 %v1487, %v1488
    %v1761 = vadd.f32 %v1760, %v1489
    %v1762 = vadd.f32 %v1761, %v1490
    %1763 = vadd.xlane.f32.xlu0 %v1762
    %v1764 = vpop.xlane.xlu0 %1763
    %v1765 = vadd.f32 %v1491, %v1492
    %v1766 = vadd.f32 %v1765, %v1493
    %v1767 = vadd.f32 %v1766, %v1494
    %1768 = vadd.xlane.f32.xlu0 %v1767
    %v1769 = vpop.xlane.xlu0 %1768
    %v1770 = vadd.f32 %v1495, %v1496
    %v1771 = vadd.f32 %v1770, %v1497
    %v1772 = vadd.f32 %v1771, %v1498
    %1773 = vadd.xlane.f32.xlu0 %v1772
    %v1774 = vpop.xlane.xlu0 %1773
    %v1775 = vadd.f32 %v1499, %v1500
    %v1776 = vadd.f32 %v1775, %v1501
    %v1777 = vadd.f32 %v1776, %v1502
    %1778 = vadd.xlane.f32.xlu0 %v1777
    %v1779 = vpop.xlane.xlu0 %1778
    %v1780 = vadd.f32 %v1503, %v1504
    %v1781 = vadd.f32 %v1780, %v1505
    %v1782 = vadd.f32 %v1781, %v1506
    %1783 = vadd.xlane.f32.xlu0 %v1782
    %v1784 = vpop.xlane.xlu0 %1783
    %v1785 = vadd.f32 %v1507, %v1508
    %v1786 = vadd.f32 %v1785, %v1509
    %v1787 = vadd.f32 %v1786, %v1510
    %1788 = vadd.xlane.f32.xlu0 %v1787
    %v1789 = vpop.xlane.xlu0 %1788
    %v1790 = vadd.f32 %v1511, %v1512
    %v1791 = vadd.f32 %v1790, %v1513
    %v1792 = vadd.f32 %v1791, %v1514
    %1793 = vadd.xlane.f32.xlu0 %v1792
    %v1794 = vpop.xlane.xlu0 %1793
    %v1795 = vadd.f32 %v1515, %v1516
    %v1796 = vadd.f32 %v1795, %v1517
    %v1797 = vadd.f32 %v1796, %v1518
    %1798 = vadd.xlane.f32.xlu0 %v1797
    %v1799 = vpop.xlane.xlu0 %1798
    %v1800 = vadd.f32 %v1519, %v1520
    %v1801 = vadd.f32 %v1800, %v1521
    %v1802 = vadd.f32 %v1801, %v1522
    %1803 = vadd.xlane.f32.xlu0 %v1802
    %v1804 = vpop.xlane.xlu0 %1803
    %v1805 = vadd.f32 %v1523, %v1524
    %v1806 = vadd.f32 %v1805, %v1525
    %v1807 = vadd.f32 %v1806, %v1526
    %1808 = vadd.xlane.f32.xlu0 %v1807
    %v1809 = vpop.xlane.xlu0 %1808
    %v1810 = vadd.f32 %v1527, %v1528
    %v1811 = vadd.f32 %v1810, %v1529
    %v1812 = vadd.f32 %v1811, %v1530
    %1813 = vadd.xlane.f32.xlu0 %v1812
    %v1814 = vpop.xlane.xlu0 %1813
    %v1815 = vadd.f32 %v1531, %v1532
    %v1816 = vadd.f32 %v1815, %v1533
    %v1817 = vadd.f32 %v1816, %v1534
    %1818 = vadd.xlane.f32.xlu0 %v1817
    %v1819 = vpop.xlane.xlu0 %1818
    %v1820 = vadd.f32 %v1535, %v1536
    %v1821 = vadd.f32 %v1820, %v1537
    %v1822 = vadd.f32 %v1821, %v1538
    %1823 = vadd.xlane.f32.xlu0 %v1822
    %v1824 = vpop.xlane.xlu0 %1823
    %v1825 = vadd.f32 %v1539, %v1540
    %v1826 = vadd.f32 %v1825, %v1541
    %v1827 = vadd.f32 %v1826, %v1542
    %1828 = vadd.xlane.f32.xlu0 %v1827
    %v1829 = vpop.xlane.xlu0 %1828
    %v1830 = vadd.f32 %v1543, %v1544
    %v1831 = vadd.f32 %v1830, %v1545
    %v1832 = vadd.f32 %v1831, %v1546
    %1833 = vadd.xlane.f32.xlu0 %v1832
    %v1834 = vpop.xlane.xlu0 %1833
    %v1835 = vadd.f32 %v1547, %v1548
    %v1836 = vadd.f32 %v1835, %v1549
    %v1837 = vadd.f32 %v1836, %v1550
    %1838 = vadd.xlane.f32.xlu0 %v1837
    %v1839 = vpop.xlane.xlu0 %1838
    %v1840 = vadd.f32 %v1551, %v1552
    %v1841 = vadd.f32 %v1840, %v1553
    %v1842 = vadd.f32 %v1841, %v1554
    %1843 = vadd.xlane.f32.xlu0 %v1842
    %v1844 = vpop.xlane.xlu0 %1843
    %v1845 = vadd.f32 %v1555, %v1556
    %v1846 = vadd.f32 %v1845, %v1557
    %v1847 = vadd.f32 %v1846, %v1558
    %1848 = vadd.xlane.f32.xlu0 %v1847
    %v1849 = vpop.xlane.xlu0 %1848
    %v1850 = vadd.f32 %v1559, %v1560
    %v1851 = vadd.f32 %v1850, %v1561
    %v1852 = vadd.f32 %v1851, %v1562
    %1853 = vadd.xlane.f32.xlu0 %v1852
    %v1854 = vpop.xlane.xlu0 %1853
    %v1855 = vadd.f32 %v1563, %v1564
    %v1856 = vadd.f32 %v1855, %v1565
    %v1857 = vadd.f32 %v1856, %v1566
    %1858 = vadd.xlane.f32.xlu0 %v1857
    %v1859 = vpop.xlane.xlu0 %1858
    %v1860 = vadd.f32 %v1567, %v1568
    %v1861 = vadd.f32 %v1860, %v1569
    %v1862 = vadd.f32 %v1861, %v1570
    %1863 = vadd.xlane.f32.xlu0 %v1862
    %v1864 = vpop.xlane.xlu0 %1863
    %v1865 = vadd.f32 %v1571, %v1572
    %v1866 = vadd.f32 %v1865, %v1573
    %v1867 = vadd.f32 %v1866, %v1574
    %1868 = vadd.xlane.f32.xlu0 %v1867
    %v1869 = vpop.xlane.xlu0 %1868
    %v1870 = vadd.f32 %v1575, %v1576
    %v1871 = vadd.f32 %v1870, %v1577
    %v1872 = vadd.f32 %v1871, %v1578
    %1873 = vadd.xlane.f32.xlu0 %v1872
    %v1874 = vpop.xlane.xlu0 %1873
    %v1875 = vadd.f32 %v1579, %v1580
    %v1876 = vadd.f32 %v1875, %v1581
    %v1877 = vadd.f32 %v1876, %v1582
    %1878 = vadd.xlane.f32.xlu0 %v1877
    %v1879 = vpop.xlane.xlu0 %1878
    %v1880 = vadd.f32 %v1583, %v1584
    %v1881 = vadd.f32 %v1880, %v1585
    %v1882 = vadd.f32 %v1881, %v1586
    %1883 = vadd.xlane.f32.xlu0 %v1882
    %v1884 = vpop.xlane.xlu0 %1883
    %v1885 = vadd.f32 %v1587, %v1588
    %v1886 = vadd.f32 %v1885, %v1589
    %v1887 = vadd.f32 %v1886, %v1590
    %1888 = vadd.xlane.f32.xlu0 %v1887
    %v1889 = vpop.xlane.xlu0 %1888
    %v1890 = vadd.f32 %v1591, %v1592
    %v1891 = vadd.f32 %v1890, %v1593
    %v1892 = vadd.f32 %v1891, %v1594
    %1893 = vadd.xlane.f32.xlu0 %v1892
    %v1894 = vpop.xlane.xlu0 %1893
    %v1895 = vadd.f32 %v1595, %v1596
    %v1896 = vadd.f32 %v1895, %v1597
    %v1897 = vadd.f32 %v1896, %v1598
    %1898 = vadd.xlane.f32.xlu0 %v1897
    %v1899 = vpop.xlane.xlu0 %1898
    %v1900 = vadd.f32 %v1599, %v1600
    %v1901 = vadd.f32 %v1900, %v1601
    %v1902 = vadd.f32 %v1901, %v1602
    %1903 = vadd.xlane.f32.xlu0 %v1902
    %v1904 = vpop.xlane.xlu0 %1903
    %v1905 = vadd.f32 %v1603, %v1604
    %v1906 = vadd.f32 %v1905, %v1605
    %v1907 = vadd.f32 %v1906, %v1606
    %1908 = vadd.xlane.f32.xlu0 %v1907
    %v1909 = vpop.xlane.xlu0 %1908
    %v1910 = vadd.f32 %v1607, %v1608
    %v1911 = vadd.f32 %v1910, %v1609
    %v1912 = vadd.f32 %v1911, %v1610
    %1913 = vadd.xlane.f32.xlu0 %v1912
    %v1914 = vpop.xlane.xlu0 %1913
    %v1915 = vadd.f32 %v1611, %v1612
    %v1916 = vadd.f32 %v1915, %v1613
    %v1917 = vadd.f32 %v1916, %v1614
    %1918 = vadd.xlane.f32.xlu0 %v1917
    %v1919 = vpop.xlane.xlu0 %1918
    %v1920 = vadd.f32 %v1615, %v1616
    %v1921 = vadd.f32 %v1920, %v1617
    %v1922 = vadd.f32 %v1921, %v1618
    %1923 = vadd.xlane.f32.xlu0 %v1922
    %v1924 = vpop.xlane.xlu0 %1923
    %v1925 = vadd.f32 %v1619, %v1620
    %v1926 = vadd.f32 %v1925, %v1621
    %v1927 = vadd.f32 %v1926, %v1622
    %1928 = vadd.xlane.f32.xlu0 %v1927
    %v1929 = vpop.xlane.xlu0 %1928
    %v1930 = vadd.f32 %v1623, %v1624
    %v1931 = vadd.f32 %v1930, %v1625
    %v1932 = vadd.f32 %v1931, %v1626
    %1933 = vadd.xlane.f32.xlu0 %v1932
    %v1934 = vpop.xlane.xlu0 %1933
    %v1935 = vadd.f32 %v1627, %v1628
    %v1936 = vadd.f32 %v1935, %v1629
    %v1937 = vadd.f32 %v1936, %v1630
    %1938 = vadd.xlane.f32.xlu0 %v1937
    %v1939 = vpop.xlane.xlu0 %1938
    %v1940 = vadd.f32 %v1631, %v1632
    %v1941 = vadd.f32 %v1940, %v1633
    %v1942 = vadd.f32 %v1941, %v1634
    %1943 = vadd.xlane.f32.xlu0 %v1942
    %v1944 = vpop.xlane.xlu0 %1943
    %v1945 = vadd.f32 %v1635, %v1636
    %v1946 = vadd.f32 %v1945, %v1637
    %v1947 = vadd.f32 %v1946, %v1638
    %1948 = vadd.xlane.f32.xlu0 %v1947
    %v1949 = vpop.xlane.xlu0 %1948
    %v1950 = vadd.f32 %v1639, %v1640
    %v1951 = vadd.f32 %v1950, %v1641
    %v1952 = vadd.f32 %v1951, %v1642
    %1953 = vadd.xlane.f32.xlu0 %v1952
    %v1954 = vpop.xlane.xlu0 %1953
    %v1955 = vadd.f32 %v1643, %v1644
    %v1956 = vadd.f32 %v1955, %v1645
    %v1957 = vadd.f32 %v1956, %v1646
    %1958 = vadd.xlane.f32.xlu0 %v1957
    %v1959 = vpop.xlane.xlu0 %1958
    %v1960 = vadd.f32 %v1647, %v1648
    %v1961 = vadd.f32 %v1960, %v1649
    %v1962 = vadd.f32 %v1961, %v1650
    %1963 = vadd.xlane.f32.xlu0 %v1962
    %v1964 = vpop.xlane.xlu0 %1963
    %v1965 = vadd.f32 %v1651, %v1652
    %v1966 = vadd.f32 %v1965, %v1653
    %v1967 = vadd.f32 %v1966, %v1654
    %1968 = vadd.xlane.f32.xlu0 %v1967
    %v1969 = vpop.xlane.xlu0 %1968
    %v1970 = vadd.f32 %v1655, %v1656
    %v1971 = vadd.f32 %v1970, %v1657
    %v1972 = vadd.f32 %v1971, %v1658
    %1973 = vadd.xlane.f32.xlu0 %v1972
    %v1974 = vpop.xlane.xlu0 %1973
    %v1975 = vadd.f32 %v1659, %v1660
    %v1976 = vadd.f32 %v1975, %v1661
    %v1977 = vadd.f32 %v1976, %v1662
    %1978 = vadd.xlane.f32.xlu0 %v1977
    %v1979 = vpop.xlane.xlu0 %1978
    %v1980 = vadd.f32 %v1663, %v1664
    %v1981 = vadd.f32 %v1980, %v1665
    %v1982 = vadd.f32 %v1981, %v1666
    %1983 = vadd.xlane.f32.xlu0 %v1982
    %v1984 = vpop.xlane.xlu0 %1983
    %v1985 = vadd.f32 %v1667, %v1668
    %v1986 = vadd.f32 %v1985, %v1669
    %v1987 = vadd.f32 %v1986, %v1670
    %1988 = vadd.xlane.f32.xlu0 %v1987
    %v1989 = vpop.xlane.xlu0 %1988
    %v1990 = vadd.f32 %v1671, %v1672
    %v1991 = vadd.f32 %v1990, %v1673
    %v1992 = vadd.f32 %v1991, %v1674
    %1993 = vadd.xlane.f32.xlu0 %v1992
    %v1994 = vpop.xlane.xlu0 %1993
    %v1995 = vadd.f32 %v1334, %v1679
    %v1996 = vadd.f32 %v1335, %v1684
    %v1997 = vadd.f32 %v1336, %v1689
    %v1998 = vadd.f32 %v1337, %v1694
    %v1999 = vadd.f32 %v1338, %v1699
    %v2000 = vadd.f32 %v1339, %v1704
    %v2001 = vadd.f32 %v1340, %v1709
    %v2002 = vadd.f32 %v1341, %v1714
    %v2003 = vadd.f32 %v1342, %v1719
    %v2004 = vadd.f32 %v1343, %v1724
    %v2005 = vadd.f32 %v1344, %v1729
    %v2006 = vadd.f32 %v1345, %v1734
    %v2007 = vadd.f32 %v1346, %v1739
    %v2008 = vadd.f32 %v1347, %v1744
    %v2009 = vadd.f32 %v1348, %v1749
    %v2010 = vadd.f32 %v1349, %v1754
    %v2011 = vadd.f32 %v1350, %v1759
    %v2012 = vadd.f32 %v1351, %v1764
    %v2013 = vadd.f32 %v1352, %v1769
    %v2014 = vadd.f32 %v1353, %v1774
    %v2015 = vadd.f32 %v1354, %v1779
    %v2016 = vadd.f32 %v1355, %v1784
    %v2017 = vadd.f32 %v1356, %v1789
    %v2018 = vadd.f32 %v1357, %v1794
    %v2019 = vadd.f32 %v1358, %v1799
    %v2020 = vadd.f32 %v1359, %v1804
    %v2021 = vadd.f32 %v1360, %v1809
    %v2022 = vadd.f32 %v1361, %v1814
    %v2023 = vadd.f32 %v1362, %v1819
    %v2024 = vadd.f32 %v1363, %v1824
    %v2025 = vadd.f32 %v1364, %v1829
    %v2026 = vadd.f32 %v1365, %v1834
    %v2027 = vadd.f32 %v1366, %v1839
    %v2028 = vadd.f32 %v1367, %v1844
    %v2029 = vadd.f32 %v1368, %v1849
    %v2030 = vadd.f32 %v1369, %v1854
    %v2031 = vadd.f32 %v1370, %v1859
    %v2032 = vadd.f32 %v1371, %v1864
    %v2033 = vadd.f32 %v1372, %v1869
    %v2034 = vadd.f32 %v1373, %v1874
    %v2035 = vadd.f32 %v1374, %v1879
    %v2036 = vadd.f32 %v1375, %v1884
    %v2037 = vadd.f32 %v1376, %v1889
    %v2038 = vadd.f32 %v1377, %v1894
    %v2039 = vadd.f32 %v1378, %v1899
    %v2040 = vadd.f32 %v1379, %v1904
    %v2041 = vadd.f32 %v1380, %v1909
    %v2042 = vadd.f32 %v1381, %v1914
    %v2043 = vadd.f32 %v1382, %v1919
    %v2044 = vadd.f32 %v1383, %v1924
    %v2045 = vadd.f32 %v1384, %v1929
    %v2046 = vadd.f32 %v1385, %v1934
    %v2047 = vadd.f32 %v1386, %v1939
    %v2048 = vadd.f32 %v1387, %v1944
    %v2049 = vadd.f32 %v1388, %v1949
    %v2050 = vadd.f32 %v1389, %v1954
    %v2051 = vadd.f32 %v1390, %v1959
    %v2052 = vadd.f32 %v1391, %v1964
    %v2053 = vadd.f32 %v1392, %v1969
    %v2054 = vadd.f32 %v1393, %v1974
    %v2055 = vadd.f32 %v1394, %v1979
    %v2056 = vadd.f32 %v1395, %v1984
    %v2057 = vadd.f32 %v1396, %v1989
    %v2058 = vadd.f32 %v1397, %v1994
    %vm2059 = vcmask 7168
    %2060 = vst.msk [vmem:[#allocation3] sm:$0xff] %vm2059, %v1995
    %2061 = vst.msk [vmem:[#allocation3 + $0x8] sm:$0xff] %vm2059, %v1996
    %2062 = vst.msk [vmem:[#allocation3 + $0x10] sm:$0xff] %vm2059, %v1997
    %2063 = vst.msk [vmem:[#allocation3 + $0x18] sm:$0xff] %vm2059, %v1998
    %2064 = vst.msk [vmem:[#allocation3 + $0x20] sm:$0xff] %vm2059, %v1999
    %2065 = vst.msk [vmem:[#allocation3 + $0x28] sm:$0xff] %vm2059, %v2000
    %2066 = vst.msk [vmem:[#allocation3 + $0x30] sm:$0xff] %vm2059, %v2001
    %2067 = vst.msk [vmem:[#allocation3 + $0x38] sm:$0xff] %vm2059, %v2002
    %2068 = vst.msk [vmem:[#allocation3 + $0x40] sm:$0xff] %vm2059, %v2003
    %2069 = vst.msk [vmem:[#allocation3 + $0x48] sm:$0xff] %vm2059, %v2004
    %2070 = vst.msk [vmem:[#allocation3 + $0x50] sm:$0xff] %vm2059, %v2005
    %2071 = vst.msk [vmem:[#allocation3 + $0x58] sm:$0xff] %vm2059, %v2006
    %2072 = vst.msk [vmem:[#allocation3 + $0x60] sm:$0xff] %vm2059, %v2007
    %2073 = vst.msk [vmem:[#allocation3 + $0x68] sm:$0xff] %vm2059, %v2008
    %2074 = vst.msk [vmem:[#allocation3 + $0x70] sm:$0xff] %vm2059, %v2009
    %2075 = vst.msk [vmem:[#allocation3 + $0x78] sm:$0xff] %vm2059, %v2010
    %2076 = vst.msk [vmem:[#allocation3 + $0x80] sm:$0xff] %vm2059, %v2011
    %2077 = vst.msk [vmem:[#allocation3 + $0x88] sm:$0xff] %vm2059, %v2012
    %2078 = vst.msk [vmem:[#allocation3 + $0x90] sm:$0xff] %vm2059, %v2013
    %2079 = vst.msk [vmem:[#allocation3 + $0x98] sm:$0xff] %vm2059, %v2014
    %2080 = vst.msk [vmem:[#allocation3 + $0xa0] sm:$0xff] %vm2059, %v2015
    %2081 = vst.msk [vmem:[#allocation3 + $0xa8] sm:$0xff] %vm2059, %v2016
    %2082 = vst.msk [vmem:[#allocation3 + $0xb0] sm:$0xff] %vm2059, %v2017
    %2083 = vst.msk [vmem:[#allocation3 + $0xb8] sm:$0xff] %vm2059, %v2018
    %2084 = vst.msk [vmem:[#allocation3 + $0xc0] sm:$0xff] %vm2059, %v2019
    %2085 = vst.msk [vmem:[#allocation3 + $0xc8] sm:$0xff] %vm2059, %v2020
    %2086 = vst.msk [vmem:[#allocation3 + $0xd0] sm:$0xff] %vm2059, %v2021
    %2087 = vst.msk [vmem:[#allocation3 + $0xd8] sm:$0xff] %vm2059, %v2022
    %2088 = vst.msk [vmem:[#allocation3 + $0xe0] sm:$0xff] %vm2059, %v2023
    %2089 = vst.msk [vmem:[#allocation3 + $0xe8] sm:$0xff] %vm2059, %v2024
    %2090 = vst.msk [vmem:[#allocation3 + $0xf0] sm:$0xff] %vm2059, %v2025
    %2091 = vst.msk [vmem:[#allocation3 + $0xf8] sm:$0xff] %vm2059, %v2026
    %2092 = vst.msk [vmem:[#allocation3 + $0x100] sm:$0xff] %vm2059, %v2027
    %2093 = vst.msk [vmem:[#allocation3 + $0x108] sm:$0xff] %vm2059, %v2028
    %2094 = vst.msk [vmem:[#allocation3 + $0x110] sm:$0xff] %vm2059, %v2029
    %2095 = vst.msk [vmem:[#allocation3 + $0x118] sm:$0xff] %vm2059, %v2030
    %2096 = vst.msk [vmem:[#allocation3 + $0x120] sm:$0xff] %vm2059, %v2031
    %2097 = vst.msk [vmem:[#allocation3 + $0x128] sm:$0xff] %vm2059, %v2032
    %2098 = vst.msk [vmem:[#allocation3 + $0x130] sm:$0xff] %vm2059, %v2033
    %2099 = vst.msk [vmem:[#allocation3 + $0x138] sm:$0xff] %vm2059, %v2034
    %2100 = vst.msk [vmem:[#allocation3 + $0x140] sm:$0xff] %vm2059, %v2035
    %2101 = vst.msk [vmem:[#allocation3 + $0x148] sm:$0xff] %vm2059, %v2036
    %2102 = vst.msk [vmem:[#allocation3 + $0x150] sm:$0xff] %vm2059, %v2037
    %2103 = vst.msk [vmem:[#allocation3 + $0x158] sm:$0xff] %vm2059, %v2038
    %2104 = vst.msk [vmem:[#allocation3 + $0x160] sm:$0xff] %vm2059, %v2039
    %2105 = vst.msk [vmem:[#allocation3 + $0x168] sm:$0xff] %vm2059, %v2040
    %2106 = vst.msk [vmem:[#allocation3 + $0x170] sm:$0xff] %vm2059, %v2041
    %2107 = vst.msk [vmem:[#allocation3 + $0x178] sm:$0xff] %vm2059, %v2042
    %2108 = vst.msk [vmem:[#allocation3 + $0x180] sm:$0xff] %vm2059, %v2043
    %2109 = vst.msk [vmem:[#allocation3 + $0x188] sm:$0xff] %vm2059, %v2044
    %2110 = vst.msk [vmem:[#allocation3 + $0x190] sm:$0xff] %vm2059, %v2045
    %2111 = vst.msk [vmem:[#allocation3 + $0x198] sm:$0xff] %vm2059, %v2046
    %2112 = vst.msk [vmem:[#allocation3 + $0x1a0] sm:$0xff] %vm2059, %v2047
    %2113 = vst.msk [vmem:[#allocation3 + $0x1a8] sm:$0xff] %vm2059, %v2048
    %2114 = vst.msk [vmem:[#allocation3 + $0x1b0] sm:$0xff] %vm2059, %v2049
    %2115 = vst.msk [vmem:[#allocation3 + $0x1b8] sm:$0xff] %vm2059, %v2050
    %2116 = vst.msk [vmem:[#allocation3 + $0x1c0] sm:$0xff] %vm2059, %v2051
    %2117 = vst.msk [vmem:[#allocation3 + $0x1c8] sm:$0xff] %vm2059, %v2052
    %2118 = vst.msk [vmem:[#allocation3 + $0x1d0] sm:$0xff] %vm2059, %v2053
    %2119 = vst.msk [vmem:[#allocation3 + $0x1d8] sm:$0xff] %vm2059, %v2054
    %2120 = vst.msk [vmem:[#allocation3 + $0x1e0] sm:$0xff] %vm2059, %v2055
    %2121 = vst.msk [vmem:[#allocation3 + $0x1e8] sm:$0xff] %vm2059, %v2056
    %2122 = vst.msk [vmem:[#allocation3 + $0x1f0] sm:$0xff] %vm2059, %v2057
    %2123 = vst.msk [vmem:[#allocation3 + $0x1f8] sm:$0xff] %vm2059, %v2058
    %v2124 = vld [vmem:[#allocation4] sm:$0xff]
    %v2125 = vld [vmem:[#allocation4 + $0x8] sm:$0xff]
    %v2126 = vld [vmem:[#allocation4 + $0x10] sm:$0xff]
    %v2127 = vld [vmem:[#allocation4 + $0x18] sm:$0xff]
    %v2128 = vld [vmem:[#allocation4 + $0x20] sm:$0xff]
    %v2129 = vld [vmem:[#allocation4 + $0x28] sm:$0xff]
    %v2130 = vld [vmem:[#allocation4 + $0x30] sm:$0xff]
    %v2131 = vld [vmem:[#allocation4 + $0x38] sm:$0xff]
    %v2132 = vld [vmem:[#allocation4 + $0x40] sm:$0xff]
    %v2133 = vld [vmem:[#allocation4 + $0x48] sm:$0xff]
    %v2134 = vld [vmem:[#allocation4 + $0x50] sm:$0xff]
    %v2135 = vld [vmem:[#allocation4 + $0x58] sm:$0xff]
    %v2136 = vld [vmem:[#allocation4 + $0x60] sm:$0xff]
    %v2137 = vld [vmem:[#allocation4 + $0x68] sm:$0xff]
    %v2138 = vld [vmem:[#allocation4 + $0x70] sm:$0xff]
    %v2139 = vld [vmem:[#allocation4 + $0x78] sm:$0xff]
    %v2140 = vld [vmem:[#allocation4 + $0x80] sm:$0xff]
    %v2141 = vld [vmem:[#allocation4 + $0x88] sm:$0xff]
    %v2142 = vld [vmem:[#allocation4 + $0x90] sm:$0xff]
    %v2143 = vld [vmem:[#allocation4 + $0x98] sm:$0xff]
    %v2144 = vld [vmem:[#allocation4 + $0xa0] sm:$0xff]
    %v2145 = vld [vmem:[#allocation4 + $0xa8] sm:$0xff]
    %v2146 = vld [vmem:[#allocation4 + $0xb0] sm:$0xff]
    %v2147 = vld [vmem:[#allocation4 + $0xb8] sm:$0xff]
    %v2148 = vld [vmem:[#allocation4 + $0xc0] sm:$0xff]
    %v2149 = vld [vmem:[#allocation4 + $0xc8] sm:$0xff]
    %v2150 = vld [vmem:[#allocation4 + $0xd0] sm:$0xff]
    %v2151 = vld [vmem:[#allocation4 + $0xd8] sm:$0xff]
    %v2152 = vld [vmem:[#allocation4 + $0xe0] sm:$0xff]
    %v2153 = vld [vmem:[#allocation4 + $0xe8] sm:$0xff]
    %v2154 = vld [vmem:[#allocation4 + $0xf0] sm:$0xff]
    %v2155 = vld [vmem:[#allocation4 + $0xf8] sm:$0xff]
    %v2156 = vld [vmem:[#allocation4 + $0x100] sm:$0xff]
    %v2157 = vld [vmem:[#allocation4 + $0x108] sm:$0xff]
    %v2158 = vld [vmem:[#allocation4 + $0x110] sm:$0xff]
    %v2159 = vld [vmem:[#allocation4 + $0x118] sm:$0xff]
    %v2160 = vld [vmem:[#allocation4 + $0x120] sm:$0xff]
    %v2161 = vld [vmem:[#allocation4 + $0x128] sm:$0xff]
    %v2162 = vld [vmem:[#allocation4 + $0x130] sm:$0xff]
    %v2163 = vld [vmem:[#allocation4 + $0x138] sm:$0xff]
    %v2164 = vld [vmem:[#allocation4 + $0x140] sm:$0xff]
    %v2165 = vld [vmem:[#allocation4 + $0x148] sm:$0xff]
    %v2166 = vld [vmem:[#allocation4 + $0x150] sm:$0xff]
    %v2167 = vld [vmem:[#allocation4 + $0x158] sm:$0xff]
    %v2168 = vld [vmem:[#allocation4 + $0x160] sm:$0xff]
    %v2169 = vld [vmem:[#allocation4 + $0x168] sm:$0xff]
    %v2170 = vld [vmem:[#allocation4 + $0x170] sm:$0xff]
    %v2171 = vld [vmem:[#allocation4 + $0x178] sm:$0xff]
    %v2172 = vld [vmem:[#allocation4 + $0x180] sm:$0xff]
    %v2173 = vld [vmem:[#allocation4 + $0x188] sm:$0xff]
    %v2174 = vld [vmem:[#allocation4 + $0x190] sm:$0xff]
    %v2175 = vld [vmem:[#allocation4 + $0x198] sm:$0xff]
    %v2176 = vld [vmem:[#allocation4 + $0x1a0] sm:$0xff]
    %v2177 = vld [vmem:[#allocation4 + $0x1a8] sm:$0xff]
    %v2178 = vld [vmem:[#allocation4 + $0x1b0] sm:$0xff]
    %v2179 = vld [vmem:[#allocation4 + $0x1b8] sm:$0xff]
    %v2180 = vld [vmem:[#allocation4 + $0x1c0] sm:$0xff]
    %v2181 = vld [vmem:[#allocation4 + $0x1c8] sm:$0xff]
    %v2182 = vld [vmem:[#allocation4 + $0x1d0] sm:$0xff]
    %v2183 = vld [vmem:[#allocation4 + $0x1d8] sm:$0xff]
    %v2184 = vld [vmem:[#allocation4 + $0x1e0] sm:$0xff]
    %v2185 = vld [vmem:[#allocation4 + $0x1e8] sm:$0xff]
    %v2186 = vld [vmem:[#allocation4 + $0x1f0] sm:$0xff]
    %v2187 = vld [vmem:[#allocation4 + $0x1f8] sm:$0xff]
    %v2188 = vsel %vm1077, 0.0, 1.0
    %v2189 = vsel %vm1078, 0.0, 1.0
    %v2190 = vsel %vm1079, 0.0, 1.0
    %v2191 = vsel %vm1080, 0.0, 1.0
    %v2192 = vsel %vm1081, 0.0, 1.0
    %v2193 = vsel %vm1082, 0.0, 1.0
    %v2194 = vsel %vm1083, 0.0, 1.0
    %v2195 = vsel %vm1084, 0.0, 1.0
    %v2196 = vsel %vm1085, 0.0, 1.0
    %v2197 = vsel %vm1086, 0.0, 1.0
    %v2198 = vsel %vm1087, 0.0, 1.0
    %v2199 = vsel %vm1088, 0.0, 1.0
    %v2200 = vsel %vm1089, 0.0, 1.0
    %v2201 = vsel %vm1090, 0.0, 1.0
    %v2202 = vsel %vm1091, 0.0, 1.0
    %v2203 = vsel %vm1092, 0.0, 1.0
    %v2204 = vsel %vm1093, 0.0, 1.0
    %v2205 = vsel %vm1094, 0.0, 1.0
    %v2206 = vsel %vm1095, 0.0, 1.0
    %v2207 = vsel %vm1096, 0.0, 1.0
    %v2208 = vsel %vm1097, 0.0, 1.0
    %v2209 = vsel %vm1098, 0.0, 1.0
    %v2210 = vsel %vm1099, 0.0, 1.0
    %v2211 = vsel %vm1100, 0.0, 1.0
    %v2212 = vsel %vm1101, 0.0, 1.0
    %v2213 = vsel %vm1102, 0.0, 1.0
    %v2214 = vsel %vm1103, 0.0, 1.0
    %v2215 = vsel %vm1104, 0.0, 1.0
    %v2216 = vsel %vm1105, 0.0, 1.0
    %v2217 = vsel %vm1106, 0.0, 1.0
    %v2218 = vsel %vm1107, 0.0, 1.0
    %v2219 = vsel %vm1108, 0.0, 1.0
    %v2220 = vsel %vm1109, 0.0, 1.0
    %v2221 = vsel %vm1110, 0.0, 1.0
    %v2222 = vsel %vm1111, 0.0, 1.0
    %v2223 = vsel %vm1112, 0.0, 1.0
    %v2224 = vsel %vm1113, 0.0, 1.0
    %v2225 = vsel %vm1114, 0.0, 1.0
    %v2226 = vsel %vm1115, 0.0, 1.0
    %v2227 = vsel %vm1116, 0.0, 1.0
    %v2228 = vsel %vm1117, 0.0, 1.0
    %v2229 = vsel %vm1118, 0.0, 1.0
    %v2230 = vsel %vm1119, 0.0, 1.0
    %v2231 = vsel %vm1120, 0.0, 1.0
    %v2232 = vsel %vm1121, 0.0, 1.0
    %v2233 = vsel %vm1122, 0.0, 1.0
    %v2234 = vsel %vm1123, 0.0, 1.0
    %v2235 = vsel %vm1124, 0.0, 1.0
    %v2236 = vsel %vm1125, 0.0, 1.0
    %v2237 = vsel %vm1126, 0.0, 1.0
    %v2238 = vsel %vm1127, 0.0, 1.0
    %v2239 = vsel %vm1128, 0.0, 1.0
    %v2240 = vsel %vm1129, 0.0, 1.0
    %v2241 = vsel %vm1130, 0.0, 1.0
    %v2242 = vsel %vm1131, 0.0, 1.0
    %v2243 = vsel %vm1132, 0.0, 1.0
    %v2244 = vsel %vm1133, 0.0, 1.0
    %v2245 = vsel %vm1134, 0.0, 1.0
    %v2246 = vsel %vm1135, 0.0, 1.0
    %v2247 = vsel %vm1136, 0.0, 1.0
    %v2248 = vsel %vm1137, 0.0, 1.0
    %v2249 = vsel %vm1138, 0.0, 1.0
    %v2250 = vsel %vm1139, 0.0, 1.0
    %v2251 = vsel %vm1140, 0.0, 1.0
    %v2252 = vsel %vm1141, 0.0, 1.0
    %v2253 = vsel %vm1142, 0.0, 1.0
    %v2254 = vsel %vm1143, 0.0, 1.0
    %v2255 = vsel %vm1144, 0.0, 1.0
    %v2256 = vsel %vm1145, 0.0, 1.0
    %v2257 = vsel %vm1146, 0.0, 1.0
    %v2258 = vsel %vm1147, 0.0, 1.0
    %v2259 = vsel %vm1148, 0.0, 1.0
    %v2260 = vsel %vm1149, 0.0, 1.0
    %v2261 = vsel %vm1150, 0.0, 1.0
    %v2262 = vsel %vm1151, 0.0, 1.0
    %v2263 = vsel %vm1152, 0.0, 1.0
    %v2264 = vsel %vm1153, 0.0, 1.0
    %v2265 = vsel %vm1154, 0.0, 1.0
    %v2266 = vsel %vm1155, 0.0, 1.0
    %v2267 = vsel %vm1156, 0.0, 1.0
    %v2268 = vsel %vm1157, 0.0, 1.0
    %v2269 = vsel %vm1158, 0.0, 1.0
    %v2270 = vsel %vm1159, 0.0, 1.0
    %v2271 = vsel %vm1160, 0.0, 1.0
    %v2272 = vsel %vm1161, 0.0, 1.0
    %v2273 = vsel %vm1162, 0.0, 1.0
    %v2274 = vsel %vm1163, 0.0, 1.0
    %v2275 = vsel %vm1164, 0.0, 1.0
    %v2276 = vsel %vm1165, 0.0, 1.0
    %v2277 = vsel %vm1166, 0.0, 1.0
    %v2278 = vsel %vm1167, 0.0, 1.0
    %v2279 = vsel %vm1168, 0.0, 1.0
    %v2280 = vsel %vm1169, 0.0, 1.0
    %v2281 = vsel %vm1170, 0.0, 1.0
    %v2282 = vsel %vm1171, 0.0, 1.0
    %v2283 = vsel %vm1172, 0.0, 1.0
    %v2284 = vsel %vm1173, 0.0, 1.0
    %v2285 = vsel %vm1174, 0.0, 1.0
    %v2286 = vsel %vm1175, 0.0, 1.0
    %v2287 = vsel %vm1176, 0.0, 1.0
    %v2288 = vsel %vm1177, 0.0, 1.0
    %v2289 = vsel %vm1178, 0.0, 1.0
    %v2290 = vsel %vm1179, 0.0, 1.0
    %v2291 = vsel %vm1180, 0.0, 1.0
    %v2292 = vsel %vm1181, 0.0, 1.0
    %v2293 = vsel %vm1182, 0.0, 1.0
    %v2294 = vsel %vm1183, 0.0, 1.0
    %v2295 = vsel %vm1184, 0.0, 1.0
    %v2296 = vsel %vm1185, 0.0, 1.0
    %v2297 = vsel %vm1186, 0.0, 1.0
    %v2298 = vsel %vm1187, 0.0, 1.0
    %v2299 = vsel %vm1188, 0.0, 1.0
    %v2300 = vsel %vm1189, 0.0, 1.0
    %v2301 = vsel %vm1190, 0.0, 1.0
    %v2302 = vsel %vm1191, 0.0, 1.0
    %v2303 = vsel %vm1192, 0.0, 1.0
    %v2304 = vsel %vm1193, 0.0, 1.0
    %v2305 = vsel %vm1194, 0.0, 1.0
    %v2306 = vsel %vm1195, 0.0, 1.0
    %v2307 = vsel %vm1196, 0.0, 1.0
    %v2308 = vsel %vm1197, 0.0, 1.0
    %v2309 = vsel %vm1198, 0.0, 1.0
    %v2310 = vsel %vm1199, 0.0, 1.0
    %v2311 = vsel %vm1200, 0.0, 1.0
    %v2312 = vsel %vm1201, 0.0, 1.0
    %v2313 = vsel %vm1202, 0.0, 1.0
    %v2314 = vsel %vm1203, 0.0, 1.0
    %v2315 = vsel %vm1204, 0.0, 1.0
    %v2316 = vsel %vm1205, 0.0, 1.0
    %v2317 = vsel %vm1206, 0.0, 1.0
    %v2318 = vsel %vm1207, 0.0, 1.0
    %v2319 = vsel %vm1208, 0.0, 1.0
    %v2320 = vsel %vm1209, 0.0, 1.0
    %v2321 = vsel %vm1210, 0.0, 1.0
    %v2322 = vsel %vm1211, 0.0, 1.0
    %v2323 = vsel %vm1212, 0.0, 1.0
    %v2324 = vsel %vm1213, 0.0, 1.0
    %v2325 = vsel %vm1214, 0.0, 1.0
    %v2326 = vsel %vm1215, 0.0, 1.0
    %v2327 = vsel %vm1216, 0.0, 1.0
    %v2328 = vsel %vm1217, 0.0, 1.0
    %v2329 = vsel %vm1218, 0.0, 1.0
    %v2330 = vsel %vm1219, 0.0, 1.0
    %v2331 = vsel %vm1220, 0.0, 1.0
    %v2332 = vsel %vm1221, 0.0, 1.0
    %v2333 = vsel %vm1222, 0.0, 1.0
    %v2334 = vsel %vm1223, 0.0, 1.0
    %v2335 = vsel %vm1224, 0.0, 1.0
    %v2336 = vsel %vm1225, 0.0, 1.0
    %v2337 = vsel %vm1226, 0.0, 1.0
    %v2338 = vsel %vm1227, 0.0, 1.0
    %v2339 = vsel %vm1228, 0.0, 1.0
    %v2340 = vsel %vm1229, 0.0, 1.0
    %v2341 = vsel %vm1230, 0.0, 1.0
    %v2342 = vsel %vm1231, 0.0, 1.0
    %v2343 = vsel %vm1232, 0.0, 1.0
    %v2344 = vsel %vm1233, 0.0, 1.0
    %v2345 = vsel %vm1234, 0.0, 1.0
    %v2346 = vsel %vm1235, 0.0, 1.0
    %v2347 = vsel %vm1236, 0.0, 1.0
    %v2348 = vsel %vm1237, 0.0, 1.0
    %v2349 = vsel %vm1238, 0.0, 1.0
    %v2350 = vsel %vm1239, 0.0, 1.0
    %v2351 = vsel %vm1240, 0.0, 1.0
    %v2352 = vsel %vm1241, 0.0, 1.0
    %v2353 = vsel %vm1242, 0.0, 1.0
    %v2354 = vsel %vm1243, 0.0, 1.0
    %v2355 = vsel %vm1244, 0.0, 1.0
    %v2356 = vsel %vm1245, 0.0, 1.0
    %v2357 = vsel %vm1246, 0.0, 1.0
    %v2358 = vsel %vm1247, 0.0, 1.0
    %v2359 = vsel %vm1248, 0.0, 1.0
    %v2360 = vsel %vm1249, 0.0, 1.0
    %v2361 = vsel %vm1250, 0.0, 1.0
    %v2362 = vsel %vm1251, 0.0, 1.0
    %v2363 = vsel %vm1252, 0.0, 1.0
    %v2364 = vsel %vm1253, 0.0, 1.0
    %v2365 = vsel %vm1254, 0.0, 1.0
    %v2366 = vsel %vm1255, 0.0, 1.0
    %v2367 = vsel %vm1256, 0.0, 1.0
    %v2368 = vsel %vm1257, 0.0, 1.0
    %v2369 = vsel %vm1258, 0.0, 1.0
    %v2370 = vsel %vm1259, 0.0, 1.0
    %v2371 = vsel %vm1260, 0.0, 1.0
    %v2372 = vsel %vm1261, 0.0, 1.0
    %v2373 = vsel %vm1262, 0.0, 1.0
    %v2374 = vsel %vm1263, 0.0, 1.0
    %v2375 = vsel %vm1264, 0.0, 1.0
    %v2376 = vsel %vm1265, 0.0, 1.0
    %v2377 = vsel %vm1266, 0.0, 1.0
    %v2378 = vsel %vm1267, 0.0, 1.0
    %v2379 = vsel %vm1268, 0.0, 1.0
    %v2380 = vsel %vm1269, 0.0, 1.0
    %v2381 = vsel %vm1270, 0.0, 1.0
    %v2382 = vsel %vm1271, 0.0, 1.0
    %v2383 = vsel %vm1272, 0.0, 1.0
    %v2384 = vsel %vm1273, 0.0, 1.0
    %v2385 = vsel %vm1274, 0.0, 1.0
    %v2386 = vsel %vm1275, 0.0, 1.0
    %v2387 = vsel %vm1276, 0.0, 1.0
    %v2388 = vsel %vm1277, 0.0, 1.0
    %v2389 = vsel %vm1278, 0.0, 1.0
    %v2390 = vsel %vm1279, 0.0, 1.0
    %v2391 = vsel %vm1280, 0.0, 1.0
    %v2392 = vsel %vm1281, 0.0, 1.0
    %v2393 = vsel %vm1282, 0.0, 1.0
    %v2394 = vsel %vm1283, 0.0, 1.0
    %v2395 = vsel %vm1284, 0.0, 1.0
    %v2396 = vsel %vm1285, 0.0, 1.0
    %v2397 = vsel %vm1286, 0.0, 1.0
    %v2398 = vsel %vm1287, 0.0, 1.0
    %v2399 = vsel %vm1288, 0.0, 1.0
    %v2400 = vsel %vm1289, 0.0, 1.0
    %v2401 = vsel %vm1290, 0.0, 1.0
    %v2402 = vsel %vm1291, 0.0, 1.0
    %v2403 = vsel %vm1292, 0.0, 1.0
    %v2404 = vsel %vm1293, 0.0, 1.0
    %v2405 = vsel %vm1294, 0.0, 1.0
    %v2406 = vsel %vm1295, 0.0, 1.0
    %v2407 = vsel %vm1296, 0.0, 1.0
    %v2408 = vsel %vm1297, 0.0, 1.0
    %v2409 = vsel %vm1298, 0.0, 1.0
    %v2410 = vsel %vm1299, 0.0, 1.0
    %v2411 = vsel %vm1300, 0.0, 1.0
    %v2412 = vsel %vm1301, 0.0, 1.0
    %v2413 = vsel %vm1302, 0.0, 1.0
    %v2414 = vsel %vm1303, 0.0, 1.0
    %v2415 = vsel %vm1304, 0.0, 1.0
    %v2416 = vsel %vm1305, 0.0, 1.0
    %v2417 = vsel %vm1306, 0.0, 1.0
    %v2418 = vsel %vm1307, 0.0, 1.0
    %v2419 = vsel %vm1308, 0.0, 1.0
    %v2420 = vsel %vm1309, 0.0, 1.0
    %v2421 = vsel %vm1310, 0.0, 1.0
    %v2422 = vsel %vm1311, 0.0, 1.0
    %v2423 = vsel %vm1312, 0.0, 1.0
    %v2424 = vsel %vm1313, 0.0, 1.0
    %v2425 = vsel %vm1314, 0.0, 1.0
    %v2426 = vsel %vm1315, 0.0, 1.0
    %v2427 = vsel %vm1316, 0.0, 1.0
    %v2428 = vsel %vm1317, 0.0, 1.0
    %v2429 = vsel %vm1318, 0.0, 1.0
    %v2430 = vsel %vm1319, 0.0, 1.0
    %v2431 = vsel %vm1320, 0.0, 1.0
    %v2432 = vsel %vm1321, 0.0, 1.0
    %v2433 = vsel %vm1322, 0.0, 1.0
    %v2434 = vsel %vm1323, 0.0, 1.0
    %v2435 = vsel %vm1324, 0.0, 1.0
    %v2436 = vsel %vm1325, 0.0, 1.0
    %v2437 = vsel %vm1326, 0.0, 1.0
    %v2438 = vsel %vm1327, 0.0, 1.0
    %v2439 = vsel %vm1328, 0.0, 1.0
    %v2440 = vsel %vm1329, 0.0, 1.0
    %v2441 = vsel %vm1330, 0.0, 1.0
    %v2442 = vsel %vm1331, 0.0, 1.0
    %v2443 = vsel %vm1332, 0.0, 1.0
    %v2444 = vadd.f32 %v2188, %v2189
    %v2445 = vadd.f32 %v2444, %v2190
    %v2446 = vadd.f32 %v2445, %v2191
    %2447 = vadd.xlane.f32.xlu0 %v2446
    %v2448 = vpop.xlane.xlu0 %2447
    %v2449 = vadd.f32 %v2192, %v2193
    %v2450 = vadd.f32 %v2449, %v2194
    %v2451 = vadd.f32 %v2450, %v2195
    %2452 = vadd.xlane.f32.xlu0 %v2451
    %v2453 = vpop.xlane.xlu0 %2452
    %v2454 = vadd.f32 %v2196, %v2197
    %v2455 = vadd.f32 %v2454, %v2198
    %v2456 = vadd.f32 %v2455, %v2199
    %2457 = vadd.xlane.f32.xlu0 %v2456
    %v2458 = vpop.xlane.xlu0 %2457
    %v2459 = vadd.f32 %v2200, %v2201
    %v2460 = vadd.f32 %v2459, %v2202
    %v2461 = vadd.f32 %v2460, %v2203
    %2462 = vadd.xlane.f32.xlu0 %v2461
    %v2463 = vpop.xlane.xlu0 %2462
    %v2464 = vadd.f32 %v2204, %v2205
    %v2465 = vadd.f32 %v2464, %v2206
    %v2466 = vadd.f32 %v2465, %v2207
    %2467 = vadd.xlane.f32.xlu0 %v2466
    %v2468 = vpop.xlane.xlu0 %2467
    %v2469 = vadd.f32 %v2208, %v2209
    %v2470 = vadd.f32 %v2469, %v2210
    %v2471 = vadd.f32 %v2470, %v2211
    %2472 = vadd.xlane.f32.xlu0 %v2471
    %v2473 = vpop.xlane.xlu0 %2472
    %v2474 = vadd.f32 %v2212, %v2213
    %v2475 = vadd.f32 %v2474, %v2214
    %v2476 = vadd.f32 %v2475, %v2215
    %2477 = vadd.xlane.f32.xlu0 %v2476
    %v2478 = vpop.xlane.xlu0 %2477
    %v2479 = vadd.f32 %v2216, %v2217
    %v2480 = vadd.f32 %v2479, %v2218
    %v2481 = vadd.f32 %v2480, %v2219
    %2482 = vadd.xlane.f32.xlu0 %v2481
    %v2483 = vpop.xlane.xlu0 %2482
    %v2484 = vadd.f32 %v2220, %v2221
    %v2485 = vadd.f32 %v2484, %v2222
    %v2486 = vadd.f32 %v2485, %v2223
    %2487 = vadd.xlane.f32.xlu0 %v2486
    %v2488 = vpop.xlane.xlu0 %2487
    %v2489 = vadd.f32 %v2224, %v2225
    %v2490 = vadd.f32 %v2489, %v2226
    %v2491 = vadd.f32 %v2490, %v2227
    %2492 = vadd.xlane.f32.xlu0 %v2491
    %v2493 = vpop.xlane.xlu0 %2492
    %v2494 = vadd.f32 %v2228, %v2229
    %v2495 = vadd.f32 %v2494, %v2230
    %v2496 = vadd.f32 %v2495, %v2231
    %2497 = vadd.xlane.f32.xlu0 %v2496
    %v2498 = vpop.xlane.xlu0 %2497
    %v2499 = vadd.f32 %v2232, %v2233
    %v2500 = vadd.f32 %v2499, %v2234
    %v2501 = vadd.f32 %v2500, %v2235
    %2502 = vadd.xlane.f32.xlu0 %v2501
    %v2503 = vpop.xlane.xlu0 %2502
    %v2504 = vadd.f32 %v2236, %v2237
    %v2505 = vadd.f32 %v2504, %v2238
    %v2506 = vadd.f32 %v2505, %v2239
    %2507 = vadd.xlane.f32.xlu0 %v2506
    %v2508 = vpop.xlane.xlu0 %2507
    %v2509 = vadd.f32 %v2240, %v2241
    %v2510 = vadd.f32 %v2509, %v2242
    %v2511 = vadd.f32 %v2510, %v2243
    %2512 = vadd.xlane.f32.xlu0 %v2511
    %v2513 = vpop.xlane.xlu0 %2512
    %v2514 = vadd.f32 %v2244, %v2245
    %v2515 = vadd.f32 %v2514, %v2246
    %v2516 = vadd.f32 %v2515, %v2247
    %2517 = vadd.xlane.f32.xlu0 %v2516
    %v2518 = vpop.xlane.xlu0 %2517
    %v2519 = vadd.f32 %v2248, %v2249
    %v2520 = vadd.f32 %v2519, %v2250
    %v2521 = vadd.f32 %v2520, %v2251
    %2522 = vadd.xlane.f32.xlu0 %v2521
    %v2523 = vpop.xlane.xlu0 %2522
    %v2524 = vadd.f32 %v2252, %v2253
    %v2525 = vadd.f32 %v2524, %v2254
    %v2526 = vadd.f32 %v2525, %v2255
    %2527 = vadd.xlane.f32.xlu0 %v2526
    %v2528 = vpop.xlane.xlu0 %2527
    %v2529 = vadd.f32 %v2256, %v2257
    %v2530 = vadd.f32 %v2529, %v2258
    %v2531 = vadd.f32 %v2530, %v2259
    %2532 = vadd.xlane.f32.xlu0 %v2531
    %v2533 = vpop.xlane.xlu0 %2532
    %v2534 = vadd.f32 %v2260, %v2261
    %v2535 = vadd.f32 %v2534, %v2262
    %v2536 = vadd.f32 %v2535, %v2263
    %2537 = vadd.xlane.f32.xlu0 %v2536
    %v2538 = vpop.xlane.xlu0 %2537
    %v2539 = vadd.f32 %v2264, %v2265
    %v2540 = vadd.f32 %v2539, %v2266
    %v2541 = vadd.f32 %v2540, %v2267
    %2542 = vadd.xlane.f32.xlu0 %v2541
    %v2543 = vpop.xlane.xlu0 %2542
    %v2544 = vadd.f32 %v2268, %v2269
    %v2545 = vadd.f32 %v2544, %v2270
    %v2546 = vadd.f32 %v2545, %v2271
    %2547 = vadd.xlane.f32.xlu0 %v2546
    %v2548 = vpop.xlane.xlu0 %2547
    %v2549 = vadd.f32 %v2272, %v2273
    %v2550 = vadd.f32 %v2549, %v2274
    %v2551 = vadd.f32 %v2550, %v2275
    %2552 = vadd.xlane.f32.xlu0 %v2551
    %v2553 = vpop.xlane.xlu0 %2552
    %v2554 = vadd.f32 %v2276, %v2277
    %v2555 = vadd.f32 %v2554, %v2278
    %v2556 = vadd.f32 %v2555, %v2279
    %2557 = vadd.xlane.f32.xlu0 %v2556
    %v2558 = vpop.xlane.xlu0 %2557
    %v2559 = vadd.f32 %v2280, %v2281
    %v2560 = vadd.f32 %v2559, %v2282
    %v2561 = vadd.f32 %v2560, %v2283
    %2562 = vadd.xlane.f32.xlu0 %v2561
    %v2563 = vpop.xlane.xlu0 %2562
    %v2564 = vadd.f32 %v2284, %v2285
    %v2565 = vadd.f32 %v2564, %v2286
    %v2566 = vadd.f32 %v2565, %v2287
    %2567 = vadd.xlane.f32.xlu0 %v2566
    %v2568 = vpop.xlane.xlu0 %2567
    %v2569 = vadd.f32 %v2288, %v2289
    %v2570 = vadd.f32 %v2569, %v2290
    %v2571 = vadd.f32 %v2570, %v2291
    %2572 = vadd.xlane.f32.xlu0 %v2571
    %v2573 = vpop.xlane.xlu0 %2572
    %v2574 = vadd.f32 %v2292, %v2293
    %v2575 = vadd.f32 %v2574, %v2294
    %v2576 = vadd.f32 %v2575, %v2295
    %2577 = vadd.xlane.f32.xlu0 %v2576
    %v2578 = vpop.xlane.xlu0 %2577
    %v2579 = vadd.f32 %v2296, %v2297
    %v2580 = vadd.f32 %v2579, %v2298
    %v2581 = vadd.f32 %v2580, %v2299
    %2582 = vadd.xlane.f32.xlu0 %v2581
    %v2583 = vpop.xlane.xlu0 %2582
    %v2584 = vadd.f32 %v2300, %v2301
    %v2585 = vadd.f32 %v2584, %v2302
    %v2586 = vadd.f32 %v2585, %v2303
    %2587 = vadd.xlane.f32.xlu0 %v2586
    %v2588 = vpop.xlane.xlu0 %2587
    %v2589 = vadd.f32 %v2304, %v2305
    %v2590 = vadd.f32 %v2589, %v2306
    %v2591 = vadd.f32 %v2590, %v2307
    %2592 = vadd.xlane.f32.xlu0 %v2591
    %v2593 = vpop.xlane.xlu0 %2592
    %v2594 = vadd.f32 %v2308, %v2309
    %v2595 = vadd.f32 %v2594, %v2310
    %v2596 = vadd.f32 %v2595, %v2311
    %2597 = vadd.xlane.f32.xlu0 %v2596
    %v2598 = vpop.xlane.xlu0 %2597
    %v2599 = vadd.f32 %v2312, %v2313
    %v2600 = vadd.f32 %v2599, %v2314
    %v2601 = vadd.f32 %v2600, %v2315
    %2602 = vadd.xlane.f32.xlu0 %v2601
    %v2603 = vpop.xlane.xlu0 %2602
    %v2604 = vadd.f32 %v2316, %v2317
    %v2605 = vadd.f32 %v2604, %v2318
    %v2606 = vadd.f32 %v2605, %v2319
    %2607 = vadd.xlane.f32.xlu0 %v2606
    %v2608 = vpop.xlane.xlu0 %2607
    %v2609 = vadd.f32 %v2320, %v2321
    %v2610 = vadd.f32 %v2609, %v2322
    %v2611 = vadd.f32 %v2610, %v2323
    %2612 = vadd.xlane.f32.xlu0 %v2611
    %v2613 = vpop.xlane.xlu0 %2612
    %v2614 = vadd.f32 %v2324, %v2325
    %v2615 = vadd.f32 %v2614, %v2326
    %v2616 = vadd.f32 %v2615, %v2327
    %2617 = vadd.xlane.f32.xlu0 %v2616
    %v2618 = vpop.xlane.xlu0 %2617
    %v2619 = vadd.f32 %v2328, %v2329
    %v2620 = vadd.f32 %v2619, %v2330
    %v2621 = vadd.f32 %v2620, %v2331
    %2622 = vadd.xlane.f32.xlu0 %v2621
    %v2623 = vpop.xlane.xlu0 %2622
    %v2624 = vadd.f32 %v2332, %v2333
    %v2625 = vadd.f32 %v2624, %v2334
    %v2626 = vadd.f32 %v2625, %v2335
    %2627 = vadd.xlane.f32.xlu0 %v2626
    %v2628 = vpop.xlane.xlu0 %2627
    %v2629 = vadd.f32 %v2336, %v2337
    %v2630 = vadd.f32 %v2629, %v2338
    %v2631 = vadd.f32 %v2630, %v2339
    %2632 = vadd.xlane.f32.xlu0 %v2631
    %v2633 = vpop.xlane.xlu0 %2632
    %v2634 = vadd.f32 %v2340, %v2341
    %v2635 = vadd.f32 %v2634, %v2342
    %v2636 = vadd.f32 %v2635, %v2343
    %2637 = vadd.xlane.f32.xlu0 %v2636
    %v2638 = vpop.xlane.xlu0 %2637
    %v2639 = vadd.f32 %v2344, %v2345
    %v2640 = vadd.f32 %v2639, %v2346
    %v2641 = vadd.f32 %v2640, %v2347
    %2642 = vadd.xlane.f32.xlu0 %v2641
    %v2643 = vpop.xlane.xlu0 %2642
    %v2644 = vadd.f32 %v2348, %v2349
    %v2645 = vadd.f32 %v2644, %v2350
    %v2646 = vadd.f32 %v2645, %v2351
    %2647 = vadd.xlane.f32.xlu0 %v2646
    %v2648 = vpop.xlane.xlu0 %2647
    %v2649 = vadd.f32 %v2352, %v2353
    %v2650 = vadd.f32 %v2649, %v2354
    %v2651 = vadd.f32 %v2650, %v2355
    %2652 = vadd.xlane.f32.xlu0 %v2651
    %v2653 = vpop.xlane.xlu0 %2652
    %v2654 = vadd.f32 %v2356, %v2357
    %v2655 = vadd.f32 %v2654, %v2358
    %v2656 = vadd.f32 %v2655, %v2359
    %2657 = vadd.xlane.f32.xlu0 %v2656
    %v2658 = vpop.xlane.xlu0 %2657
    %v2659 = vadd.f32 %v2360, %v2361
    %v2660 = vadd.f32 %v2659, %v2362
    %v2661 = vadd.f32 %v2660, %v2363
    %2662 = vadd.xlane.f32.xlu0 %v2661
    %v2663 = vpop.xlane.xlu0 %2662
    %v2664 = vadd.f32 %v2364, %v2365
    %v2665 = vadd.f32 %v2664, %v2366
    %v2666 = vadd.f32 %v2665, %v2367
    %2667 = vadd.xlane.f32.xlu0 %v2666
    %v2668 = vpop.xlane.xlu0 %2667
    %v2669 = vadd.f32 %v2368, %v2369
    %v2670 = vadd.f32 %v2669, %v2370
    %v2671 = vadd.f32 %v2670, %v2371
    %2672 = vadd.xlane.f32.xlu0 %v2671
    %v2673 = vpop.xlane.xlu0 %2672
    %v2674 = vadd.f32 %v2372, %v2373
    %v2675 = vadd.f32 %v2674, %v2374
    %v2676 = vadd.f32 %v2675, %v2375
    %2677 = vadd.xlane.f32.xlu0 %v2676
    %v2678 = vpop.xlane.xlu0 %2677
    %v2679 = vadd.f32 %v2376, %v2377
    %v2680 = vadd.f32 %v2679, %v2378
    %v2681 = vadd.f32 %v2680, %v2379
    %2682 = vadd.xlane.f32.xlu0 %v2681
    %v2683 = vpop.xlane.xlu0 %2682
    %v2684 = vadd.f32 %v2380, %v2381
    %v2685 = vadd.f32 %v2684, %v2382
    %v2686 = vadd.f32 %v2685, %v2383
    %2687 = vadd.xlane.f32.xlu0 %v2686
    %v2688 = vpop.xlane.xlu0 %2687
    %v2689 = vadd.f32 %v2384, %v2385
    %v2690 = vadd.f32 %v2689, %v2386
    %v2691 = vadd.f32 %v2690, %v2387
    %2692 = vadd.xlane.f32.xlu0 %v2691
    %v2693 = vpop.xlane.xlu0 %2692
    %v2694 = vadd.f32 %v2388, %v2389
    %v2695 = vadd.f32 %v2694, %v2390
    %v2696 = vadd.f32 %v2695, %v2391
    %2697 = vadd.xlane.f32.xlu0 %v2696
    %v2698 = vpop.xlane.xlu0 %2697
    %v2699 = vadd.f32 %v2392, %v2393
    %v2700 = vadd.f32 %v2699, %v2394
    %v2701 = vadd.f32 %v2700, %v2395
    %2702 = vadd.xlane.f32.xlu0 %v2701
    %v2703 = vpop.xlane.xlu0 %2702
    %v2704 = vadd.f32 %v2396, %v2397
    %v2705 = vadd.f32 %v2704, %v2398
    %v2706 = vadd.f32 %v2705, %v2399
    %2707 = vadd.xlane.f32.xlu0 %v2706
    %v2708 = vpop.xlane.xlu0 %2707
    %v2709 = vadd.f32 %v2400, %v2401
    %v2710 = vadd.f32 %v2709, %v2402
    %v2711 = vadd.f32 %v2710, %v2403
    %2712 = vadd.xlane.f32.xlu0 %v2711
    %v2713 = vpop.xlane.xlu0 %2712
    %v2714 = vadd.f32 %v2404, %v2405
    %v2715 = vadd.f32 %v2714, %v2406
    %v2716 = vadd.f32 %v2715, %v2407
    %2717 = vadd.xlane.f32.xlu0 %v2716
    %v2718 = vpop.xlane.xlu0 %2717
    %v2719 = vadd.f32 %v2408, %v2409
    %v2720 = vadd.f32 %v2719, %v2410
    %v2721 = vadd.f32 %v2720, %v2411
    %2722 = vadd.xlane.f32.xlu0 %v2721
    %v2723 = vpop.xlane.xlu0 %2722
    %v2724 = vadd.f32 %v2412, %v2413
    %v2725 = vadd.f32 %v2724, %v2414
    %v2726 = vadd.f32 %v2725, %v2415
    %2727 = vadd.xlane.f32.xlu0 %v2726
    %v2728 = vpop.xlane.xlu0 %2727
    %v2729 = vadd.f32 %v2416, %v2417
    %v2730 = vadd.f32 %v2729, %v2418
    %v2731 = vadd.f32 %v2730, %v2419
    %2732 = vadd.xlane.f32.xlu0 %v2731
    %v2733 = vpop.xlane.xlu0 %2732
    %v2734 = vadd.f32 %v2420, %v2421
    %v2735 = vadd.f32 %v2734, %v2422
    %v2736 = vadd.f32 %v2735, %v2423
    %2737 = vadd.xlane.f32.xlu0 %v2736
    %v2738 = vpop.xlane.xlu0 %2737
    %v2739 = vadd.f32 %v2424, %v2425
    %v2740 = vadd.f32 %v2739, %v2426
    %v2741 = vadd.f32 %v2740, %v2427
    %2742 = vadd.xlane.f32.xlu0 %v2741
    %v2743 = vpop.xlane.xlu0 %2742
    %v2744 = vadd.f32 %v2428, %v2429
    %v2745 = vadd.f32 %v2744, %v2430
    %v2746 = vadd.f32 %v2745, %v2431
    %2747 = vadd.xlane.f32.xlu0 %v2746
    %v2748 = vpop.xlane.xlu0 %2747
    %v2749 = vadd.f32 %v2432, %v2433
    %v2750 = vadd.f32 %v2749, %v2434
    %v2751 = vadd.f32 %v2750, %v2435
    %2752 = vadd.xlane.f32.xlu0 %v2751
    %v2753 = vpop.xlane.xlu0 %2752
    %v2754 = vadd.f32 %v2436, %v2437
    %v2755 = vadd.f32 %v2754, %v2438
    %v2756 = vadd.f32 %v2755, %v2439
    %2757 = vadd.xlane.f32.xlu0 %v2756
    %v2758 = vpop.xlane.xlu0 %2757
    %v2759 = vadd.f32 %v2440, %v2441
    %v2760 = vadd.f32 %v2759, %v2442
    %v2761 = vadd.f32 %v2760, %v2443
    %2762 = vadd.xlane.f32.xlu0 %v2761
    %v2763 = vpop.xlane.xlu0 %2762
    %v2764 = vadd.f32 %v2124, %v2448
    %v2765 = vadd.f32 %v2125, %v2453
    %v2766 = vadd.f32 %v2126, %v2458
    %v2767 = vadd.f32 %v2127, %v2463
    %v2768 = vadd.f32 %v2128, %v2468
    %v2769 = vadd.f32 %v2129, %v2473
    %v2770 = vadd.f32 %v2130, %v2478
    %v2771 = vadd.f32 %v2131, %v2483
    %v2772 = vadd.f32 %v2132, %v2488
    %v2773 = vadd.f32 %v2133, %v2493
    %v2774 = vadd.f32 %v2134, %v2498
    %v2775 = vadd.f32 %v2135, %v2503
    %v2776 = vadd.f32 %v2136, %v2508
    %v2777 = vadd.f32 %v2137, %v2513
    %v2778 = vadd.f32 %v2138, %v2518
    %v2779 = vadd.f32 %v2139, %v2523
    %v2780 = vadd.f32 %v2140, %v2528
    %v2781 = vadd.f32 %v2141, %v2533
    %v2782 = vadd.f32 %v2142, %v2538
    %v2783 = vadd.f32 %v2143, %v2543
    %v2784 = vadd.f32 %v2144, %v2548
    %v2785 = vadd.f32 %v2145, %v2553
    %v2786 = vadd.f32 %v2146, %v2558
    %v2787 = vadd.f32 %v2147, %v2563
    %v2788 = vadd.f32 %v2148, %v2568
    %v2789 = vadd.f32 %v2149, %v2573
    %v2790 = vadd.f32 %v2150, %v2578
    %v2791 = vadd.f32 %v2151, %v2583
    %v2792 = vadd.f32 %v2152, %v2588
    %v2793 = vadd.f32 %v2153, %v2593
    %v2794 = vadd.f32 %v2154, %v2598
    %v2795 = vadd.f32 %v2155, %v2603
    %v2796 = vadd.f32 %v2156, %v2608
    %v2797 = vadd.f32 %v2157, %v2613
    %v2798 = vadd.f32 %v2158, %v2618
    %v2799 = vadd.f32 %v2159, %v2623
    %v2800 = vadd.f32 %v2160, %v2628
    %v2801 = vadd.f32 %v2161, %v2633
    %v2802 = vadd.f32 %v2162, %v2638
    %v2803 = vadd.f32 %v2163, %v2643
    %v2804 = vadd.f32 %v2164, %v2648
    %v2805 = vadd.f32 %v2165, %v2653
    %v2806 = vadd.f32 %v2166, %v2658
    %v2807 = vadd.f32 %v2167, %v2663
    %v2808 = vadd.f32 %v2168, %v2668
    %v2809 = vadd.f32 %v2169, %v2673
    %v2810 = vadd.f32 %v2170, %v2678
    %v2811 = vadd.f32 %v2171, %v2683
    %v2812 = vadd.f32 %v2172, %v2688
    %v2813 = vadd.f32 %v2173, %v2693
    %v2814 = vadd.f32 %v2174, %v2698
    %v2815 = vadd.f32 %v2175, %v2703
    %v2816 = vadd.f32 %v2176, %v2708
    %v2817 = vadd.f32 %v2177, %v2713
    %v2818 = vadd.f32 %v2178, %v2718
    %v2819 = vadd.f32 %v2179, %v2723
    %v2820 = vadd.f32 %v2180, %v2728
    %v2821 = vadd.f32 %v2181, %v2733
    %v2822 = vadd.f32 %v2182, %v2738
    %v2823 = vadd.f32 %v2183, %v2743
    %v2824 = vadd.f32 %v2184, %v2748
    %v2825 = vadd.f32 %v2185, %v2753
    %v2826 = vadd.f32 %v2186, %v2758
    %v2827 = vadd.f32 %v2187, %v2763
    %2828 = vst.msk [vmem:[#allocation4] sm:$0xff] %vm2059, %v2764
    %2829 = vst.msk [vmem:[#allocation4 + $0x8] sm:$0xff] %vm2059, %v2765
    %2830 = vst.msk [vmem:[#allocation4 + $0x10] sm:$0xff] %vm2059, %v2766
    %2831 = vst.msk [vmem:[#allocation4 + $0x18] sm:$0xff] %vm2059, %v2767
    %2832 = vst.msk [vmem:[#allocation4 + $0x20] sm:$0xff] %vm2059, %v2768
    %2833 = vst.msk [vmem:[#allocation4 + $0x28] sm:$0xff] %vm2059, %v2769
    %2834 = vst.msk [vmem:[#allocation4 + $0x30] sm:$0xff] %vm2059, %v2770
    %2835 = vst.msk [vmem:[#allocation4 + $0x38] sm:$0xff] %vm2059, %v2771
    %2836 = vst.msk [vmem:[#allocation4 + $0x40] sm:$0xff] %vm2059, %v2772
    %2837 = vst.msk [vmem:[#allocation4 + $0x48] sm:$0xff] %vm2059, %v2773
    %2838 = vst.msk [vmem:[#allocation4 + $0x50] sm:$0xff] %vm2059, %v2774
    %2839 = vst.msk [vmem:[#allocation4 + $0x58] sm:$0xff] %vm2059, %v2775
    %2840 = vst.msk [vmem:[#allocation4 + $0x60] sm:$0xff] %vm2059, %v2776
    %2841 = vst.msk [vmem:[#allocation4 + $0x68] sm:$0xff] %vm2059, %v2777
    %2842 = vst.msk [vmem:[#allocation4 + $0x70] sm:$0xff] %vm2059, %v2778
    %2843 = vst.msk [vmem:[#allocation4 + $0x78] sm:$0xff] %vm2059, %v2779
    %2844 = vst.msk [vmem:[#allocation4 + $0x80] sm:$0xff] %vm2059, %v2780
    %2845 = vst.msk [vmem:[#allocation4 + $0x88] sm:$0xff] %vm2059, %v2781
    %2846 = vst.msk [vmem:[#allocation4 + $0x90] sm:$0xff] %vm2059, %v2782
    %2847 = vst.msk [vmem:[#allocation4 + $0x98] sm:$0xff] %vm2059, %v2783
    %2848 = vst.msk [vmem:[#allocation4 + $0xa0] sm:$0xff] %vm2059, %v2784
    %2849 = vst.msk [vmem:[#allocation4 + $0xa8] sm:$0xff] %vm2059, %v2785
    %2850 = vst.msk [vmem:[#allocation4 + $0xb0] sm:$0xff] %vm2059, %v2786
    %2851 = vst.msk [vmem:[#allocation4 + $0xb8] sm:$0xff] %vm2059, %v2787
    %2852 = vst.msk [vmem:[#allocation4 + $0xc0] sm:$0xff] %vm2059, %v2788
    %2853 = vst.msk [vmem:[#allocation4 + $0xc8] sm:$0xff] %vm2059, %v2789
    %2854 = vst.msk [vmem:[#allocation4 + $0xd0] sm:$0xff] %vm2059, %v2790
    %2855 = vst.msk [vmem:[#allocation4 + $0xd8] sm:$0xff] %vm2059, %v2791
    %2856 = vst.msk [vmem:[#allocation4 + $0xe0] sm:$0xff] %vm2059, %v2792
    %2857 = vst.msk [vmem:[#allocation4 + $0xe8] sm:$0xff] %vm2059, %v2793
    %2858 = vst.msk [vmem:[#allocation4 + $0xf0] sm:$0xff] %vm2059, %v2794
    %2859 = vst.msk [vmem:[#allocation4 + $0xf8] sm:$0xff] %vm2059, %v2795
    %2860 = vst.msk [vmem:[#allocation4 + $0x100] sm:$0xff] %vm2059, %v2796
    %2861 = vst.msk [vmem:[#allocation4 + $0x108] sm:$0xff] %vm2059, %v2797
    %2862 = vst.msk [vmem:[#allocation4 + $0x110] sm:$0xff] %vm2059, %v2798
    %2863 = vst.msk [vmem:[#allocation4 + $0x118] sm:$0xff] %vm2059, %v2799
    %2864 = vst.msk [vmem:[#allocation4 + $0x120] sm:$0xff] %vm2059, %v2800
    %2865 = vst.msk [vmem:[#allocation4 + $0x128] sm:$0xff] %vm2059, %v2801
    %2866 = vst.msk [vmem:[#allocation4 + $0x130] sm:$0xff] %vm2059, %v2802
    %2867 = vst.msk [vmem:[#allocation4 + $0x138] sm:$0xff] %vm2059, %v2803
    %2868 = vst.msk [vmem:[#allocation4 + $0x140] sm:$0xff] %vm2059, %v2804
    %2869 = vst.msk [vmem:[#allocation4 + $0x148] sm:$0xff] %vm2059, %v2805
    %2870 = vst.msk [vmem:[#allocation4 + $0x150] sm:$0xff] %vm2059, %v2806
    %2871 = vst.msk [vmem:[#allocation4 + $0x158] sm:$0xff] %vm2059, %v2807
    %2872 = vst.msk [vmem:[#allocation4 + $0x160] sm:$0xff] %vm2059, %v2808
    %2873 = vst.msk [vmem:[#allocation4 + $0x168] sm:$0xff] %vm2059, %v2809
    %2874 = vst.msk [vmem:[#allocation4 + $0x170] sm:$0xff] %vm2059, %v2810
    %2875 = vst.msk [vmem:[#allocation4 + $0x178] sm:$0xff] %vm2059, %v2811
    %2876 = vst.msk [vmem:[#allocation4 + $0x180] sm:$0xff] %vm2059, %v2812
    %2877 = vst.msk [vmem:[#allocation4 + $0x188] sm:$0xff] %vm2059, %v2813
    %2878 = vst.msk [vmem:[#allocation4 + $0x190] sm:$0xff] %vm2059, %v2814
    %2879 = vst.msk [vmem:[#allocation4 + $0x198] sm:$0xff] %vm2059, %v2815
    %2880 = vst.msk [vmem:[#allocation4 + $0x1a0] sm:$0xff] %vm2059, %v2816
    %2881 = vst.msk [vmem:[#allocation4 + $0x1a8] sm:$0xff] %vm2059, %v2817
    %2882 = vst.msk [vmem:[#allocation4 + $0x1b0] sm:$0xff] %vm2059, %v2818
    %2883 = vst.msk [vmem:[#allocation4 + $0x1b8] sm:$0xff] %vm2059, %v2819
    %2884 = vst.msk [vmem:[#allocation4 + $0x1c0] sm:$0xff] %vm2059, %v2820
    %2885 = vst.msk [vmem:[#allocation4 + $0x1c8] sm:$0xff] %vm2059, %v2821
    %2886 = vst.msk [vmem:[#allocation4 + $0x1d0] sm:$0xff] %vm2059, %v2822
    %2887 = vst.msk [vmem:[#allocation4 + $0x1d8] sm:$0xff] %vm2059, %v2823
    %2888 = vst.msk [vmem:[#allocation4 + $0x1e0] sm:$0xff] %vm2059, %v2824
    %2889 = vst.msk [vmem:[#allocation4 + $0x1e8] sm:$0xff] %vm2059, %v2825
    %2890 = vst.msk [vmem:[#allocation4 + $0x1f0] sm:$0xff] %vm2059, %v2826
    %2891 = vst.msk [vmem:[#allocation4 + $0x1f8] sm:$0xff] %vm2059, %v2827
    // Predicated region
    $region42: #{tpu_custom_call.1} parent=1 // pred_check
      %p2892 = pneg %p68
    $region43: #{tpu_custom_call.1} parent=1 // pred_check_branch
      %2894 = sbr.rel (%p2892) target = $region45
    $region44: #{tpu_custom_call.1} parent=1 // pred_region
      %v2895 = vld [vmem:[#allocation3] sm:$0xff]
      %v2896 = vld [vmem:[#allocation3 + $0x8] sm:$0xff]
      %v2897 = vld [vmem:[#allocation3 + $0x10] sm:$0xff]
      %v2898 = vld [vmem:[#allocation3 + $0x18] sm:$0xff]
      %v2899 = vld [vmem:[#allocation3 + $0x20] sm:$0xff]
      %v2900 = vld [vmem:[#allocation3 + $0x28] sm:$0xff]
      %v2901 = vld [vmem:[#allocation3 + $0x30] sm:$0xff]
      %v2902 = vld [vmem:[#allocation3 + $0x38] sm:$0xff]
      %v2903 = vld [vmem:[#allocation3 + $0x40] sm:$0xff]
      %v2904 = vld [vmem:[#allocation3 + $0x48] sm:$0xff]
      %v2905 = vld [vmem:[#allocation3 + $0x50] sm:$0xff]
      %v2906 = vld [vmem:[#allocation3 + $0x58] sm:$0xff]
      %v2907 = vld [vmem:[#allocation3 + $0x60] sm:$0xff]
      %v2908 = vld [vmem:[#allocation3 + $0x68] sm:$0xff]
      %v2909 = vld [vmem:[#allocation3 + $0x70] sm:$0xff]
      %v2910 = vld [vmem:[#allocation3 + $0x78] sm:$0xff]
      %v2911 = vld [vmem:[#allocation3 + $0x80] sm:$0xff]
      %v2912 = vld [vmem:[#allocation3 + $0x88] sm:$0xff]
      %v2913 = vld [vmem:[#allocation3 + $0x90] sm:$0xff]
      %v2914 = vld [vmem:[#allocation3 + $0x98] sm:$0xff]
      %v2915 = vld [vmem:[#allocation3 + $0xa0] sm:$0xff]
      %v2916 = vld [vmem:[#allocation3 + $0xa8] sm:$0xff]
      %v2917 = vld [vmem:[#allocation3 + $0xb0] sm:$0xff]
      %v2918 = vld [vmem:[#allocation3 + $0xb8] sm:$0xff]
      %v2919 = vld [vmem:[#allocation3 + $0xc0] sm:$0xff]
      %v2920 = vld [vmem:[#allocation3 + $0xc8] sm:$0xff]
      %v2921 = vld [vmem:[#allocation3 + $0xd0] sm:$0xff]
      %v2922 = vld [vmem:[#allocation3 + $0xd8] sm:$0xff]
      %v2923 = vld [vmem:[#allocation3 + $0xe0] sm:$0xff]
      %v2924 = vld [vmem:[#allocation3 + $0xe8] sm:$0xff]
      %v2925 = vld [vmem:[#allocation3 + $0xf0] sm:$0xff]
      %v2926 = vld [vmem:[#allocation3 + $0xf8] sm:$0xff]
      %v2927 = vld [vmem:[#allocation3 + $0x100] sm:$0xff]
      %v2928 = vld [vmem:[#allocation3 + $0x108] sm:$0xff]
      %v2929 = vld [vmem:[#allocation3 + $0x110] sm:$0xff]
      %v2930 = vld [vmem:[#allocation3 + $0x118] sm:$0xff]
      %v2931 = vld [vmem:[#allocation3 + $0x120] sm:$0xff]
      %v2932 = vld [vmem:[#allocation3 + $0x128] sm:$0xff]
      %v2933 = vld [vmem:[#allocation3 + $0x130] sm:$0xff]
      %v2934 = vld [vmem:[#allocation3 + $0x138] sm:$0xff]
      %v2935 = vld [vmem:[#allocation3 + $0x140] sm:$0xff]
      %v2936 = vld [vmem:[#allocation3 + $0x148] sm:$0xff]
      %v2937 = vld [vmem:[#allocation3 + $0x150] sm:$0xff]
      %v2938 = vld [vmem:[#allocation3 + $0x158] sm:$0xff]
      %v2939 = vld [vmem:[#allocation3 + $0x160] sm:$0xff]
      %v2940 = vld [vmem:[#allocation3 + $0x168] sm:$0xff]
      %v2941 = vld [vmem:[#allocation3 + $0x170] sm:$0xff]
      %v2942 = vld [vmem:[#allocation3 + $0x178] sm:$0xff]
      %v2943 = vld [vmem:[#allocation3 + $0x180] sm:$0xff]
      %v2944 = vld [vmem:[#allocation3 + $0x188] sm:$0xff]
      %v2945 = vld [vmem:[#allocation3 + $0x190] sm:$0xff]
      %v2946 = vld [vmem:[#allocation3 + $0x198] sm:$0xff]
      %v2947 = vld [vmem:[#allocation3 + $0x1a0] sm:$0xff]
      %v2948 = vld [vmem:[#allocation3 + $0x1a8] sm:$0xff]
      %v2949 = vld [vmem:[#allocation3 + $0x1b0] sm:$0xff]
      %v2950 = vld [vmem:[#allocation3 + $0x1b8] sm:$0xff]
      %v2951 = vld [vmem:[#allocation3 + $0x1c0] sm:$0xff]
      %v2952 = vld [vmem:[#allocation3 + $0x1c8] sm:$0xff]
      %v2953 = vld [vmem:[#allocation3 + $0x1d0] sm:$0xff]
      %v2954 = vld [vmem:[#allocation3 + $0x1d8] sm:$0xff]
      %v2955 = vld [vmem:[#allocation3 + $0x1e0] sm:$0xff]
      %v2956 = vld [vmem:[#allocation3 + $0x1e8] sm:$0xff]
      %v2957 = vld [vmem:[#allocation3 + $0x1f0] sm:$0xff]
      %v2958 = vld [vmem:[#allocation3 + $0x1f8] sm:$0xff]
      %2959 = vxpose.xlu0.b32.start [1/16] %v2895, 128
      %2960 = vxpose.xlu0.b32.cont [2/16] %v2896, 128
      %2961 = vxpose.xlu0.b32.cont [3/16] %v2897, 128
      %2962 = vxpose.xlu0.b32.cont [4/16] %v2898, 128
      %2963 = vxpose.xlu0.b32.cont [5/16] %v2899, 128
      %2964 = vxpose.xlu0.b32.cont [6/16] %v2900, 128
      %2965 = vxpose.xlu0.b32.cont [7/16] %v2901, 128
      %2966 = vxpose.xlu0.b32.cont [8/16] %v2902, 128
      %2967 = vxpose.xlu0.b32.cont [9/16] %v2903, 128
      %2968 = vxpose.xlu0.b32.cont [10/16] %v2904, 128
      %2969 = vxpose.xlu0.b32.cont [11/16] %v2905, 128
      %2970 = vxpose.xlu0.b32.cont [12/16] %v2906, 128
      %2971 = vxpose.xlu0.b32.cont [13/16] %v2907, 128
      %2972 = vxpose.xlu0.b32.cont [14/16] %v2908, 128
      %2973 = vxpose.xlu0.b32.cont [15/16] %v2909, 128
      %2974 = vxpose.xlu0.b32.end [16/16] %v2910, 128
      %v2975 = vpop.trf.xlu0
      %v2976 = vpop.trf.xlu0
      %v2977 = vpop.trf.xlu0
      %v2978 = vpop.trf.xlu0
      %v2979 = vpop.trf.xlu0
      %v2980 = vpop.trf.xlu0
      %v2981 = vpop.trf.xlu0
      %v2982 = vpop.trf.xlu0
      %v2983 = vpop.trf.xlu0
      %v2984 = vpop.trf.xlu0
      %v2985 = vpop.trf.xlu0
      %v2986 = vpop.trf.xlu0
      %v2987 = vpop.trf.xlu0
      %v2988 = vpop.trf.xlu0
      %v2989 = vpop.trf.xlu0
      %v2990 = vpop.trf.xlu0
      %2991 = vxpose.xlu0.b32.start [1/16] %v2911, 128
      %2992 = vxpose.xlu0.b32.cont [2/16] %v2912, 128
      %2993 = vxpose.xlu0.b32.cont [3/16] %v2913, 128
      %2994 = vxpose.xlu0.b32.cont [4/16] %v2914, 128
      %2995 = vxpose.xlu0.b32.cont [5/16] %v2915, 128
      %2996 = vxpose.xlu0.b32.cont [6/16] %v2916, 128
      %2997 = vxpose.xlu0.b32.cont [7/16] %v2917, 128
      %2998 = vxpose.xlu0.b32.cont [8/16] %v2918, 128
      %2999 = vxpose.xlu0.b32.cont [9/16] %v2919, 128
      %3000 = vxpose.xlu0.b32.cont [10/16] %v2920, 128
      %3001 = vxpose.xlu0.b32.cont [11/16] %v2921, 128
      %3002 = vxpose.xlu0.b32.cont [12/16] %v2922, 128
      %3003 = vxpose.xlu0.b32.cont [13/16] %v2923, 128
      %3004 = vxpose.xlu0.b32.cont [14/16] %v2924, 128
      %3005 = vxpose.xlu0.b32.cont [15/16] %v2925, 128
      %3006 = vxpose.xlu0.b32.end [16/16] %v2926, 128
      %v3007 = vpop.trf.xlu0
      %v3008 = vpop.trf.xlu0
      %v3009 = vpop.trf.xlu0
      %v3010 = vpop.trf.xlu0
      %v3011 = vpop.trf.xlu0
      %v3012 = vpop.trf.xlu0
      %v3013 = vpop.trf.xlu0
      %v3014 = vpop.trf.xlu0
      %v3015 = vpop.trf.xlu0
      %v3016 = vpop.trf.xlu0
      %v3017 = vpop.trf.xlu0
      %v3018 = vpop.trf.xlu0
      %v3019 = vpop.trf.xlu0
      %v3020 = vpop.trf.xlu0
      %v3021 = vpop.trf.xlu0
      %v3022 = vpop.trf.xlu0
      %3023 = vxpose.xlu0.b32.start [1/16] %v2927, 128
      %3024 = vxpose.xlu0.b32.cont [2/16] %v2928, 128
      %3025 = vxpose.xlu0.b32.cont [3/16] %v2929, 128
      %3026 = vxpose.xlu0.b32.cont [4/16] %v2930, 128
      %3027 = vxpose.xlu0.b32.cont [5/16] %v2931, 128
      %3028 = vxpose.xlu0.b32.cont [6/16] %v2932, 128
      %3029 = vxpose.xlu0.b32.cont [7/16] %v2933, 128
      %3030 = vxpose.xlu0.b32.cont [8/16] %v2934, 128
      %3031 = vxpose.xlu0.b32.cont [9/16] %v2935, 128
      %3032 = vxpose.xlu0.b32.cont [10/16] %v2936, 128
      %3033 = vxpose.xlu0.b32.cont [11/16] %v2937, 128
      %3034 = vxpose.xlu0.b32.cont [12/16] %v2938, 128
      %3035 = vxpose.xlu0.b32.cont [13/16] %v2939, 128
      %3036 = vxpose.xlu0.b32.cont [14/16] %v2940, 128
      %3037 = vxpose.xlu0.b32.cont [15/16] %v2941, 128
      %3038 = vxpose.xlu0.b32.end [16/16] %v2942, 128
      %v3039 = vpop.trf.xlu0
      %v3040 = vpop.trf.xlu0
      %v3041 = vpop.trf.xlu0
      %v3042 = vpop.trf.xlu0
      %v3043 = vpop.trf.xlu0
      %v3044 = vpop.trf.xlu0
      %v3045 = vpop.trf.xlu0
      %v3046 = vpop.trf.xlu0
      %v3047 = vpop.trf.xlu0
      %v3048 = vpop.trf.xlu0
      %v3049 = vpop.trf.xlu0
      %v3050 = vpop.trf.xlu0
      %v3051 = vpop.trf.xlu0
      %v3052 = vpop.trf.xlu0
      %v3053 = vpop.trf.xlu0
      %v3054 = vpop.trf.xlu0
      %3055 = vxpose.xlu0.b32.start [1/16] %v2943, 128
      %3056 = vxpose.xlu0.b32.cont [2/16] %v2944, 128
      %3057 = vxpose.xlu0.b32.cont [3/16] %v2945, 128
      %3058 = vxpose.xlu0.b32.cont [4/16] %v2946, 128
      %3059 = vxpose.xlu0.b32.cont [5/16] %v2947, 128
      %3060 = vxpose.xlu0.b32.cont [6/16] %v2948, 128
      %3061 = vxpose.xlu0.b32.cont [7/16] %v2949, 128
      %3062 = vxpose.xlu0.b32.cont [8/16] %v2950, 128
      %3063 = vxpose.xlu0.b32.cont [9/16] %v2951, 128
      %3064 = vxpose.xlu0.b32.cont [10/16] %v2952, 128
      %3065 = vxpose.xlu0.b32.cont [11/16] %v2953, 128
      %3066 = vxpose.xlu0.b32.cont [12/16] %v2954, 128
      %3067 = vxpose.xlu0.b32.cont [13/16] %v2955, 128
      %3068 = vxpose.xlu0.b32.cont [14/16] %v2956, 128
      %3069 = vxpose.xlu0.b32.cont [15/16] %v2957, 128
      %3070 = vxpose.xlu0.b32.end [16/16] %v2958, 128
      %v3071 = vpop.trf.xlu0
      %v3072 = vpop.trf.xlu0
      %v3073 = vpop.trf.xlu0
      %v3074 = vpop.trf.xlu0
      %v3075 = vpop.trf.xlu0
      %v3076 = vpop.trf.xlu0
      %v3077 = vpop.trf.xlu0
      %v3078 = vpop.trf.xlu0
      %v3079 = vpop.trf.xlu0
      %v3080 = vpop.trf.xlu0
      %v3081 = vpop.trf.xlu0
      %v3082 = vpop.trf.xlu0
      %v3083 = vpop.trf.xlu0
      %v3084 = vpop.trf.xlu0
      %v3085 = vpop.trf.xlu0
      %v3086 = vpop.trf.xlu0
      %v3087 = vld [vmem:[#allocation4] sm:$0xff]
      %v3088 = vld [vmem:[#allocation4 + $0x8] sm:$0xff]
      %v3089 = vld [vmem:[#allocation4 + $0x10] sm:$0xff]
      %v3090 = vld [vmem:[#allocation4 + $0x18] sm:$0xff]
      %v3091 = vld [vmem:[#allocation4 + $0x20] sm:$0xff]
      %v3092 = vld [vmem:[#allocation4 + $0x28] sm:$0xff]
      %v3093 = vld [vmem:[#allocation4 + $0x30] sm:$0xff]
      %v3094 = vld [vmem:[#allocation4 + $0x38] sm:$0xff]
      %v3095 = vld [vmem:[#allocation4 + $0x40] sm:$0xff]
      %v3096 = vld [vmem:[#allocation4 + $0x48] sm:$0xff]
      %v3097 = vld [vmem:[#allocation4 + $0x50] sm:$0xff]
      %v3098 = vld [vmem:[#allocation4 + $0x58] sm:$0xff]
      %v3099 = vld [vmem:[#allocation4 + $0x60] sm:$0xff]
      %v3100 = vld [vmem:[#allocation4 + $0x68] sm:$0xff]
      %v3101 = vld [vmem:[#allocation4 + $0x70] sm:$0xff]
      %v3102 = vld [vmem:[#allocation4 + $0x78] sm:$0xff]
      %v3103 = vld [vmem:[#allocation4 + $0x80] sm:$0xff]
      %v3104 = vld [vmem:[#allocation4 + $0x88] sm:$0xff]
      %v3105 = vld [vmem:[#allocation4 + $0x90] sm:$0xff]
      %v3106 = vld [vmem:[#allocation4 + $0x98] sm:$0xff]
      %v3107 = vld [vmem:[#allocation4 + $0xa0] sm:$0xff]
      %v3108 = vld [vmem:[#allocation4 + $0xa8] sm:$0xff]
      %v3109 = vld [vmem:[#allocation4 + $0xb0] sm:$0xff]
      %v3110 = vld [vmem:[#allocation4 + $0xb8] sm:$0xff]
      %v3111 = vld [vmem:[#allocation4 + $0xc0] sm:$0xff]
      %v3112 = vld [vmem:[#allocation4 + $0xc8] sm:$0xff]
      %v3113 = vld [vmem:[#allocation4 + $0xd0] sm:$0xff]
      %v3114 = vld [vmem:[#allocation4 + $0xd8] sm:$0xff]
      %v3115 = vld [vmem:[#allocation4 + $0xe0] sm:$0xff]
      %v3116 = vld [vmem:[#allocation4 + $0xe8] sm:$0xff]
      %v3117 = vld [vmem:[#allocation4 + $0xf0] sm:$0xff]
      %v3118 = vld [vmem:[#allocation4 + $0xf8] sm:$0xff]
      %v3119 = vld [vmem:[#allocation4 + $0x100] sm:$0xff]
      %v3120 = vld [vmem:[#allocation4 + $0x108] sm:$0xff]
      %v3121 = vld [vmem:[#allocation4 + $0x110] sm:$0xff]
      %v3122 = vld [vmem:[#allocation4 + $0x118] sm:$0xff]
      %v3123 = vld [vmem:[#allocation4 + $0x120] sm:$0xff]
      %v3124 = vld [vmem:[#allocation4 + $0x128] sm:$0xff]
      %v3125 = vld [vmem:[#allocation4 + $0x130] sm:$0xff]
      %v3126 = vld [vmem:[#allocation4 + $0x138] sm:$0xff]
      %v3127 = vld [vmem:[#allocation4 + $0x140] sm:$0xff]
      %v3128 = vld [vmem:[#allocation4 + $0x148] sm:$0xff]
      %v3129 = vld [vmem:[#allocation4 + $0x150] sm:$0xff]
      %v3130 = vld [vmem:[#allocation4 + $0x158] sm:$0xff]
      %v3131 = vld [vmem:[#allocation4 + $0x160] sm:$0xff]
      %v3132 = vld [vmem:[#allocation4 + $0x168] sm:$0xff]
      %v3133 = vld [vmem:[#allocation4 + $0x170] sm:$0xff]
      %v3134 = vld [vmem:[#allocation4 + $0x178] sm:$0xff]
      %v3135 = vld [vmem:[#allocation4 + $0x180] sm:$0xff]
      %v3136 = vld [vmem:[#allocation4 + $0x188] sm:$0xff]
      %v3137 = vld [vmem:[#allocation4 + $0x190] sm:$0xff]
      %v3138 = vld [vmem:[#allocation4 + $0x198] sm:$0xff]
      %v3139 = vld [vmem:[#allocation4 + $0x1a0] sm:$0xff]
      %v3140 = vld [vmem:[#allocation4 + $0x1a8] sm:$0xff]
      %v3141 = vld [vmem:[#allocation4 + $0x1b0] sm:$0xff]
      %v3142 = vld [vmem:[#allocation4 + $0x1b8] sm:$0xff]
      %v3143 = vld [vmem:[#allocation4 + $0x1c0] sm:$0xff]
      %v3144 = vld [vmem:[#allocation4 + $0x1c8] sm:$0xff]
      %v3145 = vld [vmem:[#allocation4 + $0x1d0] sm:$0xff]
      %v3146 = vld [vmem:[#allocation4 + $0x1d8] sm:$0xff]
      %v3147 = vld [vmem:[#allocation4 + $0x1e0] sm:$0xff]
      %v3148 = vld [vmem:[#allocation4 + $0x1e8] sm:$0xff]
      %v3149 = vld [vmem:[#allocation4 + $0x1f0] sm:$0xff]
      %v3150 = vld [vmem:[#allocation4 + $0x1f8] sm:$0xff]
      %3151 = vxpose.xlu0.b32.start [1/16] %v3087, 128
      %3152 = vxpose.xlu0.b32.cont [2/16] %v3088, 128
      %3153 = vxpose.xlu0.b32.cont [3/16] %v3089, 128
      %3154 = vxpose.xlu0.b32.cont [4/16] %v3090, 128
      %3155 = vxpose.xlu0.b32.cont [5/16] %v3091, 128
      %3156 = vxpose.xlu0.b32.cont [6/16] %v3092, 128
      %3157 = vxpose.xlu0.b32.cont [7/16] %v3093, 128
      %3158 = vxpose.xlu0.b32.cont [8/16] %v3094, 128
      %3159 = vxpose.xlu0.b32.cont [9/16] %v3095, 128
      %3160 = vxpose.xlu0.b32.cont [10/16] %v3096, 128
      %3161 = vxpose.xlu0.b32.cont [11/16] %v3097, 128
      %3162 = vxpose.xlu0.b32.cont [12/16] %v3098, 128
      %3163 = vxpose.xlu0.b32.cont [13/16] %v3099, 128
      %3164 = vxpose.xlu0.b32.cont [14/16] %v3100, 128
      %3165 = vxpose.xlu0.b32.cont [15/16] %v3101, 128
      %3166 = vxpose.xlu0.b32.end [16/16] %v3102, 128
      %v3167 = vpop.trf.xlu0
      %v3168 = vpop.trf.xlu0
      %v3169 = vpop.trf.xlu0
      %v3170 = vpop.trf.xlu0
      %v3171 = vpop.trf.xlu0
      %v3172 = vpop.trf.xlu0
      %v3173 = vpop.trf.xlu0
      %v3174 = vpop.trf.xlu0
      %v3175 = vpop.trf.xlu0
      %v3176 = vpop.trf.xlu0
      %v3177 = vpop.trf.xlu0
      %v3178 = vpop.trf.xlu0
      %v3179 = vpop.trf.xlu0
      %v3180 = vpop.trf.xlu0
      %v3181 = vpop.trf.xlu0
      %v3182 = vpop.trf.xlu0
      %3183 = vxpose.xlu0.b32.start [1/16] %v3103, 128
      %3184 = vxpose.xlu0.b32.cont [2/16] %v3104, 128
      %3185 = vxpose.xlu0.b32.cont [3/16] %v3105, 128
      %3186 = vxpose.xlu0.b32.cont [4/16] %v3106, 128
      %3187 = vxpose.xlu0.b32.cont [5/16] %v3107, 128
      %3188 = vxpose.xlu0.b32.cont [6/16] %v3108, 128
      %3189 = vxpose.xlu0.b32.cont [7/16] %v3109, 128
      %3190 = vxpose.xlu0.b32.cont [8/16] %v3110, 128
      %3191 = vxpose.xlu0.b32.cont [9/16] %v3111, 128
      %3192 = vxpose.xlu0.b32.cont [10/16] %v3112, 128
      %3193 = vxpose.xlu0.b32.cont [11/16] %v3113, 128
      %3194 = vxpose.xlu0.b32.cont [12/16] %v3114, 128
      %3195 = vxpose.xlu0.b32.cont [13/16] %v3115, 128
      %3196 = vxpose.xlu0.b32.cont [14/16] %v3116, 128
      %3197 = vxpose.xlu0.b32.cont [15/16] %v3117, 128
      %3198 = vxpose.xlu0.b32.end [16/16] %v3118, 128
      %v3199 = vpop.trf.xlu0
      %v3200 = vpop.trf.xlu0
      %v3201 = vpop.trf.xlu0
      %v3202 = vpop.trf.xlu0
      %v3203 = vpop.trf.xlu0
      %v3204 = vpop.trf.xlu0
      %v3205 = vpop.trf.xlu0
      %v3206 = vpop.trf.xlu0
      %v3207 = vpop.trf.xlu0
      %v3208 = vpop.trf.xlu0
      %v3209 = vpop.trf.xlu0
      %v3210 = vpop.trf.xlu0
      %v3211 = vpop.trf.xlu0
      %v3212 = vpop.trf.xlu0
      %v3213 = vpop.trf.xlu0
      %v3214 = vpop.trf.xlu0
      %3215 = vxpose.xlu0.b32.start [1/16] %v3119, 128
      %3216 = vxpose.xlu0.b32.cont [2/16] %v3120, 128
      %3217 = vxpose.xlu0.b32.cont [3/16] %v3121, 128
      %3218 = vxpose.xlu0.b32.cont [4/16] %v3122, 128
      %3219 = vxpose.xlu0.b32.cont [5/16] %v3123, 128
      %3220 = vxpose.xlu0.b32.cont [6/16] %v3124, 128
      %3221 = vxpose.xlu0.b32.cont [7/16] %v3125, 128
      %3222 = vxpose.xlu0.b32.cont [8/16] %v3126, 128
      %3223 = vxpose.xlu0.b32.cont [9/16] %v3127, 128
      %3224 = vxpose.xlu0.b32.cont [10/16] %v3128, 128
      %3225 = vxpose.xlu0.b32.cont [11/16] %v3129, 128
      %3226 = vxpose.xlu0.b32.cont [12/16] %v3130, 128
      %3227 = vxpose.xlu0.b32.cont [13/16] %v3131, 128
      %3228 = vxpose.xlu0.b32.cont [14/16] %v3132, 128
      %3229 = vxpose.xlu0.b32.cont [15/16] %v3133, 128
      %3230 = vxpose.xlu0.b32.end [16/16] %v3134, 128
      %v3231 = vpop.trf.xlu0
      %v3232 = vpop.trf.xlu0
      %v3233 = vpop.trf.xlu0
      %v3234 = vpop.trf.xlu0
      %v3235 = vpop.trf.xlu0
      %v3236 = vpop.trf.xlu0
      %v3237 = vpop.trf.xlu0
      %v3238 = vpop.trf.xlu0
      %v3239 = vpop.trf.xlu0
      %v3240 = vpop.trf.xlu0
      %v3241 = vpop.trf.xlu0
      %v3242 = vpop.trf.xlu0
      %v3243 = vpop.trf.xlu0
      %v3244 = vpop.trf.xlu0
      %v3245 = vpop.trf.xlu0
      %v3246 = vpop.trf.xlu0
      %3247 = vxpose.xlu0.b32.start [1/16] %v3135, 128
      %3248 = vxpose.xlu0.b32.cont [2/16] %v3136, 128
      %3249 = vxpose.xlu0.b32.cont [3/16] %v3137, 128
      %3250 = vxpose.xlu0.b32.cont [4/16] %v3138, 128
      %3251 = vxpose.xlu0.b32.cont [5/16] %v3139, 128
      %3252 = vxpose.xlu0.b32.cont [6/16] %v3140, 128
      %3253 = vxpose.xlu0.b32.cont [7/16] %v3141, 128
      %3254 = vxpose.xlu0.b32.cont [8/16] %v3142, 128
      %3255 = vxpose.xlu0.b32.cont [9/16] %v3143, 128
      %3256 = vxpose.xlu0.b32.cont [10/16] %v3144, 128
      %3257 = vxpose.xlu0.b32.cont [11/16] %v3145, 128
      %3258 = vxpose.xlu0.b32.cont [12/16] %v3146, 128
      %3259 = vxpose.xlu0.b32.cont [13/16] %v3147, 128
      %3260 = vxpose.xlu0.b32.cont [14/16] %v3148, 128
      %3261 = vxpose.xlu0.b32.cont [15/16] %v3149, 128
      %3262 = vxpose.xlu0.b32.end [16/16] %v3150, 128
      %v3263 = vpop.trf.xlu0
      %v3264 = vpop.trf.xlu0
      %v3265 = vpop.trf.xlu0
      %v3266 = vpop.trf.xlu0
      %v3267 = vpop.trf.xlu0
      %v3268 = vpop.trf.xlu0
      %v3269 = vpop.trf.xlu0
      %v3270 = vpop.trf.xlu0
      %v3271 = vpop.trf.xlu0
      %v3272 = vpop.trf.xlu0
      %v3273 = vpop.trf.xlu0
      %v3274 = vpop.trf.xlu0
      %v3275 = vpop.trf.xlu0
      %v3276 = vpop.trf.xlu0
      %v3277 = vpop.trf.xlu0
      %v3278 = vpop.trf.xlu0
      %v3279 = vlog2.pop %v2975
      %v3280 = vmul.f32 %v3279, 0.6931472
      %v3281 = vlog2.pop %v3007
      %v3282 = vmul.f32 %v3281, 0.6931472
      %v3283 = vlog2.pop %v3039
      %v3284 = vmul.f32 %v3283, 0.6931472
      %v3285 = vlog2.pop %v3071
      %v3286 = vmul.f32 %v3285, 0.6931472
      %v3287 = vlog2.pop %v3167
      %v3288 = vmul.f32 %v3287, 0.6931472
      %v3289 = vlog2.pop %v3199
      %v3290 = vmul.f32 %v3289, 0.6931472
      %v3291 = vlog2.pop %v3231
      %v3292 = vmul.f32 %v3291, 0.6931472
      %v3293 = vlog2.pop %v3263
      %v3294 = vmul.f32 %v3293, 0.6931472
      %v3295 = vsub.f32 %v3280, %v3288
      %v3296 = vsub.f32 %v3282, %v3290
      %v3297 = vsub.f32 %v3284, %v3292
      %v3298 = vsub.f32 %v3286, %v3294
      %v3299 = vld [vmem:[%s3] sm:$0xf]
      %v3304 = vcombine.low %v3295, %v3296
      %v3305 = vcombine.low %v3297, %v3298
      %v3307 = vunpack.c.l.s4 1966171168
      %v3308 = vunpack.c.0.s8 %v3307
      %v3309 = vlaneseq
      %v3310 = vshrl.u32 %v3309, 7
      %v3311 = vsub.s32 %v3308, %v3310
      %v3312 = vrot.slane %v3304, %v3311
      %v3314 = vunpack.c.l.s4 1966171168
      %v3315 = vunpack.c.0.s8 %v3314
      %v3316 = vlaneseq
      %v3317 = vshrl.u32 %v3316, 7
      %v3318 = vsub.s32 %v3315, %v3317
      %v3319 = vrot.slane %v3305, %v3318
      %v3320 = vcombine.low %v3312, %v3319
      %v3322 = vunpack.c.l.s4 1966171168
      %v3323 = vunpack.c.0.s8 %v3322
      %v3324 = vlaneseq
      %v3325 = vshrl.u32 %v3324, 7
      %v3326 = vsub.s32 %v3323, %v3325
      %v3327 = vrot.slane %v3320, %v3326
      %v3329 = vsub.f32 %v3299, %v3327
      %v3330 = vld [vmem:[#allocation11] sm:$0xf]
      %v3331 = vmul.f32 %v3329, %v3330
      %v3332 = vlaneseq
      %vm3333 = vcmp.ge.s32.totalorder %v3332, 0
      %vm3334 = vcmp.lt.s32.totalorder %v3332, 512
      %vm3335 = vmand %vm3333, %vm3334
      %3336 = vst.msk [vmem:[#allocation13] sm:$0xf] %vm3335, %v3331
    $region45: #{tpu_custom_call.1} parent=1 // pred_fallthru
      _
    // Predicated region
    $region46: #{tpu_custom_call.1} parent=1 // pred_check
      _
    $region47: #{tpu_custom_call.1} parent=1 // pred_check_branch
      %3338 = sbr.rel (0) target = $region49
    $region48: #{tpu_custom_call.1} parent=1 // pred_region
      %s3340 = ssub.s32 64, 64
      %3341 = vsyncadd [#allocation7], %s3340
      %s3343 = sshll.u32 [#allocation13], 4
      %s3344 = int_to_ptr.vmem [resolvable:$true] %s3343
      %3346 = dma.vmem_to_hbm [thread:$0]  %s3344, 64, %s5, [#allocation7]
    $region49: #{tpu_custom_call.1} parent=1 // pred_fallthru
      _
    // Predicated region
    $region50: #{tpu_custom_call.1} parent=1 // pred_check
      _
    $region51: #{tpu_custom_call.1} parent=1 // pred_check_branch
      %3348 = sbr.rel (0) target = $region53
    $region52: #{tpu_custom_call.1} parent=1 // pred_region
      %3349 = dma.done [#allocation7], 64
    $region53: #{tpu_custom_call.1} parent=1 // pred_fallthru
      _
    %3350 = vsyncpa [#allocation6], 1
    %3351 = vsyncpa [#allocation9], 1
    %3352 = vsyncpa [#allocation12], 1
    %3353 = vsyncpa [#allocation7], 1

</llo_original>
